<compile_context>
chip_gen: v7x
topology: tpu7x:2x2x1
jax: 0.10.0
libtpu: 0.0.40
codegen_flags: <defaults>
</compile_context>

<pallas_src>
import math

import jax
import jax.numpy as jnp
from jax import lax
from jax.experimental import pallas as pl
from jax.experimental.pallas import tpu as pltpu


# ----------------------------- model config (small) -----------------------------
VOCAB = 256
HIDDEN = 128
N_LAYERS = 2
N_HEADS = 4
HEAD_DIM = HIDDEN // N_HEADS          # 32
INTERMEDIATE = 256
CLASS_NUM = 16
SEQ = 8
BATCH = 2
TOKENS = BATCH * SEQ                  # flattened token axis
RMS_EPS = 1e-5
ROPE_THETA = 10000.0
WDTYPE = jnp.bfloat16                 # weight storage dtype (activations stay f32)


# ----------------------------- fused Pallas kernel -------------------------------
def _fused_forward_kernel(x_ref, bias_ref, trig_ref, rot_ref, pool_ref,
                          score_ref, attn_w_ref, wgu_ref, wd_ref, o_ref):
    T, H, nh, hd, I = TOKENS, HIDDEN, N_HEADS, HEAD_DIM, INTERMEDIATE
    f32 = jnp.float32

    x = x_ref[...]                     # (T, H) f32 activations, VMEM/vreg resident
    bias = bias_ref[...]               # (1, T, T) block-diag causal+padding bias
    cos = trig_ref[0]                  # (T, hd)
    sin = trig_ref[1]                  # (T, hd)
    rot = rot_ref[...]                 # (hd, hd) signed rotate-half permutation

    def rmsnorm(v):                    # norm weights are folded into downstream W
        var = jnp.mean(v * v, axis=-1, keepdims=True)
        return v * lax.rsqrt(var + RMS_EPS)

    for li in range(N_LAYERS):
        aw = attn_w_ref[li]            # (4*nh, H, hd) bf16: q|k|v heads, then wo^T
        w_qkv = aw[: 3 * nh]           # (3*nh, H, hd)
        w_oT = aw[3 * nh:]             # (nh, H, hd)

        # --- attention: RMSNorm fused with the per-head QKV projection ---------
        xn = rmsnorm(x).astype(WDTYPE)                         # (T, H)
        xn3 = jnp.broadcast_to(xn[None], (3 * nh, T, H))       # head-batched lhs
        qkv = lax.dot_general(xn3, w_qkv,
                              (((2,), (1,)), ((0,), (0,))),
                              preferred_element_type=f32)      # (3*nh, T, hd)

        # --- RoPE, one full-width pass over all q and k heads ------------------
        qk = qkv[: 2 * nh]                                     # (2*nh, T, hd)
        qk_rot = jnp.dot(qk.reshape(2 * nh * T, hd), rot,
                         preferred_element_type=f32).reshape(2 * nh, T, hd)
        qk = qk * cos + qk_rot * sin
        q = qk[:nh]                    # 1/sqrt(hd) already folded into wq
        k = qk[nh:]
        v = qkv[2 * nh:]

        # --- per-head attention as batched dot_general (block-diag batch mask) -
        s = lax.dot_general(q, k, (((2,), (2,)), ((0,), (0,))),
                            preferred_element_type=f32) + bias  # (nh, T, T)
        m = jnp.max(s, axis=-1, keepdims=True)
        p = jnp.exp(s - m)
        p = p * pl.reciprocal(jnp.sum(p, axis=-1, keepdims=True), approx=True)
        o = lax.dot_general(p, v, (((2,), (1,)), ((0,), (0,))),
                            preferred_element_type=f32)         # (nh, T, hd)

        # --- output projection, summed over heads (no concat / no scratch) -----
        oh = lax.dot_general(o.astype(WDTYPE), w_oT,
                             (((2,), (2,)), ((0,), (0,))),
                             preferred_element_type=f32)        # (nh, T, H)
        x = x + jnp.sum(oh, axis=0)

        # --- MLP: RMSNorm fused with the gate/up projection ---------------------
        xn = rmsnorm(x).astype(WDTYPE)
        gu = jnp.dot(xn, wgu_ref[li], preferred_element_type=f32)  # (T, 2I)
        g = gu[:, :I]
        u = gu[:, I:]
        h = (g * jax.nn.sigmoid(g)) * u                            # SwiGLU
        x = x + jnp.dot(h.astype(WDTYPE), wd_ref[li],
                        preferred_element_type=f32)

    # --- final norm (folded into score), last-token pooling, head, softmax -----
    xn = rmsnorm(x)
    pooled = jnp.dot(pool_ref[...], xn, preferred_element_type=f32)   # (B, H)
    logits = jnp.dot(pooled.astype(WDTYPE), score_ref[...],
                     preferred_element_type=f32)                      # (B, C)
    m = jnp.max(logits, axis=-1, keepdims=True)
    e = jnp.exp(logits - m)
    o_ref[...] = e / jnp.sum(e, axis=-1, keepdims=True)   # exact: it's the output


# ----------------------------- params & host-side packing ------------------------
def init_params(key):
    def norm(k, shape, std=0.02):
        return jax.random.normal(k, shape, jnp.float32) * std

    keys = jax.random.split(key, 2 + N_LAYERS)
    params = {
        "embed": norm(keys[0], (VOCAB, HIDDEN)),
        "ln_f": jnp.ones((HIDDEN,), jnp.float32),
        "score": norm(keys[1], (HIDDEN, CLASS_NUM)),       # stored as (in, out)
        "layers": [],
    }
    for li in range(N_LAYERS):
        lk = jax.random.split(keys[2 + li], 4)
        params["layers"].append({
            "ln1": jnp.ones((HIDDEN,), jnp.float32),
            "ln2": jnp.ones((HIDDEN,), jnp.float32),
            "wqkv": norm(lk[0], (HIDDEN, 3 * HIDDEN)),     # fused q|k|v
            "wo": norm(lk[1], (HIDDEN, HIDDEN)),
            "wgu": norm(lk[2], (HIDDEN, 2 * INTERMEDIATE)),  # fused gate|up
            "wd": norm(lk[3], (INTERMEDIATE, HIDDEN)),
        })
    return params


def pack_weights(params):
    """Fold RMSNorm / q-scale into weights, split into per-head slabs, cast bf16,
    and stack per-layer weights so the kernel gets a handful of DMA slabs."""
    H, nh, hd = HIDDEN, N_HEADS, HEAD_DIM
    scale = 1.0 / math.sqrt(hd)

    def heads(w):                       # (H, H) -> (nh, H, hd)
        return w.reshape(H, nh, hd).transpose(1, 0, 2)

    attn_w, wgu_all, wd_all = [], [], []
    for layer in params["layers"]:
        wqkv = layer["ln1"][:, None] * layer["wqkv"]       # fold input RMSNorm
        wq = wqkv[:, :H] * scale                           # fold 1/sqrt(hd)
        wk = wqkv[:, H:2 * H]
        wv = wqkv[:, 2 * H:]
        # out-proj stored per-head, transposed: w_oT[n, h, d] = wo[n*hd+d, h]
        w_oT = layer["wo"].reshape(nh, hd, H).transpose(0, 2, 1)
        attn_w.append(jnp.concatenate([heads(wq), heads(wk), heads(wv), w_oT],
                                      axis=0))              # (4*nh, H, hd)
        wgu_all.append(layer["ln2"][:, None] * layer["wgu"])  # fold post-attn norm
        wd_all.append(layer["wd"])

    return {
        "embed": params["embed"],
        "attn_w": jnp.stack(attn_w).astype(WDTYPE),          # (L, 4*nh, H, hd)
        "wgu": jnp.stack(wgu_all).astype(WDTYPE),            # (L, H, 2I)
        "wd": jnp.stack(wd_all).astype(WDTYPE),              # (L, I, H)
        "score": (params["ln_f"][:, None] * params["score"]).astype(WDTYPE),
    }


# ----------------------------- forward --------------------------------------------
def llama2_classifier_forward(packed, input_ids, attention_mask):
    B, S = input_ids.shape
    T = B * S
    H, hd = HIDDEN, HEAD_DIM

    # embedding lookup (glue)
    x = packed["embed"][input_ids].reshape(T, H).astype(jnp.float32)

    # Block-diagonal additive bias over the flattened token axis:
    # same-sequence AND causal AND key-not-padded, else -1e9 (HF builds the same
    # per-sequence mask; block-diag keeps batches independent inside one matmul).
    batch_id = jnp.arange(T) // S
    pos = jnp.arange(T) % S
    same_seq = batch_id[:, None] == batch_id[None, :]
    causal = pos[None, :] <= pos[:, None]
    key_ok = attention_mask.reshape(-1).astype(bool)[None, :]
    bias = jnp.where(same_seq & causal & key_ok, 0.0, -1e9).astype(jnp.float32)
    bias = bias[None]                                          # (1, T, T)

    # RoPE tables, tiled to the flattened (B*S) token axis; cos/sin stacked.
    inv_freq = 1.0 / (ROPE_THETA ** (jnp.arange(0, hd, 2, dtype=jnp.float32) / hd))
    freqs = jnp.outer(jnp.arange(S, dtype=jnp.float32), inv_freq)   # (S, hd/2)
    emb = jnp.concatenate([freqs, freqs], axis=-1)                  # (S, hd)
    trig = jnp.stack([jnp.cos(emb), jnp.sin(emb)])                  # (2, S, hd)
    trig = jnp.tile(trig, (1, B, 1))                                # (2, T, hd)

    # rotate-half (HF convention) as a signed (hd, hd) permutation matrix.
    half = hd // 2
    eye = jnp.eye(half, dtype=jnp.float32)
    zer = jnp.zeros((half, half), jnp.float32)
    rot = jnp.concatenate([jnp.concatenate([zer, eye], axis=1),
                           jnp.concatenate([-eye, zer], axis=1)], axis=0)

    # Last non-pad token pooling as a one-hot matmul (assumes right-padding,
    # matching HF's pad-token based pooling for contiguous 1..1,0..0 masks).
    last_idx = jnp.sum(attention_mask, axis=1).astype(jnp.int32) - 1
    pool = jax.nn.one_hot(jnp.arange(B) * S + last_idx, T, dtype=jnp.float32)

    # Single fused, gridless kernel: whole model (<0.7 MB bf16 weights) resident
    # in VMEM; 9 input DMAs total.
    return pl.pallas_call(
        _fused_forward_kernel,
        out_shape=jax.ShapeDtypeStruct((B, CLASS_NUM), jnp.float32),
        compiler_params=pltpu.CompilerParams(vmem_limit_bytes=8 * 1024 * 1024),
    )(x, bias, trig, rot, pool, packed["score"],
      packed["attn_w"], packed["wgu"], packed["wd"])


# ----------------------------- main ------------------------------------------------
if __name__ == "__main__":
    key = jax.random.PRNGKey(0)
    pkey, ikey = jax.random.split(key)

    params = init_params(pkey)
    packed = pack_weights(params)

    input_ids = jax.random.randint(ikey, (BATCH, SEQ), 0, VOCAB, dtype=jnp.int32)
    lengths = jnp.array([SEQ, SEQ - 2], dtype=jnp.int32)
    attention_mask = (jnp.arange(SEQ)[None, :] < lengths[:, None]).astype(jnp.int32)

    fwd = jax.jit(llama2_classifier_forward)
    probs = jax.block_until_ready(fwd(packed, input_ids, attention_mask))

    assert probs.shape == (BATCH, CLASS_NUM)
    assert bool(jnp.all(jnp.isfinite(probs)))
    assert bool(jnp.allclose(jnp.sum(probs, axis=1), 1.0, atol=1e-5))
    print("KERNEL_OK")
</pallas_src>

<mosaic_0001>
module attributes {stable_mosaic.version = 11 : i64} {
  func.func @_fused_forward_kernel(%arg0: memref<16x128xf32, #tpu.memory_space<vmem>>, %arg1: memref<1x16x16xf32, #tpu.memory_space<vmem>>, %arg2: memref<2x16x32xf32, #tpu.memory_space<vmem>>, %arg3: memref<32x32xf32, #tpu.memory_space<vmem>>, %arg4: memref<2x16xf32, #tpu.memory_space<vmem>>, %arg5: memref<128x16xbf16, #tpu.memory_space<vmem>>, %arg6: memref<2x16x128x32xbf16, #tpu.memory_space<vmem>>, %arg7: memref<2x128x512xbf16, #tpu.memory_space<vmem>>, %arg8: memref<2x256x128xbf16, #tpu.memory_space<vmem>>, %arg9: memref<2x16xf32, #tpu.memory_space<vmem>>) attributes {dimension_semantics = [], scalar_prefetch = 0 : i64, scratch_operands = 0 : i64, tpu.core_type = #tpu.core_type<tc>} {
    %c0 = arith.constant 0 : index
    %c0_0 = arith.constant 0 : index
    %0 = vector.load %arg0[%c0, %c0_0] : memref<16x128xf32, #tpu.memory_space<vmem>>, vector<16x128xf32>
    %c0_1 = arith.constant 0 : index
    %c0_2 = arith.constant 0 : index
    %c0_3 = arith.constant 0 : index
    %1 = vector.load %arg1[%c0_1, %c0_2, %c0_3] : memref<1x16x16xf32, #tpu.memory_space<vmem>>, vector<1x16x16xf32>
    %c0_4 = arith.constant 0 : index
    %c0_5 = arith.constant 0 : index
    %c0_6 = arith.constant 0 : index
    %2 = vector.load %arg2[%c0_4, %c0_5, %c0_6] : memref<2x16x32xf32, #tpu.memory_space<vmem>>, vector<1x16x32xf32>
    %3 = vector.shape_cast %2 : vector<1x16x32xf32> to vector<16x32xf32>
    %c1 = arith.constant 1 : index
    %c0_7 = arith.constant 0 : index
    %c0_8 = arith.constant 0 : index
    %4 = vector.load %arg2[%c1, %c0_7, %c0_8] : memref<2x16x32xf32, #tpu.memory_space<vmem>>, vector<1x16x32xf32>
    %5 = vector.shape_cast %4 : vector<1x16x32xf32> to vector<16x32xf32>
    %c0_9 = arith.constant 0 : index
    %c0_10 = arith.constant 0 : index
    %6 = vector.load %arg3[%c0_9, %c0_10] : memref<32x32xf32, #tpu.memory_space<vmem>>, vector<32x32xf32>
    %c0_11 = arith.constant 0 : index
    %c0_12 = arith.constant 0 : index
    %c0_13 = arith.constant 0 : index
    %c0_14 = arith.constant 0 : index
    %7 = vector.load %arg6[%c0_11, %c0_12, %c0_13, %c0_14] : memref<2x16x128x32xbf16, #tpu.memory_space<vmem>>, vector<1x16x128x32xbf16>
    %8 = vector.shape_cast %7 : vector<1x16x128x32xbf16> to vector<16x128x32xbf16>
    %9 = vector.extract_strided_slice %8 {offsets = [0, 0, 0], sizes = [12, 128, 32], strides = [1, 1, 1]} : vector<16x128x32xbf16> to vector<12x128x32xbf16>
    %10 = vector.extract_strided_slice %8 {offsets = [12, 0, 0], sizes = [4, 128, 32], strides = [1, 1, 1]} : vector<16x128x32xbf16> to vector<4x128x32xbf16>
    %11 = arith.mulf %0, %0 : vector<16x128xf32>
    %cst = arith.constant dense<0.000000e+00> : vector<16xf32>
    %12 = vector.multi_reduction <add>, %11, %cst [1] : vector<16x128xf32> to vector<16xf32>
    %13 = vector.shape_cast %12 : vector<16xf32> to vector<16x1xf32>
    %cst_15 = arith.constant 1.280000e+02 : f32
    %14 = vector.broadcast %cst_15 : f32 to vector<16x1xf32>
    %15 = arith.divf %13, %14 : vector<16x1xf32>
    %cst_16 = arith.constant 9.99999974E-6 : f32
    %16 = vector.broadcast %cst_16 : f32 to vector<16x1xf32>
    %17 = arith.addf %15, %16 : vector<16x1xf32>
    %18 = math.rsqrt %17 : vector<16x1xf32>
    %19 = vector.broadcast %18 : vector<16x1xf32> to vector<16x128xf32>
    %20 = arith.mulf %0, %19 : vector<16x128xf32>
    %21 = arith.truncf %20 : vector<16x128xf32> to vector<16x128xbf16>
    %22 = vector.shape_cast %21 : vector<16x128xbf16> to vector<1x16x128xbf16>
    %23 = vector.shape_cast %22 : vector<1x16x128xbf16> to vector<1x16x128xbf16>
    %24 = vector.broadcast %23 : vector<1x16x128xbf16> to vector<12x16x128xbf16>
    %cst_17 = arith.constant dense<0.000000e+00> : vector<12x16x32xf32>
    %25 = tpu.matmul %24, %9, %cst_17 {dimension_numbers = #tpu.dot_dimension_numbers<[2], [1], [1], [2], [0, 0, 0, 1, 1, 2], [0], [0]>} : vector<12x16x128xbf16>, vector<12x128x32xbf16>, vector<12x16x32xf32> -> vector<12x16x32xf32>
    %26 = vector.extract_strided_slice %25 {offsets = [0, 0, 0], sizes = [8, 16, 32], strides = [1, 1, 1]} : vector<12x16x32xf32> to vector<8x16x32xf32>
    %27 = vector.shape_cast %26 : vector<8x16x32xf32> to vector<128x32xf32>
    %cst_18 = arith.constant dense<0.000000e+00> : vector<128x32xf32>
    %28 = tpu.matmul %27, %6, %cst_18 {dimension_numbers = #tpu.dot_dimension_numbers<[1], [0], [0], [1], [0, 0, 1, 1], [], []>} : vector<128x32xf32>, vector<32x32xf32>, vector<128x32xf32> -> vector<128x32xf32>
    %29 = vector.shape_cast %28 : vector<128x32xf32> to vector<8x16x32xf32>
    %30 = vector.shape_cast %3 : vector<16x32xf32> to vector<1x16x32xf32>
    %31 = vector.broadcast %30 : vector<1x16x32xf32> to vector<8x16x32xf32>
    %32 = arith.mulf %26, %31 : vector<8x16x32xf32>
    %33 = vector.shape_cast %5 : vector<16x32xf32> to vector<1x16x32xf32>
    %34 = vector.broadcast %33 : vector<1x16x32xf32> to vector<8x16x32xf32>
    %35 = arith.mulf %29, %34 : vector<8x16x32xf32>
    %36 = arith.addf %32, %35 : vector<8x16x32xf32>
    %37 = vector.extract_strided_slice %36 {offsets = [0, 0, 0], sizes = [4, 16, 32], strides = [1, 1, 1]} : vector<8x16x32xf32> to vector<4x16x32xf32>
    %38 = vector.extract_strided_slice %36 {offsets = [4, 0, 0], sizes = [4, 16, 32], strides = [1, 1, 1]} : vector<8x16x32xf32> to vector<4x16x32xf32>
    %39 = vector.extract_strided_slice %25 {offsets = [8, 0, 0], sizes = [4, 16, 32], strides = [1, 1, 1]} : vector<12x16x32xf32> to vector<4x16x32xf32>
    %cst_19 = arith.constant dense<0.000000e+00> : vector<4x16x16xf32>
    %40 = tpu.matmul %37, %38, %cst_19 {dimension_numbers = #tpu.dot_dimension_numbers<[2], [2], [1], [1], [0, 0, 0, 1, 1, 1], [0], [0]>} : vector<4x16x32xf32>, vector<4x16x32xf32>, vector<4x16x16xf32> -> vector<4x16x16xf32>
    %41 = vector.broadcast %1 : vector<1x16x16xf32> to vector<4x16x16xf32>
    %42 = arith.addf %40, %41 : vector<4x16x16xf32>
    %cst_20 = arith.constant dense<0xFF800000> : vector<4x16xf32>
    %43 = vector.multi_reduction <maximumf>, %42, %cst_20 [2] : vector<4x16x16xf32> to vector<4x16xf32>
    %44 = vector.shape_cast %43 : vector<4x16xf32> to vector<4x16x1xf32>
    %45 = vector.broadcast %44 : vector<4x16x1xf32> to vector<4x16x16xf32>
    %46 = arith.subf %42, %45 : vector<4x16x16xf32>
    %47 = math.exp %46 : vector<4x16x16xf32>
    %cst_21 = arith.constant dense<0.000000e+00> : vector<4x16xf32>
    %48 = vector.multi_reduction <add>, %47, %cst_21 [2] : vector<4x16x16xf32> to vector<4x16xf32>
    %49 = vector.shape_cast %48 : vector<4x16xf32> to vector<4x16x1xf32>
    %50 = tpu.reciprocal %49 {approx = true} : vector<4x16x1xf32> -> vector<4x16x1xf32>
    %51 = vector.broadcast %50 : vector<4x16x1xf32> to vector<4x16x16xf32>
    %52 = arith.mulf %47, %51 : vector<4x16x16xf32>
    %cst_22 = arith.constant dense<0.000000e+00> : vector<4x16x32xf32>
    %53 = tpu.matmul %52, %39, %cst_22 {dimension_numbers = #tpu.dot_dimension_numbers<[2], [1], [1], [2], [0, 0, 0, 1, 1, 2], [0], [0]>} : vector<4x16x16xf32>, vector<4x16x32xf32>, vector<4x16x32xf32> -> vector<4x16x32xf32>
    %54 = arith.truncf %53 : vector<4x16x32xf32> to vector<4x16x32xbf16>
    %cst_23 = arith.constant dense<0.000000e+00> : vector<4x16x128xf32>
    %55 = tpu.matmul %54, %10, %cst_23 {dimension_numbers = #tpu.dot_dimension_numbers<[2], [2], [1], [1], [0, 0, 0, 1, 1, 1], [0], [0]>} : vector<4x16x32xbf16>, vector<4x128x32xbf16>, vector<4x16x128xf32> -> vector<4x16x128xf32>
    %cst_24 = arith.constant dense<0.000000e+00> : vector<16x128xf32>
    %56 = vector.multi_reduction <add>, %55, %cst_24 [0] : vector<4x16x128xf32> to vector<16x128xf32>
    %57 = arith.addf %0, %56 : vector<16x128xf32>
    %58 = arith.mulf %57, %57 : vector<16x128xf32>
    %cst_25 = arith.constant dense<0.000000e+00> : vector<16xf32>
    %59 = vector.multi_reduction <add>, %58, %cst_25 [1] : vector<16x128xf32> to vector<16xf32>
    %60 = vector.shape_cast %59 : vector<16xf32> to vector<16x1xf32>
    %cst_26 = arith.constant 1.280000e+02 : f32
    %61 = vector.broadcast %cst_26 : f32 to vector<16x1xf32>
    %62 = arith.divf %60, %61 : vector<16x1xf32>
    %cst_27 = arith.constant 9.99999974E-6 : f32
    %63 = vector.broadcast %cst_27 : f32 to vector<16x1xf32>
    %64 = arith.addf %62, %63 : vector<16x1xf32>
    %65 = math.rsqrt %64 : vector<16x1xf32>
    %66 = vector.broadcast %65 : vector<16x1xf32> to vector<16x128xf32>
    %67 = arith.mulf %57, %66 : vector<16x128xf32>
    %68 = arith.truncf %67 : vector<16x128xf32> to vector<16x128xbf16>
    %c0_28 = arith.constant 0 : index
    %c0_29 = arith.constant 0 : index
    %c0_30 = arith.constant 0 : index
    %69 = vector.load %arg7[%c0_28, %c0_29, %c0_30] : memref<2x128x512xbf16, #tpu.memory_space<vmem>>, vector<1x128x512xbf16>
    %70 = vector.shape_cast %69 : vector<1x128x512xbf16> to vector<128x512xbf16>
    %cst_31 = arith.constant dense<0.000000e+00> : vector<16x512xf32>
    %71 = tpu.matmul %68, %70, %cst_31 {dimension_numbers = #tpu.dot_dimension_numbers<[1], [0], [0], [1], [0, 0, 1, 1], [], []>} : vector<16x128xbf16>, vector<128x512xbf16>, vector<16x512xf32> -> vector<16x512xf32>
    %72 = vector.extract_strided_slice %71 {offsets = [0, 0], sizes = [16, 256], strides = [1, 1]} : vector<16x512xf32> to vector<16x256xf32>
    %73 = vector.extract_strided_slice %71 {offsets = [0, 256], sizes = [16, 256], strides = [1, 1]} : vector<16x512xf32> to vector<16x256xf32>
    %74 = arith.negf %72 : vector<16x256xf32>
    %75 = math.exp %74 : vector<16x256xf32>
    %cst_32 = arith.constant 1.000000e+00 : f32
    %76 = vector.broadcast %cst_32 : f32 to vector<16x256xf32>
    %77 = arith.addf %76, %75 : vector<16x256xf32>
    %78 = arith.divf %76, %77 : vector<16x256xf32>
    %79 = arith.mulf %72, %78 : vector<16x256xf32>
    %80 = arith.mulf %79, %73 : vector<16x256xf32>
    %81 = arith.truncf %80 : vector<16x256xf32> to vector<16x256xbf16>
    %c0_33 = arith.constant 0 : index
    %c0_34 = arith.constant 0 : index
    %c0_35 = arith.constant 0 : index
    %82 = vector.load %arg8[%c0_33, %c0_34, %c0_35] : memref<2x256x128xbf16, #tpu.memory_space<vmem>>, vector<1x256x128xbf16>
    %83 = vector.shape_cast %82 : vector<1x256x128xbf16> to vector<256x128xbf16>
    %cst_36 = arith.constant dense<0.000000e+00> : vector<16x128xf32>
    %84 = tpu.matmul %81, %83, %cst_36 {dimension_numbers = #tpu.dot_dimension_numbers<[1], [0], [0], [1], [0, 0, 1, 1], [], []>} : vector<16x256xbf16>, vector<256x128xbf16>, vector<16x128xf32> -> vector<16x128xf32>
    %85 = arith.addf %57, %84 : vector<16x128xf32>
    %c1_37 = arith.constant 1 : index
    %c0_38 = arith.constant 0 : index
    %c0_39 = arith.constant 0 : index
    %c0_40 = arith.constant 0 : index
    %86 = vector.load %arg6[%c1_37, %c0_38, %c0_39, %c0_40] : memref<2x16x128x32xbf16, #tpu.memory_space<vmem>>, vector<1x16x128x32xbf16>
    %87 = vector.shape_cast %86 : vector<1x16x128x32xbf16> to vector<16x128x32xbf16>
    %88 = vector.extract_strided_slice %87 {offsets = [0, 0, 0], sizes = [12, 128, 32], strides = [1, 1, 1]} : vector<16x128x32xbf16> to vector<12x128x32xbf16>
    %89 = vector.extract_strided_slice %87 {offsets = [12, 0, 0], sizes = [4, 128, 32], strides = [1, 1, 1]} : vector<16x128x32xbf16> to vector<4x128x32xbf16>
    %90 = arith.mulf %85, %85 : vector<16x128xf32>
    %cst_41 = arith.constant dense<0.000000e+00> : vector<16xf32>
    %91 = vector.multi_reduction <add>, %90, %cst_41 [1] : vector<16x128xf32> to vector<16xf32>
    %92 = vector.shape_cast %91 : vector<16xf32> to vector<16x1xf32>
    %cst_42 = arith.constant 1.280000e+02 : f32
    %93 = vector.broadcast %cst_42 : f32 to vector<16x1xf32>
    %94 = arith.divf %92, %93 : vector<16x1xf32>
    %cst_43 = arith.constant 9.99999974E-6 : f32
    %95 = vector.broadcast %cst_43 : f32 to vector<16x1xf32>
    %96 = arith.addf %94, %95 : vector<16x1xf32>
    %97 = math.rsqrt %96 : vector<16x1xf32>
    %98 = vector.broadcast %97 : vector<16x1xf32> to vector<16x128xf32>
    %99 = arith.mulf %85, %98 : vector<16x128xf32>
    %100 = arith.truncf %99 : vector<16x128xf32> to vector<16x128xbf16>
    %101 = vector.shape_cast %100 : vector<16x128xbf16> to vector<1x16x128xbf16>
    %102 = vector.shape_cast %101 : vector<1x16x128xbf16> to vector<1x16x128xbf16>
    %103 = vector.broadcast %102 : vector<1x16x128xbf16> to vector<12x16x128xbf16>
    %cst_44 = arith.constant dense<0.000000e+00> : vector<12x16x32xf32>
    %104 = tpu.matmul %103, %88, %cst_44 {dimension_numbers = #tpu.dot_dimension_numbers<[2], [1], [1], [2], [0, 0, 0, 1, 1, 2], [0], [0]>} : vector<12x16x128xbf16>, vector<12x128x32xbf16>, vector<12x16x32xf32> -> vector<12x16x32xf32>
    %105 = vector.extract_strided_slice %104 {offsets = [0, 0, 0], sizes = [8, 16, 32], strides = [1, 1, 1]} : vector<12x16x32xf32> to vector<8x16x32xf32>
    %106 = vector.shape_cast %105 : vector<8x16x32xf32> to vector<128x32xf32>
    %cst_45 = arith.constant dense<0.000000e+00> : vector<128x32xf32>
    %107 = tpu.matmul %106, %6, %cst_45 {dimension_numbers = #tpu.dot_dimension_numbers<[1], [0], [0], [1], [0, 0, 1, 1], [], []>} : vector<128x32xf32>, vector<32x32xf32>, vector<128x32xf32> -> vector<128x32xf32>
    %108 = vector.shape_cast %107 : vector<128x32xf32> to vector<8x16x32xf32>
    %109 = vector.shape_cast %3 : vector<16x32xf32> to vector<1x16x32xf32>
    %110 = vector.broadcast %109 : vector<1x16x32xf32> to vector<8x16x32xf32>
    %111 = arith.mulf %105, %110 : vector<8x16x32xf32>
    %112 = vector.shape_cast %5 : vector<16x32xf32> to vector<1x16x32xf32>
    %113 = vector.broadcast %112 : vector<1x16x32xf32> to vector<8x16x32xf32>
    %114 = arith.mulf %108, %113 : vector<8x16x32xf32>
    %115 = arith.addf %111, %114 : vector<8x16x32xf32>
    %116 = vector.extract_strided_slice %115 {offsets = [0, 0, 0], sizes = [4, 16, 32], strides = [1, 1, 1]} : vector<8x16x32xf32> to vector<4x16x32xf32>
    %117 = vector.extract_strided_slice %115 {offsets = [4, 0, 0], sizes = [4, 16, 32], strides = [1, 1, 1]} : vector<8x16x32xf32> to vector<4x16x32xf32>
    %118 = vector.extract_strided_slice %104 {offsets = [8, 0, 0], sizes = [4, 16, 32], strides = [1, 1, 1]} : vector<12x16x32xf32> to vector<4x16x32xf32>
    %cst_46 = arith.constant dense<0.000000e+00> : vector<4x16x16xf32>
    %119 = tpu.matmul %116, %117, %cst_46 {dimension_numbers = #tpu.dot_dimension_numbers<[2], [2], [1], [1], [0, 0, 0, 1, 1, 1], [0], [0]>} : vector<4x16x32xf32>, vector<4x16x32xf32>, vector<4x16x16xf32> -> vector<4x16x16xf32>
    %120 = vector.broadcast %1 : vector<1x16x16xf32> to vector<4x16x16xf32>
    %121 = arith.addf %119, %120 : vector<4x16x16xf32>
    %cst_47 = arith.constant dense<0xFF800000> : vector<4x16xf32>
    %122 = vector.multi_reduction <maximumf>, %121, %cst_47 [2] : vector<4x16x16xf32> to vector<4x16xf32>
    %123 = vector.shape_cast %122 : vector<4x16xf32> to vector<4x16x1xf32>
    %124 = vector.broadcast %123 : vector<4x16x1xf32> to vector<4x16x16xf32>
    %125 = arith.subf %121, %124 : vector<4x16x16xf32>
    %126 = math.exp %125 : vector<4x16x16xf32>
    %cst_48 = arith.constant dense<0.000000e+00> : vector<4x16xf32>
    %127 = vector.multi_reduction <add>, %126, %cst_48 [2] : vector<4x16x16xf32> to vector<4x16xf32>
    %128 = vector.shape_cast %127 : vector<4x16xf32> to vector<4x16x1xf32>
    %129 = tpu.reciprocal %128 {approx = true} : vector<4x16x1xf32> -> vector<4x16x1xf32>
    %130 = vector.broadcast %129 : vector<4x16x1xf32> to vector<4x16x16xf32>
    %131 = arith.mulf %126, %130 : vector<4x16x16xf32>
    %cst_49 = arith.constant dense<0.000000e+00> : vector<4x16x32xf32>
    %132 = tpu.matmul %131, %118, %cst_49 {dimension_numbers = #tpu.dot_dimension_numbers<[2], [1], [1], [2], [0, 0, 0, 1, 1, 2], [0], [0]>} : vector<4x16x16xf32>, vector<4x16x32xf32>, vector<4x16x32xf32> -> vector<4x16x32xf32>
    %133 = arith.truncf %132 : vector<4x16x32xf32> to vector<4x16x32xbf16>
    %cst_50 = arith.constant dense<0.000000e+00> : vector<4x16x128xf32>
    %134 = tpu.matmul %133, %89, %cst_50 {dimension_numbers = #tpu.dot_dimension_numbers<[2], [2], [1], [1], [0, 0, 0, 1, 1, 1], [0], [0]>} : vector<4x16x32xbf16>, vector<4x128x32xbf16>, vector<4x16x128xf32> -> vector<4x16x128xf32>
    %cst_51 = arith.constant dense<0.000000e+00> : vector<16x128xf32>
    %135 = vector.multi_reduction <add>, %134, %cst_51 [0] : vector<4x16x128xf32> to vector<16x128xf32>
    %136 = arith.addf %85, %135 : vector<16x128xf32>
    %137 = arith.mulf %136, %136 : vector<16x128xf32>
    %cst_52 = arith.constant dense<0.000000e+00> : vector<16xf32>
    %138 = vector.multi_reduction <add>, %137, %cst_52 [1] : vector<16x128xf32> to vector<16xf32>
    %139 = vector.shape_cast %138 : vector<16xf32> to vector<16x1xf32>
    %cst_53 = arith.constant 1.280000e+02 : f32
    %140 = vector.broadcast %cst_53 : f32 to vector<16x1xf32>
    %141 = arith.divf %139, %140 : vector<16x1xf32>
    %cst_54 = arith.constant 9.99999974E-6 : f32
    %142 = vector.broadcast %cst_54 : f32 to vector<16x1xf32>
    %143 = arith.addf %141, %142 : vector<16x1xf32>
    %144 = math.rsqrt %143 : vector<16x1xf32>
    %145 = vector.broadcast %144 : vector<16x1xf32> to vector<16x128xf32>
    %146 = arith.mulf %136, %145 : vector<16x128xf32>
    %147 = arith.truncf %146 : vector<16x128xf32> to vector<16x128xbf16>
    %c1_55 = arith.constant 1 : index
    %c0_56 = arith.constant 0 : index
    %c0_57 = arith.constant 0 : index
    %148 = vector.load %arg7[%c1_55, %c0_56, %c0_57] : memref<2x128x512xbf16, #tpu.memory_space<vmem>>, vector<1x128x512xbf16>
    %149 = vector.shape_cast %148 : vector<1x128x512xbf16> to vector<128x512xbf16>
    %cst_58 = arith.constant dense<0.000000e+00> : vector<16x512xf32>
    %150 = tpu.matmul %147, %149, %cst_58 {dimension_numbers = #tpu.dot_dimension_numbers<[1], [0], [0], [1], [0, 0, 1, 1], [], []>} : vector<16x128xbf16>, vector<128x512xbf16>, vector<16x512xf32> -> vector<16x512xf32>
    %151 = vector.extract_strided_slice %150 {offsets = [0, 0], sizes = [16, 256], strides = [1, 1]} : vector<16x512xf32> to vector<16x256xf32>
    %152 = vector.extract_strided_slice %150 {offsets = [0, 256], sizes = [16, 256], strides = [1, 1]} : vector<16x512xf32> to vector<16x256xf32>
    %153 = arith.negf %151 : vector<16x256xf32>
    %154 = math.exp %153 : vector<16x256xf32>
    %cst_59 = arith.constant 1.000000e+00 : f32
    %155 = vector.broadcast %cst_59 : f32 to vector<16x256xf32>
    %156 = arith.addf %155, %154 : vector<16x256xf32>
    %157 = arith.divf %155, %156 : vector<16x256xf32>
    %158 = arith.mulf %151, %157 : vector<16x256xf32>
    %159 = arith.mulf %158, %152 : vector<16x256xf32>
    %160 = arith.truncf %159 : vector<16x256xf32> to vector<16x256xbf16>
    %c1_60 = arith.constant 1 : index
    %c0_61 = arith.constant 0 : index
    %c0_62 = arith.constant 0 : index
    %161 = vector.load %arg8[%c1_60, %c0_61, %c0_62] : memref<2x256x128xbf16, #tpu.memory_space<vmem>>, vector<1x256x128xbf16>
    %162 = vector.shape_cast %161 : vector<1x256x128xbf16> to vector<256x128xbf16>
    %cst_63 = arith.constant dense<0.000000e+00> : vector<16x128xf32>
    %163 = tpu.matmul %160, %162, %cst_63 {dimension_numbers = #tpu.dot_dimension_numbers<[1], [0], [0], [1], [0, 0, 1, 1], [], []>} : vector<16x256xbf16>, vector<256x128xbf16>, vector<16x128xf32> -> vector<16x128xf32>
    %164 = arith.addf %136, %163 : vector<16x128xf32>
    %165 = arith.mulf %164, %164 : vector<16x128xf32>
    %cst_64 = arith.constant dense<0.000000e+00> : vector<16xf32>
    %166 = vector.multi_reduction <add>, %165, %cst_64 [1] : vector<16x128xf32> to vector<16xf32>
    %167 = vector.shape_cast %166 : vector<16xf32> to vector<16x1xf32>
    %cst_65 = arith.constant 1.280000e+02 : f32
    %168 = vector.broadcast %cst_65 : f32 to vector<16x1xf32>
    %169 = arith.divf %167, %168 : vector<16x1xf32>
    %cst_66 = arith.constant 9.99999974E-6 : f32
    %170 = vector.broadcast %cst_66 : f32 to vector<16x1xf32>
    %171 = arith.addf %169, %170 : vector<16x1xf32>
    %172 = math.rsqrt %171 : vector<16x1xf32>
    %173 = vector.broadcast %172 : vector<16x1xf32> to vector<16x128xf32>
    %174 = arith.mulf %164, %173 : vector<16x128xf32>
    %c0_67 = arith.constant 0 : index
    %c0_68 = arith.constant 0 : index
    %175 = vector.load %arg4[%c0_67, %c0_68] : memref<2x16xf32, #tpu.memory_space<vmem>>, vector<2x16xf32>
    %cst_69 = arith.constant dense<0.000000e+00> : vector<2x128xf32>
    %176 = tpu.matmul %175, %174, %cst_69 {dimension_numbers = #tpu.dot_dimension_numbers<[1], [0], [0], [1], [0, 0, 1, 1], [], []>} : vector<2x16xf32>, vector<16x128xf32>, vector<2x128xf32> -> vector<2x128xf32>
    %177 = arith.truncf %176 : vector<2x128xf32> to vector<2x128xbf16>
    %c0_70 = arith.constant 0 : index
    %c0_71 = arith.constant 0 : index
    %178 = vector.load %arg5[%c0_70, %c0_71] : memref<128x16xbf16, #tpu.memory_space<vmem>>, vector<128x16xbf16>
    %cst_72 = arith.constant dense<0.000000e+00> : vector<2x16xf32>
    %179 = tpu.matmul %177, %178, %cst_72 {dimension_numbers = #tpu.dot_dimension_numbers<[1], [0], [0], [1], [0, 0, 1, 1], [], []>} : vector<2x128xbf16>, vector<128x16xbf16>, vector<2x16xf32> -> vector<2x16xf32>
    %cst_73 = arith.constant dense<0xFF800000> : vector<2xf32>
    %180 = vector.multi_reduction <maximumf>, %179, %cst_73 [1] : vector<2x16xf32> to vector<2xf32>
    %181 = vector.shape_cast %180 : vector<2xf32> to vector<2x1xf32>
    %182 = vector.broadcast %181 : vector<2x1xf32> to vector<2x16xf32>
    %183 = arith.subf %179, %182 : vector<2x16xf32>
    %184 = math.exp %183 : vector<2x16xf32>
    %cst_74 = arith.constant dense<0.000000e+00> : vector<2xf32>
    %185 = vector.multi_reduction <add>, %184, %cst_74 [1] : vector<2x16xf32> to vector<2xf32>
    %186 = vector.shape_cast %185 : vector<2xf32> to vector<2x1xf32>
    %187 = vector.broadcast %186 : vector<2x1xf32> to vector<2x16xf32>
    %188 = arith.divf %184, %187 : vector<2x16xf32>
    %c0_75 = arith.constant 0 : index
    %c0_76 = arith.constant 0 : index
    %189 = vector.load %arg9[%c0_75, %c0_76] : memref<2x16xf32, #tpu.memory_space<vmem>>, vector<2x16xf32>
    tpu.vector_store %arg9[%c0_75, %c0_76], %188 {strides = array<i32>} : memref<2x16xf32, #tpu.memory_space<vmem>>, vector<2x16xf32>,
    return
  }
}

</mosaic_0001>

<llo_original>
// kernel: llama2_classifier_forward.1
$region0: #{llama2_classifier_forward.1}
  #allocation0 [shape = 'u32[]', space=smem, size = 0x4, offset = 0x4, fixed_abs, tag = 'smem constant byte address 0x4 - core index']
  #allocation1 [shape = 'u32[144,128]{1,0:T(1,128)}', space=vmem, size = 0x12000, scoped, tag = 'internal scratch']
  %s0 = inlined_call_operand.vmem [shape: f32[16,128], index: 0, kind: input, shape index: {}]
  %s1 = inlined_call_operand.vmem [shape: f32[1,16,16], index: 1, kind: input, shape index: {}]
  %s2 = inlined_call_operand.vmem [shape: f32[2,16,32], index: 2, kind: input, shape index: {}]
  %s3 = inlined_call_operand.vmem [shape: f32[32,32], index: 3, kind: input, shape index: {}]
  %s4 = inlined_call_operand.vmem [shape: f32[2,16], index: 4, kind: input, shape index: {}]
  %s5 = inlined_call_operand.vmem [shape: bf16[128,16], index: 5, kind: input, shape index: {}]
  %s6 = inlined_call_operand.vmem [shape: bf16[2,16,128,32], index: 6, kind: input, shape index: {}]
  %s7 = inlined_call_operand.vmem [shape: bf16[2,128,512], index: 7, kind: input, shape index: {}]
  %s8 = inlined_call_operand.vmem [shape: bf16[2,256,128], index: 8, kind: input, shape index: {}]
  %s9 = inlined_call_operand.hbm [shape: f32[2,16], index: 9, kind: output, shape index: {}]
  %s10 = sld [smem:[#allocation0]]
  $region46: #{llama2_classifier_forward.1} parent=0
    _
  %s12 = ssub.s32 1, %s10
  %s13 = scalar_select 0, %s12, %s10
  $region1: #{llama2_classifier_forward.1} parent=0
    #allocation2 [shape = 'u8[1024]{0}', space=vmem, size = 0x400, scoped, tag = 'output window, operand 0, single buffered']
    #allocation3 [shape = 's32[1]{0}', space=sflag, size = 0x4, scoped, tag = 'scoped memory for llama2_classifier_forward.1']
    %14 = vsyncpa [#allocation3], 0
    // Predicated region
    $region2: #{llama2_classifier_forward.1} parent=1 // pred_check
      _
    $region3: #{llama2_classifier_forward.1} parent=1 // pred_check_branch
      %16 = sbr.rel (0) target = $region5
    $region4: #{llama2_classifier_forward.1} parent=1 // pred_region
      _
    $region5: #{llama2_classifier_forward.1} parent=1 // pred_fallthru
      _
    // Predicated region
    $region6: #{llama2_classifier_forward.1} parent=1 // pred_check
      _
    $region7: #{llama2_classifier_forward.1} parent=1 // pred_check_branch
      %18 = sbr.rel (0) target = $region9
    $region8: #{llama2_classifier_forward.1} parent=1 // pred_region
      _
    $region9: #{llama2_classifier_forward.1} parent=1 // pred_fallthru
      _
    // Predicated region
    $region10: #{llama2_classifier_forward.1} parent=1 // pred_check
      _
    $region11: #{llama2_classifier_forward.1} parent=1 // pred_check_branch
      %20 = sbr.rel (0) target = $region13
    $region12: #{llama2_classifier_forward.1} parent=1 // pred_region
      _
    $region13: #{llama2_classifier_forward.1} parent=1 // pred_fallthru
      _
    // Predicated region
    $region14: #{llama2_classifier_forward.1} parent=1 // pred_check
      _
    $region15: #{llama2_classifier_forward.1} parent=1 // pred_check_branch
      %22 = sbr.rel (0) target = $region17
    $region16: #{llama2_classifier_forward.1} parent=1 // pred_region
      _
    $region17: #{llama2_classifier_forward.1} parent=1 // pred_fallthru
      _
    // Predicated region
    $region18: #{llama2_classifier_forward.1} parent=1 // pred_check
      _
    $region19: #{llama2_classifier_forward.1} parent=1 // pred_check_branch
      %24 = sbr.rel (0) target = $region21
    $region20: #{llama2_classifier_forward.1} parent=1 // pred_region
      _
    $region21: #{llama2_classifier_forward.1} parent=1 // pred_fallthru
      _
    // Predicated region
    $region22: #{llama2_classifier_forward.1} parent=1 // pred_check
      _
    $region23: #{llama2_classifier_forward.1} parent=1 // pred_check_branch
      %26 = sbr.rel (0) target = $region25
    $region24: #{llama2_classifier_forward.1} parent=1 // pred_region
      _
    $region25: #{llama2_classifier_forward.1} parent=1 // pred_fallthru
      _
    // Predicated region
    $region26: #{llama2_classifier_forward.1} parent=1 // pred_check
      _
    $region27: #{llama2_classifier_forward.1} parent=1 // pred_check_branch
      %28 = sbr.rel (0) target = $region29
    $region28: #{llama2_classifier_forward.1} parent=1 // pred_region
      _
    $region29: #{llama2_classifier_forward.1} parent=1 // pred_fallthru
      _
    // Predicated region
    $region30: #{llama2_classifier_forward.1} parent=1 // pred_check
      _
    $region31: #{llama2_classifier_forward.1} parent=1 // pred_check_branch
      %30 = sbr.rel (0) target = $region33
    $region32: #{llama2_classifier_forward.1} parent=1 // pred_region
      _
    $region33: #{llama2_classifier_forward.1} parent=1 // pred_fallthru
      _
    // Predicated region
    $region34: #{llama2_classifier_forward.1} parent=1 // pred_check
      _
    $region35: #{llama2_classifier_forward.1} parent=1 // pred_check_branch
      %32 = sbr.rel (0) target = $region37
    $region36: #{llama2_classifier_forward.1} parent=1 // pred_region
      _
    $region37: #{llama2_classifier_forward.1} parent=1 // pred_fallthru
      _
    %v34 = vld [vmem:[%s0] sm:$0xff]
    %v35 = vld [vmem:[%s0 + $0x8] sm:$0xff]
    %v36 = vld [vmem:[%s1] sm:$0xff]
    %v37 = vld [vmem:[%s1 + $0x8] sm:$0xff]
    %v38 = vld [vmem:[%s2] sm:$0xff]
    %v39 = vld [vmem:[%s2 + $0x8] sm:$0xff]
    %s40 = scalar_lea.vmem %s2, 16
    %v41 = vld [vmem:[%s40] sm:$0xff]
    %v42 = vld [vmem:[%s40 + $0x8] sm:$0xff]
    %v43 = vld [vmem:[%s3] sm:$0xff]
    %v44 = vld [vmem:[%s3 + $0x8] sm:$0xff]
    %v45 = vld [vmem:[%s3 + $0x10] sm:$0xff]
    %v46 = vld [vmem:[%s3 + $0x18] sm:$0xff]
    %v47 = vld [vmem:[%s6] sm:$0xf]
    %v48 = vld [vmem:[%s6 + $0x4] sm:$0xf]
    %v49 = vld [vmem:[%s6 + $0x8] sm:$0xf]
    %v50 = vld [vmem:[%s6 + $0xc] sm:$0xf]
    %v51 = vld [vmem:[%s6 + $0x10] sm:$0xf]
    %v52 = vld [vmem:[%s6 + $0x14] sm:$0xf]
    %v53 = vld [vmem:[%s6 + $0x18] sm:$0xf]
    %v54 = vld [vmem:[%s6 + $0x1c] sm:$0xf]
    %v55 = vld [vmem:[%s6 + $0x20] sm:$0xf]
    %v56 = vld [vmem:[%s6 + $0x24] sm:$0xf]
    %v57 = vld [vmem:[%s6 + $0x28] sm:$0xf]
    %v58 = vld [vmem:[%s6 + $0x2c] sm:$0xf]
    %v59 = vld [vmem:[%s6 + $0x30] sm:$0xf]
    %v60 = vld [vmem:[%s6 + $0x34] sm:$0xf]
    %v61 = vld [vmem:[%s6 + $0x38] sm:$0xf]
    %v62 = vld [vmem:[%s6 + $0x3c] sm:$0xf]
    %v63 = vld [vmem:[%s6 + $0x40] sm:$0xf]
    %v64 = vld [vmem:[%s6 + $0x44] sm:$0xf]
    %v65 = vld [vmem:[%s6 + $0x48] sm:$0xf]
    %v66 = vld [vmem:[%s6 + $0x4c] sm:$0xf]
    %v67 = vld [vmem:[%s6 + $0x50] sm:$0xf]
    %v68 = vld [vmem:[%s6 + $0x54] sm:$0xf]
    %v69 = vld [vmem:[%s6 + $0x58] sm:$0xf]
    %v70 = vld [vmem:[%s6 + $0x5c] sm:$0xf]
    %v71 = vld [vmem:[%s6 + $0x60] sm:$0xf]
    %v72 = vld [vmem:[%s6 + $0x64] sm:$0xf]
    %v73 = vld [vmem:[%s6 + $0x68] sm:$0xf]
    %v74 = vld [vmem:[%s6 + $0x6c] sm:$0xf]
    %v75 = vld [vmem:[%s6 + $0x70] sm:$0xf]
    %v76 = vld [vmem:[%s6 + $0x74] sm:$0xf]
    %v77 = vld [vmem:[%s6 + $0x78] sm:$0xf]
    %v78 = vld [vmem:[%s6 + $0x7c] sm:$0xf]
    %v79 = vld [vmem:[%s6 + $0x80] sm:$0xf]
    %v80 = vld [vmem:[%s6 + $0x84] sm:$0xf]
    %v81 = vld [vmem:[%s6 + $0x88] sm:$0xf]
    %v82 = vld [vmem:[%s6 + $0x8c] sm:$0xf]
    %v83 = vld [vmem:[%s6 + $0x90] sm:$0xf]
    %v84 = vld [vmem:[%s6 + $0x94] sm:$0xf]
    %v85 = vld [vmem:[%s6 + $0x98] sm:$0xf]
    %v86 = vld [vmem:[%s6 + $0x9c] sm:$0xf]
    %v87 = vld [vmem:[%s6 + $0xa0] sm:$0xf]
    %v88 = vld [vmem:[%s6 + $0xa4] sm:$0xf]
    %v89 = vld [vmem:[%s6 + $0xa8] sm:$0xf]
    %v90 = vld [vmem:[%s6 + $0xac] sm:$0xf]
    %v91 = vld [vmem:[%s6 + $0xb0] sm:$0xf]
    %v92 = vld [vmem:[%s6 + $0xb4] sm:$0xf]
    %v93 = vld [vmem:[%s6 + $0xb8] sm:$0xf]
    %v94 = vld [vmem:[%s6 + $0xbc] sm:$0xf]
    %v95 = vld [vmem:[%s6 + $0xc0] sm:$0xf]
    %v96 = vld [vmem:[%s6 + $0xc4] sm:$0xf]
    %v97 = vld [vmem:[%s6 + $0xc8] sm:$0xf]
    %v98 = vld [vmem:[%s6 + $0xcc] sm:$0xf]
    %v99 = vld [vmem:[%s6 + $0xd0] sm:$0xf]
    %v100 = vld [vmem:[%s6 + $0xd4] sm:$0xf]
    %v101 = vld [vmem:[%s6 + $0xd8] sm:$0xf]
    %v102 = vld [vmem:[%s6 + $0xdc] sm:$0xf]
    %v103 = vld [vmem:[%s6 + $0xe0] sm:$0xf]
    %v104 = vld [vmem:[%s6 + $0xe4] sm:$0xf]
    %v105 = vld [vmem:[%s6 + $0xe8] sm:$0xf]
    %v106 = vld [vmem:[%s6 + $0xec] sm:$0xf]
    %v107 = vld [vmem:[%s6 + $0xf0] sm:$0xf]
    %v108 = vld [vmem:[%s6 + $0xf4] sm:$0xf]
    %v109 = vld [vmem:[%s6 + $0xf8] sm:$0xf]
    %v110 = vld [vmem:[%s6 + $0xfc] sm:$0xf]
    %v111 = vld [vmem:[%s6 + $0x100] sm:$0xf]
    %v112 = vld [vmem:[%s6 + $0x104] sm:$0xf]
    %v113 = vld [vmem:[%s6 + $0x108] sm:$0xf]
    %v114 = vld [vmem:[%s6 + $0x10c] sm:$0xf]
    %v115 = vld [vmem:[%s6 + $0x110] sm:$0xf]
    %v116 = vld [vmem:[%s6 + $0x114] sm:$0xf]
    %v117 = vld [vmem:[%s6 + $0x118] sm:$0xf]
    %v118 = vld [vmem:[%s6 + $0x11c] sm:$0xf]
    %v119 = vld [vmem:[%s6 + $0x120] sm:$0xf]
    %v120 = vld [vmem:[%s6 + $0x124] sm:$0xf]
    %v121 = vld [vmem:[%s6 + $0x128] sm:$0xf]
    %v122 = vld [vmem:[%s6 + $0x12c] sm:$0xf]
    %v123 = vld [vmem:[%s6 + $0x130] sm:$0xf]
    %v124 = vld [vmem:[%s6 + $0x134] sm:$0xf]
    %v125 = vld [vmem:[%s6 + $0x138] sm:$0xf]
    %v126 = vld [vmem:[%s6 + $0x13c] sm:$0xf]
    %v127 = vld [vmem:[%s6 + $0x140] sm:$0xf]
    %v128 = vld [vmem:[%s6 + $0x144] sm:$0xf]
    %v129 = vld [vmem:[%s6 + $0x148] sm:$0xf]
    %v130 = vld [vmem:[%s6 + $0x14c] sm:$0xf]
    %v131 = vld [vmem:[%s6 + $0x150] sm:$0xf]
    %v132 = vld [vmem:[%s6 + $0x154] sm:$0xf]
    %v133 = vld [vmem:[%s6 + $0x158] sm:$0xf]
    %v134 = vld [vmem:[%s6 + $0x15c] sm:$0xf]
    %v135 = vld [vmem:[%s6 + $0x160] sm:$0xf]
    %v136 = vld [vmem:[%s6 + $0x164] sm:$0xf]
    %v137 = vld [vmem:[%s6 + $0x168] sm:$0xf]
    %v138 = vld [vmem:[%s6 + $0x16c] sm:$0xf]
    %v139 = vld [vmem:[%s6 + $0x170] sm:$0xf]
    %v140 = vld [vmem:[%s6 + $0x174] sm:$0xf]
    %v141 = vld [vmem:[%s6 + $0x178] sm:$0xf]
    %v142 = vld [vmem:[%s6 + $0x17c] sm:$0xf]
    %v143 = vld [vmem:[%s6 + $0x180] sm:$0xf]
    %v144 = vld [vmem:[%s6 + $0x184] sm:$0xf]
    %v145 = vld [vmem:[%s6 + $0x188] sm:$0xf]
    %v146 = vld [vmem:[%s6 + $0x18c] sm:$0xf]
    %v147 = vld [vmem:[%s6 + $0x190] sm:$0xf]
    %v148 = vld [vmem:[%s6 + $0x194] sm:$0xf]
    %v149 = vld [vmem:[%s6 + $0x198] sm:$0xf]
    %v150 = vld [vmem:[%s6 + $0x19c] sm:$0xf]
    %v151 = vld [vmem:[%s6 + $0x1a0] sm:$0xf]
    %v152 = vld [vmem:[%s6 + $0x1a4] sm:$0xf]
    %v153 = vld [vmem:[%s6 + $0x1a8] sm:$0xf]
    %v154 = vld [vmem:[%s6 + $0x1ac] sm:$0xf]
    %v155 = vld [vmem:[%s6 + $0x1b0] sm:$0xf]
    %v156 = vld [vmem:[%s6 + $0x1b4] sm:$0xf]
    %v157 = vld [vmem:[%s6 + $0x1b8] sm:$0xf]
    %v158 = vld [vmem:[%s6 + $0x1bc] sm:$0xf]
    %v159 = vld [vmem:[%s6 + $0x1c0] sm:$0xf]
    %v160 = vld [vmem:[%s6 + $0x1c4] sm:$0xf]
    %v161 = vld [vmem:[%s6 + $0x1c8] sm:$0xf]
    %v162 = vld [vmem:[%s6 + $0x1cc] sm:$0xf]
    %v163 = vld [vmem:[%s6 + $0x1d0] sm:$0xf]
    %v164 = vld [vmem:[%s6 + $0x1d4] sm:$0xf]
    %v165 = vld [vmem:[%s6 + $0x1d8] sm:$0xf]
    %v166 = vld [vmem:[%s6 + $0x1dc] sm:$0xf]
    %v167 = vld [vmem:[%s6 + $0x1e0] sm:$0xf]
    %v168 = vld [vmem:[%s6 + $0x1e4] sm:$0xf]
    %v169 = vld [vmem:[%s6 + $0x1e8] sm:$0xf]
    %v170 = vld [vmem:[%s6 + $0x1ec] sm:$0xf]
    %v171 = vld [vmem:[%s6 + $0x1f0] sm:$0xf]
    %v172 = vld [vmem:[%s6 + $0x1f4] sm:$0xf]
    %v173 = vld [vmem:[%s6 + $0x1f8] sm:$0xf]
    %v174 = vld [vmem:[%s6 + $0x1fc] sm:$0xf]
    %v175 = vld [vmem:[%s6 + $0x200] sm:$0xf]
    %v176 = vld [vmem:[%s6 + $0x204] sm:$0xf]
    %v177 = vld [vmem:[%s6 + $0x208] sm:$0xf]
    %v178 = vld [vmem:[%s6 + $0x20c] sm:$0xf]
    %v179 = vld [vmem:[%s6 + $0x210] sm:$0xf]
    %v180 = vld [vmem:[%s6 + $0x214] sm:$0xf]
    %v181 = vld [vmem:[%s6 + $0x218] sm:$0xf]
    %v182 = vld [vmem:[%s6 + $0x21c] sm:$0xf]
    %v183 = vld [vmem:[%s6 + $0x220] sm:$0xf]
    %v184 = vld [vmem:[%s6 + $0x224] sm:$0xf]
    %v185 = vld [vmem:[%s6 + $0x228] sm:$0xf]
    %v186 = vld [vmem:[%s6 + $0x22c] sm:$0xf]
    %v187 = vld [vmem:[%s6 + $0x230] sm:$0xf]
    %v188 = vld [vmem:[%s6 + $0x234] sm:$0xf]
    %v189 = vld [vmem:[%s6 + $0x238] sm:$0xf]
    %v190 = vld [vmem:[%s6 + $0x23c] sm:$0xf]
    %v191 = vld [vmem:[%s6 + $0x240] sm:$0xf]
    %v192 = vld [vmem:[%s6 + $0x244] sm:$0xf]
    %v193 = vld [vmem:[%s6 + $0x248] sm:$0xf]
    %v194 = vld [vmem:[%s6 + $0x24c] sm:$0xf]
    %v195 = vld [vmem:[%s6 + $0x250] sm:$0xf]
    %v196 = vld [vmem:[%s6 + $0x254] sm:$0xf]
    %v197 = vld [vmem:[%s6 + $0x258] sm:$0xf]
    %v198 = vld [vmem:[%s6 + $0x25c] sm:$0xf]
    %v199 = vld [vmem:[%s6 + $0x260] sm:$0xf]
    %v200 = vld [vmem:[%s6 + $0x264] sm:$0xf]
    %v201 = vld [vmem:[%s6 + $0x268] sm:$0xf]
    %v202 = vld [vmem:[%s6 + $0x26c] sm:$0xf]
    %v203 = vld [vmem:[%s6 + $0x270] sm:$0xf]
    %v204 = vld [vmem:[%s6 + $0x274] sm:$0xf]
    %v205 = vld [vmem:[%s6 + $0x278] sm:$0xf]
    %v206 = vld [vmem:[%s6 + $0x27c] sm:$0xf]
    %v207 = vld [vmem:[%s6 + $0x280] sm:$0xf]
    %v208 = vld [vmem:[%s6 + $0x284] sm:$0xf]
    %v209 = vld [vmem:[%s6 + $0x288] sm:$0xf]
    %v210 = vld [vmem:[%s6 + $0x28c] sm:$0xf]
    %v211 = vld [vmem:[%s6 + $0x290] sm:$0xf]
    %v212 = vld [vmem:[%s6 + $0x294] sm:$0xf]
    %v213 = vld [vmem:[%s6 + $0x298] sm:$0xf]
    %v214 = vld [vmem:[%s6 + $0x29c] sm:$0xf]
    %v215 = vld [vmem:[%s6 + $0x2a0] sm:$0xf]
    %v216 = vld [vmem:[%s6 + $0x2a4] sm:$0xf]
    %v217 = vld [vmem:[%s6 + $0x2a8] sm:$0xf]
    %v218 = vld [vmem:[%s6 + $0x2ac] sm:$0xf]
    %v219 = vld [vmem:[%s6 + $0x2b0] sm:$0xf]
    %v220 = vld [vmem:[%s6 + $0x2b4] sm:$0xf]
    %v221 = vld [vmem:[%s6 + $0x2b8] sm:$0xf]
    %v222 = vld [vmem:[%s6 + $0x2bc] sm:$0xf]
    %v223 = vld [vmem:[%s6 + $0x2c0] sm:$0xf]
    %v224 = vld [vmem:[%s6 + $0x2c4] sm:$0xf]
    %v225 = vld [vmem:[%s6 + $0x2c8] sm:$0xf]
    %v226 = vld [vmem:[%s6 + $0x2cc] sm:$0xf]
    %v227 = vld [vmem:[%s6 + $0x2d0] sm:$0xf]
    %v228 = vld [vmem:[%s6 + $0x2d4] sm:$0xf]
    %v229 = vld [vmem:[%s6 + $0x2d8] sm:$0xf]
    %v230 = vld [vmem:[%s6 + $0x2dc] sm:$0xf]
    %v231 = vld [vmem:[%s6 + $0x2e0] sm:$0xf]
    %v232 = vld [vmem:[%s6 + $0x2e4] sm:$0xf]
    %v233 = vld [vmem:[%s6 + $0x2e8] sm:$0xf]
    %v234 = vld [vmem:[%s6 + $0x2ec] sm:$0xf]
    %v235 = vld [vmem:[%s6 + $0x2f0] sm:$0xf]
    %v236 = vld [vmem:[%s6 + $0x2f4] sm:$0xf]
    %v237 = vld [vmem:[%s6 + $0x2f8] sm:$0xf]
    %v238 = vld [vmem:[%s6 + $0x2fc] sm:$0xf]
    %v239 = vld [vmem:[%s6 + $0x300] sm:$0xf]
    %v240 = vld [vmem:[%s6 + $0x304] sm:$0xf]
    %v241 = vld [vmem:[%s6 + $0x308] sm:$0xf]
    %v242 = vld [vmem:[%s6 + $0x30c] sm:$0xf]
    %v243 = vld [vmem:[%s6 + $0x310] sm:$0xf]
    %v244 = vld [vmem:[%s6 + $0x314] sm:$0xf]
    %v245 = vld [vmem:[%s6 + $0x318] sm:$0xf]
    %v246 = vld [vmem:[%s6 + $0x31c] sm:$0xf]
    %v247 = vld [vmem:[%s6 + $0x320] sm:$0xf]
    %v248 = vld [vmem:[%s6 + $0x324] sm:$0xf]
    %v249 = vld [vmem:[%s6 + $0x328] sm:$0xf]
    %v250 = vld [vmem:[%s6 + $0x32c] sm:$0xf]
    %v251 = vld [vmem:[%s6 + $0x330] sm:$0xf]
    %v252 = vld [vmem:[%s6 + $0x334] sm:$0xf]
    %v253 = vld [vmem:[%s6 + $0x338] sm:$0xf]
    %v254 = vld [vmem:[%s6 + $0x33c] sm:$0xf]
    %v255 = vld [vmem:[%s6 + $0x340] sm:$0xf]
    %v256 = vld [vmem:[%s6 + $0x344] sm:$0xf]
    %v257 = vld [vmem:[%s6 + $0x348] sm:$0xf]
    %v258 = vld [vmem:[%s6 + $0x34c] sm:$0xf]
    %v259 = vld [vmem:[%s6 + $0x350] sm:$0xf]
    %v260 = vld [vmem:[%s6 + $0x354] sm:$0xf]
    %v261 = vld [vmem:[%s6 + $0x358] sm:$0xf]
    %v262 = vld [vmem:[%s6 + $0x35c] sm:$0xf]
    %v263 = vld [vmem:[%s6 + $0x360] sm:$0xf]
    %v264 = vld [vmem:[%s6 + $0x364] sm:$0xf]
    %v265 = vld [vmem:[%s6 + $0x368] sm:$0xf]
    %v266 = vld [vmem:[%s6 + $0x36c] sm:$0xf]
    %v267 = vld [vmem:[%s6 + $0x370] sm:$0xf]
    %v268 = vld [vmem:[%s6 + $0x374] sm:$0xf]
    %v269 = vld [vmem:[%s6 + $0x378] sm:$0xf]
    %v270 = vld [vmem:[%s6 + $0x37c] sm:$0xf]
    %v271 = vld [vmem:[%s6 + $0x380] sm:$0xf]
    %v272 = vld [vmem:[%s6 + $0x384] sm:$0xf]
    %v273 = vld [vmem:[%s6 + $0x388] sm:$0xf]
    %v274 = vld [vmem:[%s6 + $0x38c] sm:$0xf]
    %v275 = vld [vmem:[%s6 + $0x390] sm:$0xf]
    %v276 = vld [vmem:[%s6 + $0x394] sm:$0xf]
    %v277 = vld [vmem:[%s6 + $0x398] sm:$0xf]
    %v278 = vld [vmem:[%s6 + $0x39c] sm:$0xf]
    %v279 = vld [vmem:[%s6 + $0x3a0] sm:$0xf]
    %v280 = vld [vmem:[%s6 + $0x3a4] sm:$0xf]
    %v281 = vld [vmem:[%s6 + $0x3a8] sm:$0xf]
    %v282 = vld [vmem:[%s6 + $0x3ac] sm:$0xf]
    %v283 = vld [vmem:[%s6 + $0x3b0] sm:$0xf]
    %v284 = vld [vmem:[%s6 + $0x3b4] sm:$0xf]
    %v285 = vld [vmem:[%s6 + $0x3b8] sm:$0xf]
    %v286 = vld [vmem:[%s6 + $0x3bc] sm:$0xf]
    %v287 = vld [vmem:[%s6 + $0x3c0] sm:$0xf]
    %v288 = vld [vmem:[%s6 + $0x3c4] sm:$0xf]
    %v289 = vld [vmem:[%s6 + $0x3c8] sm:$0xf]
    %v290 = vld [vmem:[%s6 + $0x3cc] sm:$0xf]
    %v291 = vld [vmem:[%s6 + $0x3d0] sm:$0xf]
    %v292 = vld [vmem:[%s6 + $0x3d4] sm:$0xf]
    %v293 = vld [vmem:[%s6 + $0x3d8] sm:$0xf]
    %v294 = vld [vmem:[%s6 + $0x3dc] sm:$0xf]
    %v295 = vld [vmem:[%s6 + $0x3e0] sm:$0xf]
    %v296 = vld [vmem:[%s6 + $0x3e4] sm:$0xf]
    %v297 = vld [vmem:[%s6 + $0x3e8] sm:$0xf]
    %v298 = vld [vmem:[%s6 + $0x3ec] sm:$0xf]
    %v299 = vld [vmem:[%s6 + $0x3f0] sm:$0xf]
    %v300 = vld [vmem:[%s6 + $0x3f4] sm:$0xf]
    %v301 = vld [vmem:[%s6 + $0x3f8] sm:$0xf]
    %v302 = vld [vmem:[%s6 + $0x3fc] sm:$0xf]
    %v303 = vmul.f32 %v34, %v34
    %v304 = vmul.f32 %v35, %v35
    %305 = vadd.xlane.f32.xlu0 %v303
    %v306 = vpop.xlane.xlu0 %305
    %307 = vadd.xlane.f32.xlu0 %v304
    %v308 = vpop.xlane.xlu0 %307
    %v309 = vrcp.pop 128.0
    %v310 = vmul.f32 %v306, %v309
    %v311 = vmul.f32 %v308, %v309
    %v312 = vadd.f32 %v310, 1e-05
    %v313 = vadd.f32 %v311, 1e-05
    %v314 = vrsqrt.pop %v312
    %v315 = vrsqrt.pop %v313
    %v316 = vmul.f32 %v34, %v314
    %v317 = vmul.f32 %v35, %v315
    %v318 = vpack.c.bf16 %v317, %v316
    %v335 = vunpack.c.l.b16 %v47
    %v336 = vunpack.c.l.b16 %v48
    %v337 = vunpack.c.l.b16 %v49
    %v338 = vunpack.c.l.b16 %v50
    %v339 = vunpack.c.l.b16 %v51
    %v340 = vunpack.c.l.b16 %v52
    %v341 = vunpack.c.l.b16 %v53
    %v342 = vunpack.c.l.b16 %v54
    %v343 = vunpack.c.l.b16 %v55
    %v344 = vunpack.c.l.b16 %v56
    %v345 = vunpack.c.l.b16 %v57
    %v346 = vunpack.c.l.b16 %v58
    %v347 = vunpack.c.l.b16 %v59
    %v348 = vunpack.c.l.b16 %v60
    %v349 = vunpack.c.l.b16 %v61
    %v350 = vunpack.c.l.b16 %v62
    %v351 = vpack.c.b16 %v336, %v335
    %v352 = vpack.c.b16 %v338, %v337
    %v353 = vpack.c.b16 %v340, %v339
    %v354 = vpack.c.b16 %v342, %v341
    %v355 = vpack.c.b16 %v344, %v343
    %v356 = vpack.c.b16 %v346, %v345
    %v357 = vpack.c.b16 %v348, %v347
    %v358 = vpack.c.b16 %v350, %v349
    %367 = vmatprep.subr.bf16.mxu0 0
    %368 = vmatpush1.bf16.msra.mxu0 %v351
    %369 = vmatprep.subr.bf16.mxu0 0
    %370 = vmatpush1.bf16.msra.mxu0 %v352
    %371 = vmatprep.subr.bf16.mxu0 0
    %372 = vmatpush1.bf16.msra.mxu0 %v353
    %373 = vmatprep.subr.bf16.mxu0 0
    %374 = vmatpush1.bf16.msra.mxu0 %v354
    %375 = vmatprep.subr.bf16.mxu0 0
    %376 = vmatpush1.bf16.msra.mxu0 %v355
    %377 = vmatprep.subr.bf16.mxu0 0
    %378 = vmatpush1.bf16.msra.mxu0 %v356
    %379 = vmatprep.subr.bf16.mxu0 0
    %380 = vmatpush1.bf16.msra.mxu0 %v357
    %381 = vmatprep.subr.bf16.mxu0 0
    %382 = vmatpush1.bf16.msra.mxu0 %v358
    %383 = vmatprep.subr.bf16.mxu0 0
    %384 = vmatpush1.bf16.msra.mxu0 0
    %385 = vmatprep.subr.bf16.mxu0 0
    %386 = vmatpush1.bf16.msra.mxu0 0
    %387 = vmatprep.subr.bf16.mxu0 0
    %388 = vmatpush1.bf16.msra.mxu0 0
    %389 = vmatprep.subr.bf16.mxu0 0
    %390 = vmatpush1.bf16.msra.mxu0 0
    %391 = vmatprep.subr.bf16.mxu0 0
    %392 = vmatpush1.bf16.msra.mxu0 0
    %393 = vmatprep.subr.bf16.mxu0 0
    %394 = vmatpush1.bf16.msra.mxu0 0
    %395 = vmatprep.subr.bf16.mxu0 0
    %396 = vmatpush1.bf16.msra.mxu0 0
    %397 = vmatprep.subr.bf16.mxu0 0
    %398 = vmatpush1.bf16.msra.mxu0 0
    %399 = vmatprep.mubr.bf16.mxu0 0
    %400 = vmatmul.mubr.bf16.gmra.mrb[0].mxu0 %v318
    %v401 = vpop.f32.mrb[0].mxu0
    %v402 = vadd.f32 0.0, %v401
    %v403 = vpop.f32.mrb[0].mxu0
    %v404 = vpop.f32.mrb[0].mxu0
    %v405 = vadd.f32 0.0, %v404
    %v406 = vpop.f32.mrb[0].mxu0
    %407 = vdwg.mxu0
    %v424 = vunpack.c.l.b16 %v63
    %v425 = vunpack.c.l.b16 %v64
    %v426 = vunpack.c.l.b16 %v65
    %v427 = vunpack.c.l.b16 %v66
    %v428 = vunpack.c.l.b16 %v67
    %v429 = vunpack.c.l.b16 %v68
    %v430 = vunpack.c.l.b16 %v69
    %v431 = vunpack.c.l.b16 %v70
    %v432 = vunpack.c.l.b16 %v71
    %v433 = vunpack.c.l.b16 %v72
    %v434 = vunpack.c.l.b16 %v73
    %v435 = vunpack.c.l.b16 %v74
    %v436 = vunpack.c.l.b16 %v75
    %v437 = vunpack.c.l.b16 %v76
    %v438 = vunpack.c.l.b16 %v77
    %v439 = vunpack.c.l.b16 %v78
    %v440 = vpack.c.b16 %v425, %v424
    %v441 = vpack.c.b16 %v427, %v426
    %v442 = vpack.c.b16 %v429, %v428
    %v443 = vpack.c.b16 %v431, %v430
    %v444 = vpack.c.b16 %v433, %v432
    %v445 = vpack.c.b16 %v435, %v434
    %v446 = vpack.c.b16 %v437, %v436
    %v447 = vpack.c.b16 %v439, %v438
    %456 = vmatprep.subr.bf16.mxu0 0
    %457 = vmatpush1.bf16.msra.mxu0 %v440
    %458 = vmatprep.subr.bf16.mxu0 0
    %459 = vmatpush1.bf16.msra.mxu0 %v441
    %460 = vmatprep.subr.bf16.mxu0 0
    %461 = vmatpush1.bf16.msra.mxu0 %v442
    %462 = vmatprep.subr.bf16.mxu0 0
    %463 = vmatpush1.bf16.msra.mxu0 %v443
    %464 = vmatprep.subr.bf16.mxu0 0
    %465 = vmatpush1.bf16.msra.mxu0 %v444
    %466 = vmatprep.subr.bf16.mxu0 0
    %467 = vmatpush1.bf16.msra.mxu0 %v445
    %468 = vmatprep.subr.bf16.mxu0 0
    %469 = vmatpush1.bf16.msra.mxu0 %v446
    %470 = vmatprep.subr.bf16.mxu0 0
    %471 = vmatpush1.bf16.msra.mxu0 %v447
    %472 = vmatprep.subr.bf16.mxu0 0
    %473 = vmatpush1.bf16.msra.mxu0 0
    %474 = vmatprep.subr.bf16.mxu0 0
    %475 = vmatpush1.bf16.msra.mxu0 0
    %476 = vmatprep.subr.bf16.mxu0 0
    %477 = vmatpush1.bf16.msra.mxu0 0
    %478 = vmatprep.subr.bf16.mxu0 0
    %479 = vmatpush1.bf16.msra.mxu0 0
    %480 = vmatprep.subr.bf16.mxu0 0
    %481 = vmatpush1.bf16.msra.mxu0 0
    %482 = vmatprep.subr.bf16.mxu0 0
    %483 = vmatpush1.bf16.msra.mxu0 0
    %484 = vmatprep.subr.bf16.mxu0 0
    %485 = vmatpush1.bf16.msra.mxu0 0
    %486 = vmatprep.subr.bf16.mxu0 0
    %487 = vmatpush1.bf16.msra.mxu0 0
    %488 = vmatprep.mubr.bf16.mxu0 0
    %489 = vmatmul.mubr.bf16.gmra.mrb[0].mxu0 %v318
    %v490 = vpop.f32.mrb[0].mxu0
    %v491 = vadd.f32 0.0, %v490
    %v492 = vpop.f32.mrb[0].mxu0
    %v493 = vpop.f32.mrb[0].mxu0
    %v494 = vadd.f32 0.0, %v493
    %v495 = vpop.f32.mrb[0].mxu0
    %496 = vdwg.mxu0
    %v513 = vunpack.c.l.b16 %v79
    %v514 = vunpack.c.l.b16 %v80
    %v515 = vunpack.c.l.b16 %v81
    %v516 = vunpack.c.l.b16 %v82
    %v517 = vunpack.c.l.b16 %v83
    %v518 = vunpack.c.l.b16 %v84
    %v519 = vunpack.c.l.b16 %v85
    %v520 = vunpack.c.l.b16 %v86
    %v521 = vunpack.c.l.b16 %v87
    %v522 = vunpack.c.l.b16 %v88
    %v523 = vunpack.c.l.b16 %v89
    %v524 = vunpack.c.l.b16 %v90
    %v525 = vunpack.c.l.b16 %v91
    %v526 = vunpack.c.l.b16 %v92
    %v527 = vunpack.c.l.b16 %v93
    %v528 = vunpack.c.l.b16 %v94
    %v529 = vpack.c.b16 %v514, %v513
    %v530 = vpack.c.b16 %v516, %v515
    %v531 = vpack.c.b16 %v518, %v517
    %v532 = vpack.c.b16 %v520, %v519
    %v533 = vpack.c.b16 %v522, %v521
    %v534 = vpack.c.b16 %v524, %v523
    %v535 = vpack.c.b16 %v526, %v525
    %v536 = vpack.c.b16 %v528, %v527
    %545 = vmatprep.subr.bf16.mxu0 0
    %546 = vmatpush1.bf16.msra.mxu0 %v529
    %547 = vmatprep.subr.bf16.mxu0 0
    %548 = vmatpush1.bf16.msra.mxu0 %v530
    %549 = vmatprep.subr.bf16.mxu0 0
    %550 = vmatpush1.bf16.msra.mxu0 %v531
    %551 = vmatprep.subr.bf16.mxu0 0
    %552 = vmatpush1.bf16.msra.mxu0 %v532
    %553 = vmatprep.subr.bf16.mxu0 0
    %554 = vmatpush1.bf16.msra.mxu0 %v533
    %555 = vmatprep.subr.bf16.mxu0 0
    %556 = vmatpush1.bf16.msra.mxu0 %v534
    %557 = vmatprep.subr.bf16.mxu0 0
    %558 = vmatpush1.bf16.msra.mxu0 %v535
    %559 = vmatprep.subr.bf16.mxu0 0
    %560 = vmatpush1.bf16.msra.mxu0 %v536
    %561 = vmatprep.subr.bf16.mxu0 0
    %562 = vmatpush1.bf16.msra.mxu0 0
    %563 = vmatprep.subr.bf16.mxu0 0
    %564 = vmatpush1.bf16.msra.mxu0 0
    %565 = vmatprep.subr.bf16.mxu0 0
    %566 = vmatpush1.bf16.msra.mxu0 0
    %567 = vmatprep.subr.bf16.mxu0 0
    %568 = vmatpush1.bf16.msra.mxu0 0
    %569 = vmatprep.subr.bf16.mxu0 0
    %570 = vmatpush1.bf16.msra.mxu0 0
    %571 = vmatprep.subr.bf16.mxu0 0
    %572 = vmatpush1.bf16.msra.mxu0 0
    %573 = vmatprep.subr.bf16.mxu0 0
    %574 = vmatpush1.bf16.msra.mxu0 0
    %575 = vmatprep.subr.bf16.mxu0 0
    %576 = vmatpush1.bf16.msra.mxu0 0
    %577 = vmatprep.mubr.bf16.mxu0 0
    %578 = vmatmul.mubr.bf16.gmra.mrb[0].mxu0 %v318
    %v579 = vpop.f32.mrb[0].mxu0
    %v580 = vadd.f32 0.0, %v579
    %v581 = vpop.f32.mrb[0].mxu0
    %v582 = vpop.f32.mrb[0].mxu0
    %v583 = vadd.f32 0.0, %v582
    %v584 = vpop.f32.mrb[0].mxu0
    %585 = vdwg.mxu0
    %v602 = vunpack.c.l.b16 %v95
    %v603 = vunpack.c.l.b16 %v96
    %v604 = vunpack.c.l.b16 %v97
    %v605 = vunpack.c.l.b16 %v98
    %v606 = vunpack.c.l.b16 %v99
    %v607 = vunpack.c.l.b16 %v100
    %v608 = vunpack.c.l.b16 %v101
    %v609 = vunpack.c.l.b16 %v102
    %v610 = vunpack.c.l.b16 %v103
    %v611 = vunpack.c.l.b16 %v104
    %v612 = vunpack.c.l.b16 %v105
    %v613 = vunpack.c.l.b16 %v106
    %v614 = vunpack.c.l.b16 %v107
    %v615 = vunpack.c.l.b16 %v108
    %v616 = vunpack.c.l.b16 %v109
    %v617 = vunpack.c.l.b16 %v110
    %v618 = vpack.c.b16 %v603, %v602
    %v619 = vpack.c.b16 %v605, %v604
    %v620 = vpack.c.b16 %v607, %v606
    %v621 = vpack.c.b16 %v609, %v608
    %v622 = vpack.c.b16 %v611, %v610
    %v623 = vpack.c.b16 %v613, %v612
    %v624 = vpack.c.b16 %v615, %v614
    %v625 = vpack.c.b16 %v617, %v616
    %634 = vmatprep.subr.bf16.mxu0 0
    %635 = vmatpush1.bf16.msra.mxu0 %v618
    %636 = vmatprep.subr.bf16.mxu0 0
    %637 = vmatpush1.bf16.msra.mxu0 %v619
    %638 = vmatprep.subr.bf16.mxu0 0
    %639 = vmatpush1.bf16.msra.mxu0 %v620
    %640 = vmatprep.subr.bf16.mxu0 0
    %641 = vmatpush1.bf16.msra.mxu0 %v621
    %642 = vmatprep.subr.bf16.mxu0 0
    %643 = vmatpush1.bf16.msra.mxu0 %v622
    %644 = vmatprep.subr.bf16.mxu0 0
    %645 = vmatpush1.bf16.msra.mxu0 %v623
    %646 = vmatprep.subr.bf16.mxu0 0
    %647 = vmatpush1.bf16.msra.mxu0 %v624
    %648 = vmatprep.subr.bf16.mxu0 0
    %649 = vmatpush1.bf16.msra.mxu0 %v625
    %650 = vmatprep.subr.bf16.mxu0 0
    %651 = vmatpush1.bf16.msra.mxu0 0
    %652 = vmatprep.subr.bf16.mxu0 0
    %653 = vmatpush1.bf16.msra.mxu0 0
    %654 = vmatprep.subr.bf16.mxu0 0
    %655 = vmatpush1.bf16.msra.mxu0 0
    %656 = vmatprep.subr.bf16.mxu0 0
    %657 = vmatpush1.bf16.msra.mxu0 0
    %658 = vmatprep.subr.bf16.mxu0 0
    %659 = vmatpush1.bf16.msra.mxu0 0
    %660 = vmatprep.subr.bf16.mxu0 0
    %661 = vmatpush1.bf16.msra.mxu0 0
    %662 = vmatprep.subr.bf16.mxu0 0
    %663 = vmatpush1.bf16.msra.mxu0 0
    %664 = vmatprep.subr.bf16.mxu0 0
    %665 = vmatpush1.bf16.msra.mxu0 0
    %666 = vmatprep.mubr.bf16.mxu0 0
    %667 = vmatmul.mubr.bf16.gmra.mrb[0].mxu0 %v318
    %v668 = vpop.f32.mrb[0].mxu0
    %v669 = vadd.f32 0.0, %v668
    %v670 = vpop.f32.mrb[0].mxu0
    %v671 = vpop.f32.mrb[0].mxu0
    %v672 = vadd.f32 0.0, %v671
    %v673 = vpop.f32.mrb[0].mxu0
    %674 = vdwg.mxu0
    %v691 = vunpack.c.l.b16 %v111
    %v692 = vunpack.c.l.b16 %v112
    %v693 = vunpack.c.l.b16 %v113
    %v694 = vunpack.c.l.b16 %v114
    %v695 = vunpack.c.l.b16 %v115
    %v696 = vunpack.c.l.b16 %v116
    %v697 = vunpack.c.l.b16 %v117
    %v698 = vunpack.c.l.b16 %v118
    %v699 = vunpack.c.l.b16 %v119
    %v700 = vunpack.c.l.b16 %v120
    %v701 = vunpack.c.l.b16 %v121
    %v702 = vunpack.c.l.b16 %v122
    %v703 = vunpack.c.l.b16 %v123
    %v704 = vunpack.c.l.b16 %v124
    %v705 = vunpack.c.l.b16 %v125
    %v706 = vunpack.c.l.b16 %v126
    %v707 = vpack.c.b16 %v692, %v691
    %v708 = vpack.c.b16 %v694, %v693
    %v709 = vpack.c.b16 %v696, %v695
    %v710 = vpack.c.b16 %v698, %v697
    %v711 = vpack.c.b16 %v700, %v699
    %v712 = vpack.c.b16 %v702, %v701
    %v713 = vpack.c.b16 %v704, %v703
    %v714 = vpack.c.b16 %v706, %v705
    %723 = vmatprep.subr.bf16.mxu0 0
    %724 = vmatpush1.bf16.msra.mxu0 %v707
    %725 = vmatprep.subr.bf16.mxu0 0
    %726 = vmatpush1.bf16.msra.mxu0 %v708
    %727 = vmatprep.subr.bf16.mxu0 0
    %728 = vmatpush1.bf16.msra.mxu0 %v709
    %729 = vmatprep.subr.bf16.mxu0 0
    %730 = vmatpush1.bf16.msra.mxu0 %v710
    %731 = vmatprep.subr.bf16.mxu0 0
    %732 = vmatpush1.bf16.msra.mxu0 %v711
    %733 = vmatprep.subr.bf16.mxu0 0
    %734 = vmatpush1.bf16.msra.mxu0 %v712
    %735 = vmatprep.subr.bf16.mxu0 0
    %736 = vmatpush1.bf16.msra.mxu0 %v713
    %737 = vmatprep.subr.bf16.mxu0 0
    %738 = vmatpush1.bf16.msra.mxu0 %v714
    %739 = vmatprep.subr.bf16.mxu0 0
    %740 = vmatpush1.bf16.msra.mxu0 0
    %741 = vmatprep.subr.bf16.mxu0 0
    %742 = vmatpush1.bf16.msra.mxu0 0
    %743 = vmatprep.subr.bf16.mxu0 0
    %744 = vmatpush1.bf16.msra.mxu0 0
    %745 = vmatprep.subr.bf16.mxu0 0
    %746 = vmatpush1.bf16.msra.mxu0 0
    %747 = vmatprep.subr.bf16.mxu0 0
    %748 = vmatpush1.bf16.msra.mxu0 0
    %749 = vmatprep.subr.bf16.mxu0 0
    %750 = vmatpush1.bf16.msra.mxu0 0
    %751 = vmatprep.subr.bf16.mxu0 0
    %752 = vmatpush1.bf16.msra.mxu0 0
    %753 = vmatprep.subr.bf16.mxu0 0
    %754 = vmatpush1.bf16.msra.mxu0 0
    %755 = vmatprep.mubr.bf16.mxu0 0
    %756 = vmatmul.mubr.bf16.gmra.mrb[0].mxu0 %v318
    %v757 = vpop.f32.mrb[0].mxu0
    %v758 = vadd.f32 0.0, %v757
    %v759 = vpop.f32.mrb[0].mxu0
    %v760 = vpop.f32.mrb[0].mxu0
    %v761 = vadd.f32 0.0, %v760
    %v762 = vpop.f32.mrb[0].mxu0
    %763 = vdwg.mxu0
    %v780 = vunpack.c.l.b16 %v127
    %v781 = vunpack.c.l.b16 %v128
    %v782 = vunpack.c.l.b16 %v129
    %v783 = vunpack.c.l.b16 %v130
    %v784 = vunpack.c.l.b16 %v131
    %v785 = vunpack.c.l.b16 %v132
    %v786 = vunpack.c.l.b16 %v133
    %v787 = vunpack.c.l.b16 %v134
    %v788 = vunpack.c.l.b16 %v135
    %v789 = vunpack.c.l.b16 %v136
    %v790 = vunpack.c.l.b16 %v137
    %v791 = vunpack.c.l.b16 %v138
    %v792 = vunpack.c.l.b16 %v139
    %v793 = vunpack.c.l.b16 %v140
    %v794 = vunpack.c.l.b16 %v141
    %v795 = vunpack.c.l.b16 %v142
    %v796 = vpack.c.b16 %v781, %v780
    %v797 = vpack.c.b16 %v783, %v782
    %v798 = vpack.c.b16 %v785, %v784
    %v799 = vpack.c.b16 %v787, %v786
    %v800 = vpack.c.b16 %v789, %v788
    %v801 = vpack.c.b16 %v791, %v790
    %v802 = vpack.c.b16 %v793, %v792
    %v803 = vpack.c.b16 %v795, %v794
    %812 = vmatprep.subr.bf16.mxu0 0
    %813 = vmatpush1.bf16.msra.mxu0 %v796
    %814 = vmatprep.subr.bf16.mxu0 0
    %815 = vmatpush1.bf16.msra.mxu0 %v797
    %816 = vmatprep.subr.bf16.mxu0 0
    %817 = vmatpush1.bf16.msra.mxu0 %v798
    %818 = vmatprep.subr.bf16.mxu0 0
    %819 = vmatpush1.bf16.msra.mxu0 %v799
    %820 = vmatprep.subr.bf16.mxu0 0
    %821 = vmatpush1.bf16.msra.mxu0 %v800
    %822 = vmatprep.subr.bf16.mxu0 0
    %823 = vmatpush1.bf16.msra.mxu0 %v801
    %824 = vmatprep.subr.bf16.mxu0 0
    %825 = vmatpush1.bf16.msra.mxu0 %v802
    %826 = vmatprep.subr.bf16.mxu0 0
    %827 = vmatpush1.bf16.msra.mxu0 %v803
    %828 = vmatprep.subr.bf16.mxu0 0
    %829 = vmatpush1.bf16.msra.mxu0 0
    %830 = vmatprep.subr.bf16.mxu0 0
    %831 = vmatpush1.bf16.msra.mxu0 0
    %832 = vmatprep.subr.bf16.mxu0 0
    %833 = vmatpush1.bf16.msra.mxu0 0
    %834 = vmatprep.subr.bf16.mxu0 0
    %835 = vmatpush1.bf16.msra.mxu0 0
    %836 = vmatprep.subr.bf16.mxu0 0
    %837 = vmatpush1.bf16.msra.mxu0 0
    %838 = vmatprep.subr.bf16.mxu0 0
    %839 = vmatpush1.bf16.msra.mxu0 0
    %840 = vmatprep.subr.bf16.mxu0 0
    %841 = vmatpush1.bf16.msra.mxu0 0
    %842 = vmatprep.subr.bf16.mxu0 0
    %843 = vmatpush1.bf16.msra.mxu0 0
    %844 = vmatprep.mubr.bf16.mxu0 0
    %845 = vmatmul.mubr.bf16.gmra.mrb[0].mxu0 %v318
    %v846 = vpop.f32.mrb[0].mxu0
    %v847 = vadd.f32 0.0, %v846
    %v848 = vpop.f32.mrb[0].mxu0
    %v849 = vpop.f32.mrb[0].mxu0
    %v850 = vadd.f32 0.0, %v849
    %v851 = vpop.f32.mrb[0].mxu0
    %852 = vdwg.mxu0
    %v869 = vunpack.c.l.b16 %v143
    %v870 = vunpack.c.l.b16 %v144
    %v871 = vunpack.c.l.b16 %v145
    %v872 = vunpack.c.l.b16 %v146
    %v873 = vunpack.c.l.b16 %v147
    %v874 = vunpack.c.l.b16 %v148
    %v875 = vunpack.c.l.b16 %v149
    %v876 = vunpack.c.l.b16 %v150
    %v877 = vunpack.c.l.b16 %v151
    %v878 = vunpack.c.l.b16 %v152
    %v879 = vunpack.c.l.b16 %v153
    %v880 = vunpack.c.l.b16 %v154
    %v881 = vunpack.c.l.b16 %v155
    %v882 = vunpack.c.l.b16 %v156
    %v883 = vunpack.c.l.b16 %v157
    %v884 = vunpack.c.l.b16 %v158
    %v885 = vpack.c.b16 %v870, %v869
    %v886 = vpack.c.b16 %v872, %v871
    %v887 = vpack.c.b16 %v874, %v873
    %v888 = vpack.c.b16 %v876, %v875
    %v889 = vpack.c.b16 %v878, %v877
    %v890 = vpack.c.b16 %v880, %v879
    %v891 = vpack.c.b16 %v882, %v881
    %v892 = vpack.c.b16 %v884, %v883
    %901 = vmatprep.subr.bf16.mxu0 0
    %902 = vmatpush1.bf16.msra.mxu0 %v885
    %903 = vmatprep.subr.bf16.mxu0 0
    %904 = vmatpush1.bf16.msra.mxu0 %v886
    %905 = vmatprep.subr.bf16.mxu0 0
    %906 = vmatpush1.bf16.msra.mxu0 %v887
    %907 = vmatprep.subr.bf16.mxu0 0
    %908 = vmatpush1.bf16.msra.mxu0 %v888
    %909 = vmatprep.subr.bf16.mxu0 0
    %910 = vmatpush1.bf16.msra.mxu0 %v889
    %911 = vmatprep.subr.bf16.mxu0 0
    %912 = vmatpush1.bf16.msra.mxu0 %v890
    %913 = vmatprep.subr.bf16.mxu0 0
    %914 = vmatpush1.bf16.msra.mxu0 %v891
    %915 = vmatprep.subr.bf16.mxu0 0
    %916 = vmatpush1.bf16.msra.mxu0 %v892
    %917 = vmatprep.subr.bf16.mxu0 0
    %918 = vmatpush1.bf16.msra.mxu0 0
    %919 = vmatprep.subr.bf16.mxu0 0
    %920 = vmatpush1.bf16.msra.mxu0 0
    %921 = vmatprep.subr.bf16.mxu0 0
    %922 = vmatpush1.bf16.msra.mxu0 0
    %923 = vmatprep.subr.bf16.mxu0 0
    %924 = vmatpush1.bf16.msra.mxu0 0
    %925 = vmatprep.subr.bf16.mxu0 0
    %926 = vmatpush1.bf16.msra.mxu0 0
    %927 = vmatprep.subr.bf16.mxu0 0
    %928 = vmatpush1.bf16.msra.mxu0 0
    %929 = vmatprep.subr.bf16.mxu0 0
    %930 = vmatpush1.bf16.msra.mxu0 0
    %931 = vmatprep.subr.bf16.mxu0 0
    %932 = vmatpush1.bf16.msra.mxu0 0
    %933 = vmatprep.mubr.bf16.mxu0 0
    %934 = vmatmul.mubr.bf16.gmra.mrb[0].mxu0 %v318
    %v935 = vpop.f32.mrb[0].mxu0
    %v936 = vadd.f32 0.0, %v935
    %v937 = vpop.f32.mrb[0].mxu0
    %v938 = vpop.f32.mrb[0].mxu0
    %v939 = vadd.f32 0.0, %v938
    %v940 = vpop.f32.mrb[0].mxu0
    %941 = vdwg.mxu0
    %v958 = vunpack.c.l.b16 %v159
    %v959 = vunpack.c.l.b16 %v160
    %v960 = vunpack.c.l.b16 %v161
    %v961 = vunpack.c.l.b16 %v162
    %v962 = vunpack.c.l.b16 %v163
    %v963 = vunpack.c.l.b16 %v164
    %v964 = vunpack.c.l.b16 %v165
    %v965 = vunpack.c.l.b16 %v166
    %v966 = vunpack.c.l.b16 %v167
    %v967 = vunpack.c.l.b16 %v168
    %v968 = vunpack.c.l.b16 %v169
    %v969 = vunpack.c.l.b16 %v170
    %v970 = vunpack.c.l.b16 %v171
    %v971 = vunpack.c.l.b16 %v172
    %v972 = vunpack.c.l.b16 %v173
    %v973 = vunpack.c.l.b16 %v174
    %v974 = vpack.c.b16 %v959, %v958
    %v975 = vpack.c.b16 %v961, %v960
    %v976 = vpack.c.b16 %v963, %v962
    %v977 = vpack.c.b16 %v965, %v964
    %v978 = vpack.c.b16 %v967, %v966
    %v979 = vpack.c.b16 %v969, %v968
    %v980 = vpack.c.b16 %v971, %v970
    %v981 = vpack.c.b16 %v973, %v972
    %990 = vmatprep.subr.bf16.mxu0 0
    %991 = vmatpush1.bf16.msra.mxu0 %v974
    %992 = vmatprep.subr.bf16.mxu0 0
    %993 = vmatpush1.bf16.msra.mxu0 %v975
    %994 = vmatprep.subr.bf16.mxu0 0
    %995 = vmatpush1.bf16.msra.mxu0 %v976
    %996 = vmatprep.subr.bf16.mxu0 0
    %997 = vmatpush1.bf16.msra.mxu0 %v977
    %998 = vmatprep.subr.bf16.mxu0 0
    %999 = vmatpush1.bf16.msra.mxu0 %v978
    %1000 = vmatprep.subr.bf16.mxu0 0
    %1001 = vmatpush1.bf16.msra.mxu0 %v979
    %1002 = vmatprep.subr.bf16.mxu0 0
    %1003 = vmatpush1.bf16.msra.mxu0 %v980
    %1004 = vmatprep.subr.bf16.mxu0 0
    %1005 = vmatpush1.bf16.msra.mxu0 %v981
    %1006 = vmatprep.subr.bf16.mxu0 0
    %1007 = vmatpush1.bf16.msra.mxu0 0
    %1008 = vmatprep.subr.bf16.mxu0 0
    %1009 = vmatpush1.bf16.msra.mxu0 0
    %1010 = vmatprep.subr.bf16.mxu0 0
    %1011 = vmatpush1.bf16.msra.mxu0 0
    %1012 = vmatprep.subr.bf16.mxu0 0
    %1013 = vmatpush1.bf16.msra.mxu0 0
    %1014 = vmatprep.subr.bf16.mxu0 0
    %1015 = vmatpush1.bf16.msra.mxu0 0
    %1016 = vmatprep.subr.bf16.mxu0 0
    %1017 = vmatpush1.bf16.msra.mxu0 0
    %1018 = vmatprep.subr.bf16.mxu0 0
    %1019 = vmatpush1.bf16.msra.mxu0 0
    %1020 = vmatprep.subr.bf16.mxu0 0
    %1021 = vmatpush1.bf16.msra.mxu0 0
    %1022 = vmatprep.mubr.bf16.mxu0 0
    %1023 = vmatmul.mubr.bf16.gmra.mrb[0].mxu0 %v318
    %v1024 = vpop.f32.mrb[0].mxu0
    %v1025 = vadd.f32 0.0, %v1024
    %v1026 = vpop.f32.mrb[0].mxu0
    %v1027 = vpop.f32.mrb[0].mxu0
    %v1028 = vadd.f32 0.0, %v1027
    %v1029 = vpop.f32.mrb[0].mxu0
    %1030 = vdwg.mxu0
    %v1047 = vunpack.c.l.b16 %v175
    %v1048 = vunpack.c.l.b16 %v176
    %v1049 = vunpack.c.l.b16 %v177
    %v1050 = vunpack.c.l.b16 %v178
    %v1051 = vunpack.c.l.b16 %v179
    %v1052 = vunpack.c.l.b16 %v180
    %v1053 = vunpack.c.l.b16 %v181
    %v1054 = vunpack.c.l.b16 %v182
    %v1055 = vunpack.c.l.b16 %v183
    %v1056 = vunpack.c.l.b16 %v184
    %v1057 = vunpack.c.l.b16 %v185
    %v1058 = vunpack.c.l.b16 %v186
    %v1059 = vunpack.c.l.b16 %v187
    %v1060 = vunpack.c.l.b16 %v188
    %v1061 = vunpack.c.l.b16 %v189
    %v1062 = vunpack.c.l.b16 %v190
    %v1063 = vpack.c.b16 %v1048, %v1047
    %v1064 = vpack.c.b16 %v1050, %v1049
    %v1065 = vpack.c.b16 %v1052, %v1051
    %v1066 = vpack.c.b16 %v1054, %v1053
    %v1067 = vpack.c.b16 %v1056, %v1055
    %v1068 = vpack.c.b16 %v1058, %v1057
    %v1069 = vpack.c.b16 %v1060, %v1059
    %v1070 = vpack.c.b16 %v1062, %v1061
    %1079 = vmatprep.subr.bf16.mxu0 0
    %1080 = vmatpush1.bf16.msra.mxu0 %v1063
    %1081 = vmatprep.subr.bf16.mxu0 0
    %1082 = vmatpush1.bf16.msra.mxu0 %v1064
    %1083 = vmatprep.subr.bf16.mxu0 0
    %1084 = vmatpush1.bf16.msra.mxu0 %v1065
    %1085 = vmatprep.subr.bf16.mxu0 0
    %1086 = vmatpush1.bf16.msra.mxu0 %v1066
    %1087 = vmatprep.subr.bf16.mxu0 0
    %1088 = vmatpush1.bf16.msra.mxu0 %v1067
    %1089 = vmatprep.subr.bf16.mxu0 0
    %1090 = vmatpush1.bf16.msra.mxu0 %v1068
    %1091 = vmatprep.subr.bf16.mxu0 0
    %1092 = vmatpush1.bf16.msra.mxu0 %v1069
    %1093 = vmatprep.subr.bf16.mxu0 0
    %1094 = vmatpush1.bf16.msra.mxu0 %v1070
    %1095 = vmatprep.subr.bf16.mxu0 0
    %1096 = vmatpush1.bf16.msra.mxu0 0
    %1097 = vmatprep.subr.bf16.mxu0 0
    %1098 = vmatpush1.bf16.msra.mxu0 0
    %1099 = vmatprep.subr.bf16.mxu0 0
    %1100 = vmatpush1.bf16.msra.mxu0 0
    %1101 = vmatprep.subr.bf16.mxu0 0
    %1102 = vmatpush1.bf16.msra.mxu0 0
    %1103 = vmatprep.subr.bf16.mxu0 0
    %1104 = vmatpush1.bf16.msra.mxu0 0
    %1105 = vmatprep.subr.bf16.mxu0 0
    %1106 = vmatpush1.bf16.msra.mxu0 0
    %1107 = vmatprep.subr.bf16.mxu0 0
    %1108 = vmatpush1.bf16.msra.mxu0 0
    %1109 = vmatprep.subr.bf16.mxu0 0
    %1110 = vmatpush1.bf16.msra.mxu0 0
    %1111 = vmatprep.mubr.bf16.mxu0 0
    %1112 = vmatmul.mubr.bf16.gmra.mrb[0].mxu0 %v318
    %v1113 = vpop.f32.mrb[0].mxu0
    %v1114 = vadd.f32 0.0, %v1113
    %v1115 = vpop.f32.mrb[0].mxu0
    %v1116 = vpop.f32.mrb[0].mxu0
    %v1117 = vadd.f32 0.0, %v1116
    %v1118 = vpop.f32.mrb[0].mxu0
    %1119 = vdwg.mxu0
    %v1136 = vunpack.c.l.b16 %v191
    %v1137 = vunpack.c.l.b16 %v192
    %v1138 = vunpack.c.l.b16 %v193
    %v1139 = vunpack.c.l.b16 %v194
    %v1140 = vunpack.c.l.b16 %v195
    %v1141 = vunpack.c.l.b16 %v196
    %v1142 = vunpack.c.l.b16 %v197
    %v1143 = vunpack.c.l.b16 %v198
    %v1144 = vunpack.c.l.b16 %v199
    %v1145 = vunpack.c.l.b16 %v200
    %v1146 = vunpack.c.l.b16 %v201
    %v1147 = vunpack.c.l.b16 %v202
    %v1148 = vunpack.c.l.b16 %v203
    %v1149 = vunpack.c.l.b16 %v204
    %v1150 = vunpack.c.l.b16 %v205
    %v1151 = vunpack.c.l.b16 %v206
    %v1152 = vpack.c.b16 %v1137, %v1136
    %v1153 = vpack.c.b16 %v1139, %v1138
    %v1154 = vpack.c.b16 %v1141, %v1140
    %v1155 = vpack.c.b16 %v1143, %v1142
    %v1156 = vpack.c.b16 %v1145, %v1144
    %v1157 = vpack.c.b16 %v1147, %v1146
    %v1158 = vpack.c.b16 %v1149, %v1148
    %v1159 = vpack.c.b16 %v1151, %v1150
    %1168 = vmatprep.subr.bf16.mxu0 0
    %1169 = vmatpush1.bf16.msra.mxu0 %v1152
    %1170 = vmatprep.subr.bf16.mxu0 0
    %1171 = vmatpush1.bf16.msra.mxu0 %v1153
    %1172 = vmatprep.subr.bf16.mxu0 0
    %1173 = vmatpush1.bf16.msra.mxu0 %v1154
    %1174 = vmatprep.subr.bf16.mxu0 0
    %1175 = vmatpush1.bf16.msra.mxu0 %v1155
    %1176 = vmatprep.subr.bf16.mxu0 0
    %1177 = vmatpush1.bf16.msra.mxu0 %v1156
    %1178 = vmatprep.subr.bf16.mxu0 0
    %1179 = vmatpush1.bf16.msra.mxu0 %v1157
    %1180 = vmatprep.subr.bf16.mxu0 0
    %1181 = vmatpush1.bf16.msra.mxu0 %v1158
    %1182 = vmatprep.subr.bf16.mxu0 0
    %1183 = vmatpush1.bf16.msra.mxu0 %v1159
    %1184 = vmatprep.subr.bf16.mxu0 0
    %1185 = vmatpush1.bf16.msra.mxu0 0
    %1186 = vmatprep.subr.bf16.mxu0 0
    %1187 = vmatpush1.bf16.msra.mxu0 0
    %1188 = vmatprep.subr.bf16.mxu0 0
    %1189 = vmatpush1.bf16.msra.mxu0 0
    %1190 = vmatprep.subr.bf16.mxu0 0
    %1191 = vmatpush1.bf16.msra.mxu0 0
    %1192 = vmatprep.subr.bf16.mxu0 0
    %1193 = vmatpush1.bf16.msra.mxu0 0
    %1194 = vmatprep.subr.bf16.mxu0 0
    %1195 = vmatpush1.bf16.msra.mxu0 0
    %1196 = vmatprep.subr.bf16.mxu0 0
    %1197 = vmatpush1.bf16.msra.mxu0 0
    %1198 = vmatprep.subr.bf16.mxu0 0
    %1199 = vmatpush1.bf16.msra.mxu0 0
    %1200 = vmatprep.mubr.bf16.mxu0 0
    %1201 = vmatmul.mubr.bf16.gmra.mrb[0].mxu0 %v318
    %v1202 = vpop.f32.mrb[0].mxu0
    %v1203 = vadd.f32 0.0, %v1202
    %v1204 = vpop.f32.mrb[0].mxu0
    %v1205 = vpop.f32.mrb[0].mxu0
    %v1206 = vadd.f32 0.0, %v1205
    %v1207 = vpop.f32.mrb[0].mxu0
    %1208 = vdwg.mxu0
    %v1225 = vunpack.c.l.b16 %v207
    %v1226 = vunpack.c.l.b16 %v208
    %v1227 = vunpack.c.l.b16 %v209
    %v1228 = vunpack.c.l.b16 %v210
    %v1229 = vunpack.c.l.b16 %v211
    %v1230 = vunpack.c.l.b16 %v212
    %v1231 = vunpack.c.l.b16 %v213
    %v1232 = vunpack.c.l.b16 %v214
    %v1233 = vunpack.c.l.b16 %v215
    %v1234 = vunpack.c.l.b16 %v216
    %v1235 = vunpack.c.l.b16 %v217
    %v1236 = vunpack.c.l.b16 %v218
    %v1237 = vunpack.c.l.b16 %v219
    %v1238 = vunpack.c.l.b16 %v220
    %v1239 = vunpack.c.l.b16 %v221
    %v1240 = vunpack.c.l.b16 %v222
    %v1241 = vpack.c.b16 %v1226, %v1225
    %v1242 = vpack.c.b16 %v1228, %v1227
    %v1243 = vpack.c.b16 %v1230, %v1229
    %v1244 = vpack.c.b16 %v1232, %v1231
    %v1245 = vpack.c.b16 %v1234, %v1233
    %v1246 = vpack.c.b16 %v1236, %v1235
    %v1247 = vpack.c.b16 %v1238, %v1237
    %v1248 = vpack.c.b16 %v1240, %v1239
    %1257 = vmatprep.subr.bf16.mxu0 0
    %1258 = vmatpush1.bf16.msra.mxu0 %v1241
    %1259 = vmatprep.subr.bf16.mxu0 0
    %1260 = vmatpush1.bf16.msra.mxu0 %v1242
    %1261 = vmatprep.subr.bf16.mxu0 0
    %1262 = vmatpush1.bf16.msra.mxu0 %v1243
    %1263 = vmatprep.subr.bf16.mxu0 0
    %1264 = vmatpush1.bf16.msra.mxu0 %v1244
    %1265 = vmatprep.subr.bf16.mxu0 0
    %1266 = vmatpush1.bf16.msra.mxu0 %v1245
    %1267 = vmatprep.subr.bf16.mxu0 0
    %1268 = vmatpush1.bf16.msra.mxu0 %v1246
    %1269 = vmatprep.subr.bf16.mxu0 0
    %1270 = vmatpush1.bf16.msra.mxu0 %v1247
    %1271 = vmatprep.subr.bf16.mxu0 0
    %1272 = vmatpush1.bf16.msra.mxu0 %v1248
    %1273 = vmatprep.subr.bf16.mxu0 0
    %1274 = vmatpush1.bf16.msra.mxu0 0
    %1275 = vmatprep.subr.bf16.mxu0 0
    %1276 = vmatpush1.bf16.msra.mxu0 0
    %1277 = vmatprep.subr.bf16.mxu0 0
    %1278 = vmatpush1.bf16.msra.mxu0 0
    %1279 = vmatprep.subr.bf16.mxu0 0
    %1280 = vmatpush1.bf16.msra.mxu0 0
    %1281 = vmatprep.subr.bf16.mxu0 0
    %1282 = vmatpush1.bf16.msra.mxu0 0
    %1283 = vmatprep.subr.bf16.mxu0 0
    %1284 = vmatpush1.bf16.msra.mxu0 0
    %1285 = vmatprep.subr.bf16.mxu0 0
    %1286 = vmatpush1.bf16.msra.mxu0 0
    %1287 = vmatprep.subr.bf16.mxu0 0
    %1288 = vmatpush1.bf16.msra.mxu0 0
    %1289 = vmatprep.mubr.bf16.mxu0 0
    %1290 = vmatmul.mubr.bf16.gmra.mrb[0].mxu0 %v318
    %v1291 = vpop.f32.mrb[0].mxu0
    %v1292 = vadd.f32 0.0, %v1291
    %v1293 = vpop.f32.mrb[0].mxu0
    %v1294 = vpop.f32.mrb[0].mxu0
    %v1295 = vadd.f32 0.0, %v1294
    %v1296 = vpop.f32.mrb[0].mxu0
    %1297 = vdwg.mxu0
    %v1314 = vunpack.c.l.b16 %v223
    %v1315 = vunpack.c.l.b16 %v224
    %v1316 = vunpack.c.l.b16 %v225
    %v1317 = vunpack.c.l.b16 %v226
    %v1318 = vunpack.c.l.b16 %v227
    %v1319 = vunpack.c.l.b16 %v228
    %v1320 = vunpack.c.l.b16 %v229
    %v1321 = vunpack.c.l.b16 %v230
    %v1322 = vunpack.c.l.b16 %v231
    %v1323 = vunpack.c.l.b16 %v232
    %v1324 = vunpack.c.l.b16 %v233
    %v1325 = vunpack.c.l.b16 %v234
    %v1326 = vunpack.c.l.b16 %v235
    %v1327 = vunpack.c.l.b16 %v236
    %v1328 = vunpack.c.l.b16 %v237
    %v1329 = vunpack.c.l.b16 %v238
    %v1330 = vpack.c.b16 %v1315, %v1314
    %v1331 = vpack.c.b16 %v1317, %v1316
    %v1332 = vpack.c.b16 %v1319, %v1318
    %v1333 = vpack.c.b16 %v1321, %v1320
    %v1334 = vpack.c.b16 %v1323, %v1322
    %v1335 = vpack.c.b16 %v1325, %v1324
    %v1336 = vpack.c.b16 %v1327, %v1326
    %v1337 = vpack.c.b16 %v1329, %v1328
    %1346 = vmatprep.subr.bf16.mxu0 0
    %1347 = vmatpush1.bf16.msra.mxu0 %v1330
    %1348 = vmatprep.subr.bf16.mxu0 0
    %1349 = vmatpush1.bf16.msra.mxu0 %v1331
    %1350 = vmatprep.subr.bf16.mxu0 0
    %1351 = vmatpush1.bf16.msra.mxu0 %v1332
    %1352 = vmatprep.subr.bf16.mxu0 0
    %1353 = vmatpush1.bf16.msra.mxu0 %v1333
    %1354 = vmatprep.subr.bf16.mxu0 0
    %1355 = vmatpush1.bf16.msra.mxu0 %v1334
    %1356 = vmatprep.subr.bf16.mxu0 0
    %1357 = vmatpush1.bf16.msra.mxu0 %v1335
    %1358 = vmatprep.subr.bf16.mxu0 0
    %1359 = vmatpush1.bf16.msra.mxu0 %v1336
    %1360 = vmatprep.subr.bf16.mxu0 0
    %1361 = vmatpush1.bf16.msra.mxu0 %v1337
    %1362 = vmatprep.subr.bf16.mxu0 0
    %1363 = vmatpush1.bf16.msra.mxu0 0
    %1364 = vmatprep.subr.bf16.mxu0 0
    %1365 = vmatpush1.bf16.msra.mxu0 0
    %1366 = vmatprep.subr.bf16.mxu0 0
    %1367 = vmatpush1.bf16.msra.mxu0 0
    %1368 = vmatprep.subr.bf16.mxu0 0
    %1369 = vmatpush1.bf16.msra.mxu0 0
    %1370 = vmatprep.subr.bf16.mxu0 0
    %1371 = vmatpush1.bf16.msra.mxu0 0
    %1372 = vmatprep.subr.bf16.mxu0 0
    %1373 = vmatpush1.bf16.msra.mxu0 0
    %1374 = vmatprep.subr.bf16.mxu0 0
    %1375 = vmatpush1.bf16.msra.mxu0 0
    %1376 = vmatprep.subr.bf16.mxu0 0
    %1377 = vmatpush1.bf16.msra.mxu0 0
    %1378 = vmatprep.mubr.bf16.mxu0 0
    %1379 = vmatmul.mubr.bf16.gmra.mrb[0].mxu0 %v318
    %v1380 = vpop.f32.mrb[0].mxu0
    %v1381 = vadd.f32 0.0, %v1380
    %v1382 = vpop.f32.mrb[0].mxu0
    %v1383 = vpop.f32.mrb[0].mxu0
    %v1384 = vadd.f32 0.0, %v1383
    %v1385 = vpop.f32.mrb[0].mxu0
    %1386 = vdwg.mxu0
    %vm1387 = vcmask 261120
    %v1389 = vsel %vm1387, %v402, 0
    %v1392 = vsel %vm1387, %v405, 0
    %v1395 = vsel %vm1387, %v491, 0
    %v1398 = vsel %vm1387, %v494, 0
    %v1401 = vsel %vm1387, %v580, 0
    %v1404 = vsel %vm1387, %v583, 0
    %v1407 = vsel %vm1387, %v669, 0
    %v1410 = vsel %vm1387, %v672, 0
    %v1413 = vsel %vm1387, %v758, 0
    %v1416 = vsel %vm1387, %v761, 0
    %v1419 = vsel %vm1387, %v847, 0
    %v1422 = vsel %vm1387, %v850, 0
    %v1425 = vsel %vm1387, %v936, 0
    %v1428 = vsel %vm1387, %v939, 0
    %v1431 = vsel %vm1387, %v1025, 0
    %v1434 = vsel %vm1387, %v1028, 0
    %1436 = vmatprep.subr.mxu0 0.0
    %1437 = vmatpush1.msra.mxu0 %v43
    %1438 = vmatprep.subr.mxu0 0.0
    %1439 = vmatpush1.msra.mxu0 %v44
    %1440 = vmatprep.subr.mxu0 0.0
    %1441 = vmatpush1.msra.mxu0 %v45
    %1442 = vmatprep.subr.mxu0 0.0
    %1443 = vmatpush1.msra.mxu0 %v46
    %1444 = vmatprep.subr.mxu0 0.0
    %1445 = vmatpush1.msra.mxu0 0.0
    %1446 = vmatprep.subr.mxu0 0.0
    %1447 = vmatpush1.msra.mxu0 0.0
    %1448 = vmatprep.subr.mxu0 0.0
    %1449 = vmatpush1.msra.mxu0 0.0
    %1450 = vmatprep.subr.mxu0 0.0
    %1451 = vmatpush1.msra.mxu0 0.0
    %1452 = vmatprep.subr.mxu0 0.0
    %1453 = vmatpush1.msra.mxu0 0.0
    %1454 = vmatprep.subr.mxu0 0.0
    %1455 = vmatpush1.msra.mxu0 0.0
    %1456 = vmatprep.subr.mxu0 0.0
    %1457 = vmatpush1.msra.mxu0 0.0
    %1458 = vmatprep.subr.mxu0 0.0
    %1459 = vmatpush1.msra.mxu0 0.0
    %1460 = vmatprep.subr.mxu0 0.0
    %1461 = vmatpush1.msra.mxu0 0.0
    %1462 = vmatprep.subr.mxu0 0.0
    %1463 = vmatpush1.msra.mxu0 0.0
    %1464 = vmatprep.subr.mxu0 0.0
    %1465 = vmatpush1.msra.mxu0 0.0
    %1466 = vmatprep.subr.mxu0 0.0
    %1467 = vmatpush1.msra.mxu0 0.0
    %1468 = vmatprep.subr.mxu0 0.0
    %1469 = vmatpush1.msra.mxu0 0.0
    %1470 = vmatprep.subr.mxu0 0.0
    %1471 = vmatpush1.msra.mxu0 0.0
    %1472 = vmatprep.subr.mxu0 0.0
    %1473 = vmatpush1.msra.mxu0 0.0
    %1474 = vmatprep.subr.mxu0 0.0
    %1475 = vmatpush1.msra.mxu0 0.0
    %1476 = vmatprep.subr.mxu0 0.0
    %1477 = vmatpush1.msra.mxu0 0.0
    %1478 = vmatprep.subr.mxu0 0.0
    %1479 = vmatpush1.msra.mxu0 0.0
    %1480 = vmatprep.subr.mxu0 0.0
    %1481 = vmatpush1.msra.mxu0 0.0
    %1482 = vmatprep.subr.mxu0 0.0
    %1483 = vmatpush1.msra.mxu0 0.0
    %1484 = vmatprep.subr.mxu0 0.0
    %1485 = vmatpush1.msra.mxu0 0.0
    %1486 = vmatprep.subr.mxu0 0.0
    %1487 = vmatpush1.msra.mxu0 0.0
    %1488 = vmatprep.subr.mxu0 0.0
    %1489 = vmatpush1.msra.mxu0 0.0
    %1490 = vmatprep.subr.mxu0 0.0
    %1491 = vmatpush1.msra.mxu0 0.0
    %1492 = vmatprep.subr.mxu0 0.0
    %1493 = vmatpush1.msra.mxu0 0.0
    %1494 = vmatprep.subr.mxu0 0.0
    %1495 = vmatpush1.msra.mxu0 0.0
    %1496 = vmatprep.subr.mxu0 0.0
    %1497 = vmatpush1.msra.mxu0 0.0
    %1498 = vmatprep.subr.mxu0 0.0
    %1499 = vmatpush1.msra.mxu0 0.0
    %1500 = vmatprep.mubr.f32.mxu0 0.0
    %1501 = vmatmul.mubr.f32.gmra.mrb[0].mxu0 %v1389
    %v1502 = vpop.f32.mrb[0].mxu0
    %v1503 = vadd.f32 0.0, %v1502
    %v1504 = vpop.f32.mrb[0].mxu0
    %1505 = vmatprep.mubr.f32.mxu0 0.0
    %1506 = vmatmul.mubr.f32.gmra.mrb[0].mxu0 %v1392
    %v1507 = vpop.f32.mrb[0].mxu0
    %v1508 = vadd.f32 0.0, %v1507
    %v1509 = vpop.f32.mrb[0].mxu0
    %1510 = vmatprep.mubr.f32.mxu0 0.0
    %1511 = vmatmul.mubr.f32.gmra.mrb[0].mxu0 %v1395
    %v1512 = vpop.f32.mrb[0].mxu0
    %v1513 = vadd.f32 0.0, %v1512
    %v1514 = vpop.f32.mrb[0].mxu0
    %1515 = vmatprep.mubr.f32.mxu0 0.0
    %1516 = vmatmul.mubr.f32.gmra.mrb[0].mxu0 %v1398
    %v1517 = vpop.f32.mrb[0].mxu0
    %v1518 = vadd.f32 0.0, %v1517
    %v1519 = vpop.f32.mrb[0].mxu0
    %1520 = vmatprep.mubr.f32.mxu0 0.0
    %1521 = vmatmul.mubr.f32.gmra.mrb[0].mxu0 %v1401
    %v1522 = vpop.f32.mrb[0].mxu0
    %v1523 = vadd.f32 0.0, %v1522
    %v1524 = vpop.f32.mrb[0].mxu0
    %1525 = vmatprep.mubr.f32.mxu0 0.0
    %1526 = vmatmul.mubr.f32.gmra.mrb[0].mxu0 %v1404
    %v1527 = vpop.f32.mrb[0].mxu0
    %v1528 = vadd.f32 0.0, %v1527
    %v1529 = vpop.f32.mrb[0].mxu0
    %1530 = vmatprep.mubr.f32.mxu0 0.0
    %1531 = vmatmul.mubr.f32.gmra.mrb[0].mxu0 %v1407
    %v1532 = vpop.f32.mrb[0].mxu0
    %v1533 = vadd.f32 0.0, %v1532
    %v1534 = vpop.f32.mrb[0].mxu0
    %1535 = vmatprep.mubr.f32.mxu0 0.0
    %1536 = vmatmul.mubr.f32.gmra.mrb[0].mxu0 %v1410
    %v1537 = vpop.f32.mrb[0].mxu0
    %v1538 = vadd.f32 0.0, %v1537
    %v1539 = vpop.f32.mrb[0].mxu0
    %1540 = vmatprep.mubr.f32.mxu0 0.0
    %1541 = vmatmul.mubr.f32.gmra.mrb[0].mxu0 %v1413
    %v1542 = vpop.f32.mrb[0].mxu0
    %v1543 = vadd.f32 0.0, %v1542
    %v1544 = vpop.f32.mrb[0].mxu0
    %1545 = vmatprep.mubr.f32.mxu0 0.0
    %1546 = vmatmul.mubr.f32.gmra.mrb[0].mxu0 %v1416
    %v1547 = vpop.f32.mrb[0].mxu0
    %v1548 = vadd.f32 0.0, %v1547
    %v1549 = vpop.f32.mrb[0].mxu0
    %1550 = vmatprep.mubr.f32.mxu0 0.0
    %1551 = vmatmul.mubr.f32.gmra.mrb[0].mxu0 %v1419
    %v1552 = vpop.f32.mrb[0].mxu0
    %v1553 = vadd.f32 0.0, %v1552
    %v1554 = vpop.f32.mrb[0].mxu0
    %1555 = vmatprep.mubr.f32.mxu0 0.0
    %1556 = vmatmul.mubr.f32.gmra.mrb[0].mxu0 %v1422
    %v1557 = vpop.f32.mrb[0].mxu0
    %v1558 = vadd.f32 0.0, %v1557
    %v1559 = vpop.f32.mrb[0].mxu0
    %1560 = vmatprep.mubr.f32.mxu0 0.0
    %1561 = vmatmul.mubr.f32.gmra.mrb[0].mxu0 %v1425
    %v1562 = vpop.f32.mrb[0].mxu0
    %v1563 = vadd.f32 0.0, %v1562
    %v1564 = vpop.f32.mrb[0].mxu0
    %1565 = vmatprep.mubr.f32.mxu0 0.0
    %1566 = vmatmul.mubr.f32.gmra.mrb[0].mxu0 %v1428
    %v1567 = vpop.f32.mrb[0].mxu0
    %v1568 = vadd.f32 0.0, %v1567
    %v1569 = vpop.f32.mrb[0].mxu0
    %1570 = vmatprep.mubr.f32.mxu0 0.0
    %1571 = vmatmul.mubr.f32.gmra.mrb[0].mxu0 %v1431
    %v1572 = vpop.f32.mrb[0].mxu0
    %v1573 = vadd.f32 0.0, %v1572
    %v1574 = vpop.f32.mrb[0].mxu0
    %1575 = vmatprep.mubr.f32.mxu0 0.0
    %1576 = vmatmul.mubr.f32.gmra.mrb[0].mxu0 %v1434
    %v1577 = vpop.f32.mrb[0].mxu0
    %v1578 = vadd.f32 0.0, %v1577
    %v1579 = vpop.f32.mrb[0].mxu0
    %1580 = vdwg.mxu0
    %v1581 = vmul.f32 %v402, %v38
    %v1582 = vmul.f32 %v405, %v39
    %v1583 = vmul.f32 %v491, %v38
    %v1584 = vmul.f32 %v494, %v39
    %v1585 = vmul.f32 %v580, %v38
    %v1586 = vmul.f32 %v583, %v39
    %v1587 = vmul.f32 %v669, %v38
    %v1588 = vmul.f32 %v672, %v39
    %v1589 = vmul.f32 %v758, %v38
    %v1590 = vmul.f32 %v761, %v39
    %v1591 = vmul.f32 %v847, %v38
    %v1592 = vmul.f32 %v850, %v39
    %v1593 = vmul.f32 %v936, %v38
    %v1594 = vmul.f32 %v939, %v39
    %v1595 = vmul.f32 %v1025, %v38
    %v1596 = vmul.f32 %v1028, %v39
    %v1597 = vmul.f32 %v1503, %v41
    %v1598 = vmul.f32 %v1508, %v42
    %v1599 = vmul.f32 %v1513, %v41
    %v1600 = vmul.f32 %v1518, %v42
    %v1601 = vmul.f32 %v1523, %v41
    %v1602 = vmul.f32 %v1528, %v42
    %v1603 = vmul.f32 %v1533, %v41
    %v1604 = vmul.f32 %v1538, %v42
    %v1605 = vmul.f32 %v1543, %v41
    %v1606 = vmul.f32 %v1548, %v42
    %v1607 = vmul.f32 %v1553, %v41
    %v1608 = vmul.f32 %v1558, %v42
    %v1609 = vmul.f32 %v1563, %v41
    %v1610 = vmul.f32 %v1568, %v42
    %v1611 = vmul.f32 %v1573, %v41
    %v1612 = vmul.f32 %v1578, %v42
    %v1613 = vadd.f32 %v1581, %v1597
    %v1614 = vadd.f32 %v1582, %v1598
    %v1615 = vadd.f32 %v1583, %v1599
    %v1616 = vadd.f32 %v1584, %v1600
    %v1617 = vadd.f32 %v1585, %v1601
    %v1618 = vadd.f32 %v1586, %v1602
    %v1619 = vadd.f32 %v1587, %v1603
    %v1620 = vadd.f32 %v1588, %v1604
    %v1621 = vadd.f32 %v1589, %v1605
    %v1622 = vadd.f32 %v1590, %v1606
    %v1623 = vadd.f32 %v1591, %v1607
    %v1624 = vadd.f32 %v1592, %v1608
    %v1625 = vadd.f32 %v1593, %v1609
    %v1626 = vadd.f32 %v1594, %v1610
    %v1627 = vadd.f32 %v1595, %v1611
    %v1628 = vadd.f32 %v1596, %v1612
    %v1630 = vsel %vm1387, %v1613, 0
    %v1633 = vsel %vm1387, %v1614, 0
    %v1636 = vsel %vm1387, %v1621, 0
    %v1639 = vsel %vm1387, %v1622, 0
    %1641 = vmatprep.subr.mxu0 0.0
    %1642 = vmatpush1.xpose.msra.mxu0 %v1636
    %1643 = vmatprep.subr.mxu0 0.0
    %1644 = vmatpush1.xpose.msra.mxu0 %v1639
    %1645 = vmatprep.subr.mxu0 0.0
    %1646 = vmatpush1.xpose.msra.mxu0 0.0
    %1647 = vmatprep.subr.mxu0 0.0
    %1648 = vmatpush1.xpose.msra.mxu0 0.0
    %1649 = vmatprep.subr.mxu0 0.0
    %1650 = vmatpush1.xpose.msra.mxu0 0.0
    %1651 = vmatprep.subr.mxu0 0.0
    %1652 = vmatpush1.xpose.msra.mxu0 0.0
    %1653 = vmatprep.subr.mxu0 0.0
    %1654 = vmatpush1.xpose.msra.mxu0 0.0
    %1655 = vmatprep.subr.mxu0 0.0
    %1656 = vmatpush1.xpose.msra.mxu0 0.0
    %1657 = vmatprep.subr.mxu0 0.0
    %1658 = vmatpush1.xpose.msra.mxu0 0.0
    %1659 = vmatprep.subr.mxu0 0.0
    %1660 = vmatpush1.xpose.msra.mxu0 0.0
    %1661 = vmatprep.subr.mxu0 0.0
    %1662 = vmatpush1.xpose.msra.mxu0 0.0
    %1663 = vmatprep.subr.mxu0 0.0
    %1664 = vmatpush1.xpose.msra.mxu0 0.0
    %1665 = vmatprep.subr.mxu0 0.0
    %1666 = vmatpush1.xpose.msra.mxu0 0.0
    %1667 = vmatprep.subr.mxu0 0.0
    %1668 = vmatpush1.xpose.msra.mxu0 0.0
    %1669 = vmatprep.subr.mxu0 0.0
    %1670 = vmatpush1.xpose.msra.mxu0 0.0
    %1671 = vmatprep.subr.mxu0 0.0
    %1672 = vmatpush1.xpose.msra.mxu0 0.0
    %1673 = vmatprep.subr.mxu0 0.0
    %1674 = vmatpush1.xpose.msra.mxu0 0.0
    %1675 = vmatprep.subr.mxu0 0.0
    %1676 = vmatpush1.xpose.msra.mxu0 0.0
    %1677 = vmatprep.subr.mxu0 0.0
    %1678 = vmatpush1.xpose.msra.mxu0 0.0
    %1679 = vmatprep.subr.mxu0 0.0
    %1680 = vmatpush1.xpose.msra.mxu0 0.0
    %1681 = vmatprep.subr.mxu0 0.0
    %1682 = vmatpush1.xpose.msra.mxu0 0.0
    %1683 = vmatprep.subr.mxu0 0.0
    %1684 = vmatpush1.xpose.msra.mxu0 0.0
    %1685 = vmatprep.subr.mxu0 0.0
    %1686 = vmatpush1.xpose.msra.mxu0 0.0
    %1687 = vmatprep.subr.mxu0 0.0
    %1688 = vmatpush1.xpose.msra.mxu0 0.0
    %1689 = vmatprep.subr.mxu0 0.0
    %1690 = vmatpush1.xpose.msra.mxu0 0.0
    %1691 = vmatprep.subr.mxu0 0.0
    %1692 = vmatpush1.xpose.msra.mxu0 0.0
    %1693 = vmatprep.subr.mxu0 0.0
    %1694 = vmatpush1.xpose.msra.mxu0 0.0
    %1695 = vmatprep.subr.mxu0 0.0
    %1696 = vmatpush1.xpose.msra.mxu0 0.0
    %1697 = vmatprep.subr.mxu0 0.0
    %1698 = vmatpush1.xpose.msra.mxu0 0.0
    %1699 = vmatprep.subr.mxu0 0.0
    %1700 = vmatpush1.xpose.msra.mxu0 0.0
    %1701 = vmatprep.subr.mxu0 0.0
    %1702 = vmatpush1.xpose.msra.mxu0 0.0
    %1703 = vmatprep.subr.mxu0 0.0
    %1704 = vmatpush1.xpose.msra.mxu0 0.0
    %1705 = vmatprep.mubr.f32.mxu0 0.0
    %1706 = vmatmul.mubr.f32.gmra.mrb[0].mxu0 %v1630
    %v1707 = vpop.f32.mrb[0].mxu0
    %v1708 = vadd.f32 %v36, %v1707
    %v1709 = vpop.f32.mrb[0].mxu0
    %1710 = vmatprep.mubr.f32.mxu0 0.0
    %1711 = vmatmul.mubr.f32.gmra.mrb[0].mxu0 %v1633
    %v1712 = vpop.f32.mrb[0].mxu0
    %v1713 = vadd.f32 %v37, %v1712
    %v1714 = vpop.f32.mrb[0].mxu0
    %1715 = vdwg.mxu0
    %v1717 = vsel %vm1387, %v1615, 0
    %v1720 = vsel %vm1387, %v1616, 0
    %v1723 = vsel %vm1387, %v1623, 0
    %v1726 = vsel %vm1387, %v1624, 0
    %1728 = vmatprep.subr.mxu0 0.0
    %1729 = vmatpush1.xpose.msra.mxu0 %v1723
    %1730 = vmatprep.subr.mxu0 0.0
    %1731 = vmatpush1.xpose.msra.mxu0 %v1726
    %1732 = vmatprep.subr.mxu0 0.0
    %1733 = vmatpush1.xpose.msra.mxu0 0.0
    %1734 = vmatprep.subr.mxu0 0.0
    %1735 = vmatpush1.xpose.msra.mxu0 0.0
    %1736 = vmatprep.subr.mxu0 0.0
    %1737 = vmatpush1.xpose.msra.mxu0 0.0
    %1738 = vmatprep.subr.mxu0 0.0
    %1739 = vmatpush1.xpose.msra.mxu0 0.0
    %1740 = vmatprep.subr.mxu0 0.0
    %1741 = vmatpush1.xpose.msra.mxu0 0.0
    %1742 = vmatprep.subr.mxu0 0.0
    %1743 = vmatpush1.xpose.msra.mxu0 0.0
    %1744 = vmatprep.subr.mxu0 0.0
    %1745 = vmatpush1.xpose.msra.mxu0 0.0
    %1746 = vmatprep.subr.mxu0 0.0
    %1747 = vmatpush1.xpose.msra.mxu0 0.0
    %1748 = vmatprep.subr.mxu0 0.0
    %1749 = vmatpush1.xpose.msra.mxu0 0.0
    %1750 = vmatprep.subr.mxu0 0.0
    %1751 = vmatpush1.xpose.msra.mxu0 0.0
    %1752 = vmatprep.subr.mxu0 0.0
    %1753 = vmatpush1.xpose.msra.mxu0 0.0
    %1754 = vmatprep.subr.mxu0 0.0
    %1755 = vmatpush1.xpose.msra.mxu0 0.0
    %1756 = vmatprep.subr.mxu0 0.0
    %1757 = vmatpush1.xpose.msra.mxu0 0.0
    %1758 = vmatprep.subr.mxu0 0.0
    %1759 = vmatpush1.xpose.msra.mxu0 0.0
    %1760 = vmatprep.subr.mxu0 0.0
    %1761 = vmatpush1.xpose.msra.mxu0 0.0
    %1762 = vmatprep.subr.mxu0 0.0
    %1763 = vmatpush1.xpose.msra.mxu0 0.0
    %1764 = vmatprep.subr.mxu0 0.0
    %1765 = vmatpush1.xpose.msra.mxu0 0.0
    %1766 = vmatprep.subr.mxu0 0.0
    %1767 = vmatpush1.xpose.msra.mxu0 0.0
    %1768 = vmatprep.subr.mxu0 0.0
    %1769 = vmatpush1.xpose.msra.mxu0 0.0
    %1770 = vmatprep.subr.mxu0 0.0
    %1771 = vmatpush1.xpose.msra.mxu0 0.0
    %1772 = vmatprep.subr.mxu0 0.0
    %1773 = vmatpush1.xpose.msra.mxu0 0.0
    %1774 = vmatprep.subr.mxu0 0.0
    %1775 = vmatpush1.xpose.msra.mxu0 0.0
    %1776 = vmatprep.subr.mxu0 0.0
    %1777 = vmatpush1.xpose.msra.mxu0 0.0
    %1778 = vmatprep.subr.mxu0 0.0
    %1779 = vmatpush1.xpose.msra.mxu0 0.0
    %1780 = vmatprep.subr.mxu0 0.0
    %1781 = vmatpush1.xpose.msra.mxu0 0.0
    %1782 = vmatprep.subr.mxu0 0.0
    %1783 = vmatpush1.xpose.msra.mxu0 0.0
    %1784 = vmatprep.subr.mxu0 0.0
    %1785 = vmatpush1.xpose.msra.mxu0 0.0
    %1786 = vmatprep.subr.mxu0 0.0
    %1787 = vmatpush1.xpose.msra.mxu0 0.0
    %1788 = vmatprep.subr.mxu0 0.0
    %1789 = vmatpush1.xpose.msra.mxu0 0.0
    %1790 = vmatprep.subr.mxu0 0.0
    %1791 = vmatpush1.xpose.msra.mxu0 0.0
    %1792 = vmatprep.mubr.f32.mxu0 0.0
    %1793 = vmatmul.mubr.f32.gmra.mrb[0].mxu0 %v1717
    %v1794 = vpop.f32.mrb[0].mxu0
    %v1795 = vadd.f32 %v36, %v1794
    %v1796 = vpop.f32.mrb[0].mxu0
    %1797 = vmatprep.mubr.f32.mxu0 0.0
    %1798 = vmatmul.mubr.f32.gmra.mrb[0].mxu0 %v1720
    %v1799 = vpop.f32.mrb[0].mxu0
    %v1800 = vadd.f32 %v37, %v1799
    %v1801 = vpop.f32.mrb[0].mxu0
    %1802 = vdwg.mxu0
    %v1804 = vsel %vm1387, %v1617, 0
    %v1807 = vsel %vm1387, %v1618, 0
    %v1810 = vsel %vm1387, %v1625, 0
    %v1813 = vsel %vm1387, %v1626, 0
    %1815 = vmatprep.subr.mxu0 0.0
    %1816 = vmatpush1.xpose.msra.mxu0 %v1810
    %1817 = vmatprep.subr.mxu0 0.0
    %1818 = vmatpush1.xpose.msra.mxu0 %v1813
    %1819 = vmatprep.subr.mxu0 0.0
    %1820 = vmatpush1.xpose.msra.mxu0 0.0
    %1821 = vmatprep.subr.mxu0 0.0
    %1822 = vmatpush1.xpose.msra.mxu0 0.0
    %1823 = vmatprep.subr.mxu0 0.0
    %1824 = vmatpush1.xpose.msra.mxu0 0.0
    %1825 = vmatprep.subr.mxu0 0.0
    %1826 = vmatpush1.xpose.msra.mxu0 0.0
    %1827 = vmatprep.subr.mxu0 0.0
    %1828 = vmatpush1.xpose.msra.mxu0 0.0
    %1829 = vmatprep.subr.mxu0 0.0
    %1830 = vmatpush1.xpose.msra.mxu0 0.0
    %1831 = vmatprep.subr.mxu0 0.0
    %1832 = vmatpush1.xpose.msra.mxu0 0.0
    %1833 = vmatprep.subr.mxu0 0.0
    %1834 = vmatpush1.xpose.msra.mxu0 0.0
    %1835 = vmatprep.subr.mxu0 0.0
    %1836 = vmatpush1.xpose.msra.mxu0 0.0
    %1837 = vmatprep.subr.mxu0 0.0
    %1838 = vmatpush1.xpose.msra.mxu0 0.0
    %1839 = vmatprep.subr.mxu0 0.0
    %1840 = vmatpush1.xpose.msra.mxu0 0.0
    %1841 = vmatprep.subr.mxu0 0.0
    %1842 = vmatpush1.xpose.msra.mxu0 0.0
    %1843 = vmatprep.subr.mxu0 0.0
    %1844 = vmatpush1.xpose.msra.mxu0 0.0
    %1845 = vmatprep.subr.mxu0 0.0
    %1846 = vmatpush1.xpose.msra.mxu0 0.0
    %1847 = vmatprep.subr.mxu0 0.0
    %1848 = vmatpush1.xpose.msra.mxu0 0.0
    %1849 = vmatprep.subr.mxu0 0.0
    %1850 = vmatpush1.xpose.msra.mxu0 0.0
    %1851 = vmatprep.subr.mxu0 0.0
    %1852 = vmatpush1.xpose.msra.mxu0 0.0
    %1853 = vmatprep.subr.mxu0 0.0
    %1854 = vmatpush1.xpose.msra.mxu0 0.0
    %1855 = vmatprep.subr.mxu0 0.0
    %1856 = vmatpush1.xpose.msra.mxu0 0.0
    %1857 = vmatprep.subr.mxu0 0.0
    %1858 = vmatpush1.xpose.msra.mxu0 0.0
    %1859 = vmatprep.subr.mxu0 0.0
    %1860 = vmatpush1.xpose.msra.mxu0 0.0
    %1861 = vmatprep.subr.mxu0 0.0
    %1862 = vmatpush1.xpose.msra.mxu0 0.0
    %1863 = vmatprep.subr.mxu0 0.0
    %1864 = vmatpush1.xpose.msra.mxu0 0.0
    %1865 = vmatprep.subr.mxu0 0.0
    %1866 = vmatpush1.xpose.msra.mxu0 0.0
    %1867 = vmatprep.subr.mxu0 0.0
    %1868 = vmatpush1.xpose.msra.mxu0 0.0
    %1869 = vmatprep.subr.mxu0 0.0
    %1870 = vmatpush1.xpose.msra.mxu0 0.0
    %1871 = vmatprep.subr.mxu0 0.0
    %1872 = vmatpush1.xpose.msra.mxu0 0.0
    %1873 = vmatprep.subr.mxu0 0.0
    %1874 = vmatpush1.xpose.msra.mxu0 0.0
    %1875 = vmatprep.subr.mxu0 0.0
    %1876 = vmatpush1.xpose.msra.mxu0 0.0
    %1877 = vmatprep.subr.mxu0 0.0
    %1878 = vmatpush1.xpose.msra.mxu0 0.0
    %1879 = vmatprep.mubr.f32.mxu0 0.0
    %1880 = vmatmul.mubr.f32.gmra.mrb[0].mxu0 %v1804
    %v1881 = vpop.f32.mrb[0].mxu0
    %v1882 = vadd.f32 %v36, %v1881
    %v1883 = vpop.f32.mrb[0].mxu0
    %1884 = vmatprep.mubr.f32.mxu0 0.0
    %1885 = vmatmul.mubr.f32.gmra.mrb[0].mxu0 %v1807
    %v1886 = vpop.f32.mrb[0].mxu0
    %v1887 = vadd.f32 %v37, %v1886
    %v1888 = vpop.f32.mrb[0].mxu0
    %1889 = vdwg.mxu0
    %v1891 = vsel %vm1387, %v1619, 0
    %v1894 = vsel %vm1387, %v1620, 0
    %v1897 = vsel %vm1387, %v1627, 0
    %v1900 = vsel %vm1387, %v1628, 0
    %1902 = vmatprep.subr.mxu0 0.0
    %1903 = vmatpush1.xpose.msra.mxu0 %v1897
    %1904 = vmatprep.subr.mxu0 0.0
    %1905 = vmatpush1.xpose.msra.mxu0 %v1900
    %1906 = vmatprep.subr.mxu0 0.0
    %1907 = vmatpush1.xpose.msra.mxu0 0.0
    %1908 = vmatprep.subr.mxu0 0.0
    %1909 = vmatpush1.xpose.msra.mxu0 0.0
    %1910 = vmatprep.subr.mxu0 0.0
    %1911 = vmatpush1.xpose.msra.mxu0 0.0
    %1912 = vmatprep.subr.mxu0 0.0
    %1913 = vmatpush1.xpose.msra.mxu0 0.0
    %1914 = vmatprep.subr.mxu0 0.0
    %1915 = vmatpush1.xpose.msra.mxu0 0.0
    %1916 = vmatprep.subr.mxu0 0.0
    %1917 = vmatpush1.xpose.msra.mxu0 0.0
    %1918 = vmatprep.subr.mxu0 0.0
    %1919 = vmatpush1.xpose.msra.mxu0 0.0
    %1920 = vmatprep.subr.mxu0 0.0
    %1921 = vmatpush1.xpose.msra.mxu0 0.0
    %1922 = vmatprep.subr.mxu0 0.0
    %1923 = vmatpush1.xpose.msra.mxu0 0.0
    %1924 = vmatprep.subr.mxu0 0.0
    %1925 = vmatpush1.xpose.msra.mxu0 0.0
    %1926 = vmatprep.subr.mxu0 0.0
    %1927 = vmatpush1.xpose.msra.mxu0 0.0
    %1928 = vmatprep.subr.mxu0 0.0
    %1929 = vmatpush1.xpose.msra.mxu0 0.0
    %1930 = vmatprep.subr.mxu0 0.0
    %1931 = vmatpush1.xpose.msra.mxu0 0.0
    %1932 = vmatprep.subr.mxu0 0.0
    %1933 = vmatpush1.xpose.msra.mxu0 0.0
    %1934 = vmatprep.subr.mxu0 0.0
    %1935 = vmatpush1.xpose.msra.mxu0 0.0
    %1936 = vmatprep.subr.mxu0 0.0
    %1937 = vmatpush1.xpose.msra.mxu0 0.0
    %1938 = vmatprep.subr.mxu0 0.0
    %1939 = vmatpush1.xpose.msra.mxu0 0.0
    %1940 = vmatprep.subr.mxu0 0.0
    %1941 = vmatpush1.xpose.msra.mxu0 0.0
    %1942 = vmatprep.subr.mxu0 0.0
    %1943 = vmatpush1.xpose.msra.mxu0 0.0
    %1944 = vmatprep.subr.mxu0 0.0
    %1945 = vmatpush1.xpose.msra.mxu0 0.0
    %1946 = vmatprep.subr.mxu0 0.0
    %1947 = vmatpush1.xpose.msra.mxu0 0.0
    %1948 = vmatprep.subr.mxu0 0.0
    %1949 = vmatpush1.xpose.msra.mxu0 0.0
    %1950 = vmatprep.subr.mxu0 0.0
    %1951 = vmatpush1.xpose.msra.mxu0 0.0
    %1952 = vmatprep.subr.mxu0 0.0
    %1953 = vmatpush1.xpose.msra.mxu0 0.0
    %1954 = vmatprep.subr.mxu0 0.0
    %1955 = vmatpush1.xpose.msra.mxu0 0.0
    %1956 = vmatprep.subr.mxu0 0.0
    %1957 = vmatpush1.xpose.msra.mxu0 0.0
    %1958 = vmatprep.subr.mxu0 0.0
    %1959 = vmatpush1.xpose.msra.mxu0 0.0
    %1960 = vmatprep.subr.mxu0 0.0
    %1961 = vmatpush1.xpose.msra.mxu0 0.0
    %1962 = vmatprep.subr.mxu0 0.0
    %1963 = vmatpush1.xpose.msra.mxu0 0.0
    %1964 = vmatprep.subr.mxu0 0.0
    %1965 = vmatpush1.xpose.msra.mxu0 0.0
    %1966 = vmatprep.mubr.f32.mxu0 0.0
    %1967 = vmatmul.mubr.f32.gmra.mrb[0].mxu0 %v1891
    %v1968 = vpop.f32.mrb[0].mxu0
    %v1969 = vadd.f32 %v36, %v1968
    %v1970 = vpop.f32.mrb[0].mxu0
    %1971 = vmatprep.mubr.f32.mxu0 0.0
    %1972 = vmatmul.mubr.f32.gmra.mrb[0].mxu0 %v1894
    %v1973 = vpop.f32.mrb[0].mxu0
    %v1974 = vadd.f32 %v37, %v1973
    %v1975 = vpop.f32.mrb[0].mxu0
    %1976 = vdwg.mxu0
    %vm1977 = vcmask 130048
    %v1978 = vsel %vm1977, %v1708, -inf
    %1979 = vmax.xlane.f32.xlu0 %v1978
    %v1980 = vpop.xlane.xlu0 %1979
    %v1981 = vsel %vm1977, %v1713, -inf
    %1982 = vmax.xlane.f32.xlu0 %v1981
    %v1983 = vpop.xlane.xlu0 %1982
    %v1984 = vsel %vm1977, %v1795, -inf
    %1985 = vmax.xlane.f32.xlu0 %v1984
    %v1986 = vpop.xlane.xlu0 %1985
    %v1987 = vsel %vm1977, %v1800, -inf
    %1988 = vmax.xlane.f32.xlu0 %v1987
    %v1989 = vpop.xlane.xlu0 %1988
    %v1990 = vsel %vm1977, %v1882, -inf
    %1991 = vmax.xlane.f32.xlu0 %v1990
    %v1992 = vpop.xlane.xlu0 %1991
    %v1993 = vsel %vm1977, %v1887, -inf
    %1994 = vmax.xlane.f32.xlu0 %v1993
    %v1995 = vpop.xlane.xlu0 %1994
    %v1996 = vsel %vm1977, %v1969, -inf
    %1997 = vmax.xlane.f32.xlu0 %v1996
    %v1998 = vpop.xlane.xlu0 %1997
    %v1999 = vsel %vm1977, %v1974, -inf
    %2000 = vmax.xlane.f32.xlu0 %v1999
    %v2001 = vpop.xlane.xlu0 %2000
    %v2002 = vsub.f32 %v1708, %v1980
    %v2003 = vsub.f32 %v1713, %v1983
    %v2004 = vsub.f32 %v1795, %v1986
    %v2005 = vsub.f32 %v1800, %v1989
    %v2006 = vsub.f32 %v1882, %v1992
    %v2007 = vsub.f32 %v1887, %v1995
    %v2008 = vsub.f32 %v1969, %v1998
    %v2009 = vsub.f32 %v1974, %v2001
    %v2010 = vmul.f32 %v2002, 1.442695
    %v2011 = vpow.pop %v2010
    %v2012 = vmul.f32 %v2003, 1.442695
    %v2013 = vpow.pop %v2012
    %v2014 = vmul.f32 %v2004, 1.442695
    %v2015 = vpow.pop %v2014
    %v2016 = vmul.f32 %v2005, 1.442695
    %v2017 = vpow.pop %v2016
    %v2018 = vmul.f32 %v2006, 1.442695
    %v2019 = vpow.pop %v2018
    %v2020 = vmul.f32 %v2007, 1.442695
    %v2021 = vpow.pop %v2020
    %v2022 = vmul.f32 %v2008, 1.442695
    %v2023 = vpow.pop %v2022
    %v2024 = vmul.f32 %v2009, 1.442695
    %v2025 = vpow.pop %v2024
    %v2026 = vsel %vm1977, %v2011, 0.0
    %2027 = vadd.xlane.f32.xlu0 %v2026
    %v2028 = vpop.xlane.xlu0 %2027
    %v2029 = vsel %vm1977, %v2013, 0.0
    %2030 = vadd.xlane.f32.xlu0 %v2029
    %v2031 = vpop.xlane.xlu0 %2030
    %v2032 = vsel %vm1977, %v2015, 0.0
    %2033 = vadd.xlane.f32.xlu0 %v2032
    %v2034 = vpop.xlane.xlu0 %2033
    %v2035 = vsel %vm1977, %v2017, 0.0
    %2036 = vadd.xlane.f32.xlu0 %v2035
    %v2037 = vpop.xlane.xlu0 %2036
    %v2038 = vsel %vm1977, %v2019, 0.0
    %2039 = vadd.xlane.f32.xlu0 %v2038
    %v2040 = vpop.xlane.xlu0 %2039
    %v2041 = vsel %vm1977, %v2021, 0.0
    %2042 = vadd.xlane.f32.xlu0 %v2041
    %v2043 = vpop.xlane.xlu0 %2042
    %v2044 = vsel %vm1977, %v2023, 0.0
    %2045 = vadd.xlane.f32.xlu0 %v2044
    %v2046 = vpop.xlane.xlu0 %2045
    %v2047 = vsel %vm1977, %v2025, 0.0
    %2048 = vadd.xlane.f32.xlu0 %v2047
    %v2049 = vpop.xlane.xlu0 %2048
    %v2050 = vrcp.pop %v2028
    %v2051 = vrcp.pop %v2031
    %v2052 = vrcp.pop %v2034
    %v2053 = vrcp.pop %v2037
    %v2054 = vrcp.pop %v2040
    %v2055 = vrcp.pop %v2043
    %v2056 = vrcp.pop %v2046
    %v2057 = vrcp.pop %v2049
    %v2058 = vmul.f32 %v2011, %v2050
    %v2059 = vmul.f32 %v2013, %v2051
    %v2060 = vmul.f32 %v2015, %v2052
    %v2061 = vmul.f32 %v2017, %v2053
    %v2062 = vmul.f32 %v2019, %v2054
    %v2063 = vmul.f32 %v2021, %v2055
    %v2064 = vmul.f32 %v2023, %v2056
    %v2065 = vmul.f32 %v2025, %v2057
    %v2067 = vsel %vm1977, %v2058, 0
    %v2070 = vsel %vm1977, %v2059, 0
    %2072 = vmatprep.subr.mxu0 0.0
    %2073 = vmatpush1.msra.mxu0 %v1114
    %2074 = vmatprep.subr.mxu0 0.0
    %2075 = vmatpush1.msra.mxu0 %v1117
    %2076 = vmatprep.subr.mxu0 0.0
    %2077 = vmatpush1.msra.mxu0 0.0
    %2078 = vmatprep.subr.mxu0 0.0
    %2079 = vmatpush1.msra.mxu0 0.0
    %2080 = vmatprep.subr.mxu0 0.0
    %2081 = vmatpush1.msra.mxu0 0.0
    %2082 = vmatprep.subr.mxu0 0.0
    %2083 = vmatpush1.msra.mxu0 0.0
    %2084 = vmatprep.subr.mxu0 0.0
    %2085 = vmatpush1.msra.mxu0 0.0
    %2086 = vmatprep.subr.mxu0 0.0
    %2087 = vmatpush1.msra.mxu0 0.0
    %2088 = vmatprep.subr.mxu0 0.0
    %2089 = vmatpush1.msra.mxu0 0.0
    %2090 = vmatprep.subr.mxu0 0.0
    %2091 = vmatpush1.msra.mxu0 0.0
    %2092 = vmatprep.subr.mxu0 0.0
    %2093 = vmatpush1.msra.mxu0 0.0
    %2094 = vmatprep.subr.mxu0 0.0
    %2095 = vmatpush1.msra.mxu0 0.0
    %2096 = vmatprep.subr.mxu0 0.0
    %2097 = vmatpush1.msra.mxu0 0.0
    %2098 = vmatprep.subr.mxu0 0.0
    %2099 = vmatpush1.msra.mxu0 0.0
    %2100 = vmatprep.subr.mxu0 0.0
    %2101 = vmatpush1.msra.mxu0 0.0
    %2102 = vmatprep.subr.mxu0 0.0
    %2103 = vmatpush1.msra.mxu0 0.0
    %2104 = vmatprep.subr.mxu0 0.0
    %2105 = vmatpush1.msra.mxu0 0.0
    %2106 = vmatprep.subr.mxu0 0.0
    %2107 = vmatpush1.msra.mxu0 0.0
    %2108 = vmatprep.subr.mxu0 0.0
    %2109 = vmatpush1.msra.mxu0 0.0
    %2110 = vmatprep.subr.mxu0 0.0
    %2111 = vmatpush1.msra.mxu0 0.0
    %2112 = vmatprep.subr.mxu0 0.0
    %2113 = vmatpush1.msra.mxu0 0.0
    %2114 = vmatprep.subr.mxu0 0.0
    %2115 = vmatpush1.msra.mxu0 0.0
    %2116 = vmatprep.subr.mxu0 0.0
    %2117 = vmatpush1.msra.mxu0 0.0
    %2118 = vmatprep.subr.mxu0 0.0
    %2119 = vmatpush1.msra.mxu0 0.0
    %2120 = vmatprep.subr.mxu0 0.0
    %2121 = vmatpush1.msra.mxu0 0.0
    %2122 = vmatprep.subr.mxu0 0.0
    %2123 = vmatpush1.msra.mxu0 0.0
    %2124 = vmatprep.subr.mxu0 0.0
    %2125 = vmatpush1.msra.mxu0 0.0
    %2126 = vmatprep.subr.mxu0 0.0
    %2127 = vmatpush1.msra.mxu0 0.0
    %2128 = vmatprep.subr.mxu0 0.0
    %2129 = vmatpush1.msra.mxu0 0.0
    %2130 = vmatprep.subr.mxu0 0.0
    %2131 = vmatpush1.msra.mxu0 0.0
    %2132 = vmatprep.subr.mxu0 0.0
    %2133 = vmatpush1.msra.mxu0 0.0
    %2134 = vmatprep.subr.mxu0 0.0
    %2135 = vmatpush1.msra.mxu0 0.0
    %2136 = vmatprep.mubr.f32.mxu0 0.0
    %2137 = vmatmul.mubr.f32.gmra.mrb[0].mxu0 %v2067
    %v2138 = vpop.f32.mrb[0].mxu0
    %v2139 = vadd.f32 0.0, %v2138
    %v2140 = vpop.f32.mrb[0].mxu0
    %2141 = vmatprep.mubr.f32.mxu0 0.0
    %2142 = vmatmul.mubr.f32.gmra.mrb[0].mxu0 %v2070
    %v2143 = vpop.f32.mrb[0].mxu0
    %v2144 = vadd.f32 0.0, %v2143
    %v2145 = vpop.f32.mrb[0].mxu0
    %2146 = vdwg.mxu0
    %v2148 = vsel %vm1977, %v2060, 0
    %v2151 = vsel %vm1977, %v2061, 0
    %2153 = vmatprep.subr.mxu0 0.0
    %2154 = vmatpush1.msra.mxu0 %v1203
    %2155 = vmatprep.subr.mxu0 0.0
    %2156 = vmatpush1.msra.mxu0 %v1206
    %2157 = vmatprep.subr.mxu0 0.0
    %2158 = vmatpush1.msra.mxu0 0.0
    %2159 = vmatprep.subr.mxu0 0.0
    %2160 = vmatpush1.msra.mxu0 0.0
    %2161 = vmatprep.subr.mxu0 0.0
    %2162 = vmatpush1.msra.mxu0 0.0
    %2163 = vmatprep.subr.mxu0 0.0
    %2164 = vmatpush1.msra.mxu0 0.0
    %2165 = vmatprep.subr.mxu0 0.0
    %2166 = vmatpush1.msra.mxu0 0.0
    %2167 = vmatprep.subr.mxu0 0.0
    %2168 = vmatpush1.msra.mxu0 0.0
    %2169 = vmatprep.subr.mxu0 0.0
    %2170 = vmatpush1.msra.mxu0 0.0
    %2171 = vmatprep.subr.mxu0 0.0
    %2172 = vmatpush1.msra.mxu0 0.0
    %2173 = vmatprep.subr.mxu0 0.0
    %2174 = vmatpush1.msra.mxu0 0.0
    %2175 = vmatprep.subr.mxu0 0.0
    %2176 = vmatpush1.msra.mxu0 0.0
    %2177 = vmatprep.subr.mxu0 0.0
    %2178 = vmatpush1.msra.mxu0 0.0
    %2179 = vmatprep.subr.mxu0 0.0
    %2180 = vmatpush1.msra.mxu0 0.0
    %2181 = vmatprep.subr.mxu0 0.0
    %2182 = vmatpush1.msra.mxu0 0.0
    %2183 = vmatprep.subr.mxu0 0.0
    %2184 = vmatpush1.msra.mxu0 0.0
    %2185 = vmatprep.subr.mxu0 0.0
    %2186 = vmatpush1.msra.mxu0 0.0
    %2187 = vmatprep.subr.mxu0 0.0
    %2188 = vmatpush1.msra.mxu0 0.0
    %2189 = vmatprep.subr.mxu0 0.0
    %2190 = vmatpush1.msra.mxu0 0.0
    %2191 = vmatprep.subr.mxu0 0.0
    %2192 = vmatpush1.msra.mxu0 0.0
    %2193 = vmatprep.subr.mxu0 0.0
    %2194 = vmatpush1.msra.mxu0 0.0
    %2195 = vmatprep.subr.mxu0 0.0
    %2196 = vmatpush1.msra.mxu0 0.0
    %2197 = vmatprep.subr.mxu0 0.0
    %2198 = vmatpush1.msra.mxu0 0.0
    %2199 = vmatprep.subr.mxu0 0.0
    %2200 = vmatpush1.msra.mxu0 0.0
    %2201 = vmatprep.subr.mxu0 0.0
    %2202 = vmatpush1.msra.mxu0 0.0
    %2203 = vmatprep.subr.mxu0 0.0
    %2204 = vmatpush1.msra.mxu0 0.0
    %2205 = vmatprep.subr.mxu0 0.0
    %2206 = vmatpush1.msra.mxu0 0.0
    %2207 = vmatprep.subr.mxu0 0.0
    %2208 = vmatpush1.msra.mxu0 0.0
    %2209 = vmatprep.subr.mxu0 0.0
    %2210 = vmatpush1.msra.mxu0 0.0
    %2211 = vmatprep.subr.mxu0 0.0
    %2212 = vmatpush1.msra.mxu0 0.0
    %2213 = vmatprep.subr.mxu0 0.0
    %2214 = vmatpush1.msra.mxu0 0.0
    %2215 = vmatprep.subr.mxu0 0.0
    %2216 = vmatpush1.msra.mxu0 0.0
    %2217 = vmatprep.mubr.f32.mxu0 0.0
    %2218 = vmatmul.mubr.f32.gmra.mrb[0].mxu0 %v2148
    %v2219 = vpop.f32.mrb[0].mxu0
    %v2220 = vadd.f32 0.0, %v2219
    %v2221 = vpop.f32.mrb[0].mxu0
    %2222 = vmatprep.mubr.f32.mxu0 0.0
    %2223 = vmatmul.mubr.f32.gmra.mrb[0].mxu0 %v2151
    %v2224 = vpop.f32.mrb[0].mxu0
    %v2225 = vadd.f32 0.0, %v2224
    %v2226 = vpop.f32.mrb[0].mxu0
    %2227 = vdwg.mxu0
    %v2229 = vsel %vm1977, %v2062, 0
    %v2232 = vsel %vm1977, %v2063, 0
    %2234 = vmatprep.subr.mxu0 0.0
    %2235 = vmatpush1.msra.mxu0 %v1292
    %2236 = vmatprep.subr.mxu0 0.0
    %2237 = vmatpush1.msra.mxu0 %v1295
    %2238 = vmatprep.subr.mxu0 0.0
    %2239 = vmatpush1.msra.mxu0 0.0
    %2240 = vmatprep.subr.mxu0 0.0
    %2241 = vmatpush1.msra.mxu0 0.0
    %2242 = vmatprep.subr.mxu0 0.0
    %2243 = vmatpush1.msra.mxu0 0.0
    %2244 = vmatprep.subr.mxu0 0.0
    %2245 = vmatpush1.msra.mxu0 0.0
    %2246 = vmatprep.subr.mxu0 0.0
    %2247 = vmatpush1.msra.mxu0 0.0
    %2248 = vmatprep.subr.mxu0 0.0
    %2249 = vmatpush1.msra.mxu0 0.0
    %2250 = vmatprep.subr.mxu0 0.0
    %2251 = vmatpush1.msra.mxu0 0.0
    %2252 = vmatprep.subr.mxu0 0.0
    %2253 = vmatpush1.msra.mxu0 0.0
    %2254 = vmatprep.subr.mxu0 0.0
    %2255 = vmatpush1.msra.mxu0 0.0
    %2256 = vmatprep.subr.mxu0 0.0
    %2257 = vmatpush1.msra.mxu0 0.0
    %2258 = vmatprep.subr.mxu0 0.0
    %2259 = vmatpush1.msra.mxu0 0.0
    %2260 = vmatprep.subr.mxu0 0.0
    %2261 = vmatpush1.msra.mxu0 0.0
    %2262 = vmatprep.subr.mxu0 0.0
    %2263 = vmatpush1.msra.mxu0 0.0
    %2264 = vmatprep.subr.mxu0 0.0
    %2265 = vmatpush1.msra.mxu0 0.0
    %2266 = vmatprep.subr.mxu0 0.0
    %2267 = vmatpush1.msra.mxu0 0.0
    %2268 = vmatprep.subr.mxu0 0.0
    %2269 = vmatpush1.msra.mxu0 0.0
    %2270 = vmatprep.subr.mxu0 0.0
    %2271 = vmatpush1.msra.mxu0 0.0
    %2272 = vmatprep.subr.mxu0 0.0
    %2273 = vmatpush1.msra.mxu0 0.0
    %2274 = vmatprep.subr.mxu0 0.0
    %2275 = vmatpush1.msra.mxu0 0.0
    %2276 = vmatprep.subr.mxu0 0.0
    %2277 = vmatpush1.msra.mxu0 0.0
    %2278 = vmatprep.subr.mxu0 0.0
    %2279 = vmatpush1.msra.mxu0 0.0
    %2280 = vmatprep.subr.mxu0 0.0
    %2281 = vmatpush1.msra.mxu0 0.0
    %2282 = vmatprep.subr.mxu0 0.0
    %2283 = vmatpush1.msra.mxu0 0.0
    %2284 = vmatprep.subr.mxu0 0.0
    %2285 = vmatpush1.msra.mxu0 0.0
    %2286 = vmatprep.subr.mxu0 0.0
    %2287 = vmatpush1.msra.mxu0 0.0
    %2288 = vmatprep.subr.mxu0 0.0
    %2289 = vmatpush1.msra.mxu0 0.0
    %2290 = vmatprep.subr.mxu0 0.0
    %2291 = vmatpush1.msra.mxu0 0.0
    %2292 = vmatprep.subr.mxu0 0.0
    %2293 = vmatpush1.msra.mxu0 0.0
    %2294 = vmatprep.subr.mxu0 0.0
    %2295 = vmatpush1.msra.mxu0 0.0
    %2296 = vmatprep.subr.mxu0 0.0
    %2297 = vmatpush1.msra.mxu0 0.0
    %2298 = vmatprep.mubr.f32.mxu0 0.0
    %2299 = vmatmul.mubr.f32.gmra.mrb[0].mxu0 %v2229
    %v2300 = vpop.f32.mrb[0].mxu0
    %v2301 = vadd.f32 0.0, %v2300
    %v2302 = vpop.f32.mrb[0].mxu0
    %2303 = vmatprep.mubr.f32.mxu0 0.0
    %2304 = vmatmul.mubr.f32.gmra.mrb[0].mxu0 %v2232
    %v2305 = vpop.f32.mrb[0].mxu0
    %v2306 = vadd.f32 0.0, %v2305
    %v2307 = vpop.f32.mrb[0].mxu0
    %2308 = vdwg.mxu0
    %v2310 = vsel %vm1977, %v2064, 0
    %v2313 = vsel %vm1977, %v2065, 0
    %2315 = vmatprep.subr.mxu0 0.0
    %2316 = vmatpush1.msra.mxu0 %v1381
    %2317 = vmatprep.subr.mxu0 0.0
    %2318 = vmatpush1.msra.mxu0 %v1384
    %2319 = vmatprep.subr.mxu0 0.0
    %2320 = vmatpush1.msra.mxu0 0.0
    %2321 = vmatprep.subr.mxu0 0.0
    %2322 = vmatpush1.msra.mxu0 0.0
    %2323 = vmatprep.subr.mxu0 0.0
    %2324 = vmatpush1.msra.mxu0 0.0
    %2325 = vmatprep.subr.mxu0 0.0
    %2326 = vmatpush1.msra.mxu0 0.0
    %2327 = vmatprep.subr.mxu0 0.0
    %2328 = vmatpush1.msra.mxu0 0.0
    %2329 = vmatprep.subr.mxu0 0.0
    %2330 = vmatpush1.msra.mxu0 0.0
    %2331 = vmatprep.subr.mxu0 0.0
    %2332 = vmatpush1.msra.mxu0 0.0
    %2333 = vmatprep.subr.mxu0 0.0
    %2334 = vmatpush1.msra.mxu0 0.0
    %2335 = vmatprep.subr.mxu0 0.0
    %2336 = vmatpush1.msra.mxu0 0.0
    %2337 = vmatprep.subr.mxu0 0.0
    %2338 = vmatpush1.msra.mxu0 0.0
    %2339 = vmatprep.subr.mxu0 0.0
    %2340 = vmatpush1.msra.mxu0 0.0
    %2341 = vmatprep.subr.mxu0 0.0
    %2342 = vmatpush1.msra.mxu0 0.0
    %2343 = vmatprep.subr.mxu0 0.0
    %2344 = vmatpush1.msra.mxu0 0.0
    %2345 = vmatprep.subr.mxu0 0.0
    %2346 = vmatpush1.msra.mxu0 0.0
    %2347 = vmatprep.subr.mxu0 0.0
    %2348 = vmatpush1.msra.mxu0 0.0
    %2349 = vmatprep.subr.mxu0 0.0
    %2350 = vmatpush1.msra.mxu0 0.0
    %2351 = vmatprep.subr.mxu0 0.0
    %2352 = vmatpush1.msra.mxu0 0.0
    %2353 = vmatprep.subr.mxu0 0.0
    %2354 = vmatpush1.msra.mxu0 0.0
    %2355 = vmatprep.subr.mxu0 0.0
    %2356 = vmatpush1.msra.mxu0 0.0
    %2357 = vmatprep.subr.mxu0 0.0
    %2358 = vmatpush1.msra.mxu0 0.0
    %2359 = vmatprep.subr.mxu0 0.0
    %2360 = vmatpush1.msra.mxu0 0.0
    %2361 = vmatprep.subr.mxu0 0.0
    %2362 = vmatpush1.msra.mxu0 0.0
    %2363 = vmatprep.subr.mxu0 0.0
    %2364 = vmatpush1.msra.mxu0 0.0
    %2365 = vmatprep.subr.mxu0 0.0
    %2366 = vmatpush1.msra.mxu0 0.0
    %2367 = vmatprep.subr.mxu0 0.0
    %2368 = vmatpush1.msra.mxu0 0.0
    %2369 = vmatprep.subr.mxu0 0.0
    %2370 = vmatpush1.msra.mxu0 0.0
    %2371 = vmatprep.subr.mxu0 0.0
    %2372 = vmatpush1.msra.mxu0 0.0
    %2373 = vmatprep.subr.mxu0 0.0
    %2374 = vmatpush1.msra.mxu0 0.0
    %2375 = vmatprep.subr.mxu0 0.0
    %2376 = vmatpush1.msra.mxu0 0.0
    %2377 = vmatprep.subr.mxu0 0.0
    %2378 = vmatpush1.msra.mxu0 0.0
    %2379 = vmatprep.mubr.f32.mxu0 0.0
    %2380 = vmatmul.mubr.f32.gmra.mrb[0].mxu0 %v2310
    %v2381 = vpop.f32.mrb[0].mxu0
    %v2382 = vadd.f32 0.0, %v2381
    %v2383 = vpop.f32.mrb[0].mxu0
    %2384 = vmatprep.mubr.f32.mxu0 0.0
    %2385 = vmatmul.mubr.f32.gmra.mrb[0].mxu0 %v2313
    %v2386 = vpop.f32.mrb[0].mxu0
    %v2387 = vadd.f32 0.0, %v2386
    %v2388 = vpop.f32.mrb[0].mxu0
    %2389 = vdwg.mxu0
    %v2390 = vpack.c.bf16 %v2144, %v2139
    %v2391 = vpack.c.bf16 %v2225, %v2220
    %v2392 = vpack.c.bf16 %v2306, %v2301
    %v2393 = vpack.c.bf16 %v2387, %v2382
    %v2410 = vunpack.c.l.b16 %v239
    %v2411 = vunpack.c.l.b16 %v240
    %v2412 = vunpack.c.l.b16 %v241
    %v2413 = vunpack.c.l.b16 %v242
    %v2414 = vunpack.c.l.b16 %v243
    %v2415 = vunpack.c.l.b16 %v244
    %v2416 = vunpack.c.l.b16 %v245
    %v2417 = vunpack.c.l.b16 %v246
    %v2418 = vunpack.c.l.b16 %v247
    %v2419 = vunpack.c.l.b16 %v248
    %v2420 = vunpack.c.l.b16 %v249
    %v2421 = vunpack.c.l.b16 %v250
    %v2422 = vunpack.c.l.b16 %v251
    %v2423 = vunpack.c.l.b16 %v252
    %v2424 = vunpack.c.l.b16 %v253
    %v2425 = vunpack.c.l.b16 %v254
    %v2426 = vpack.c.b16 %v2411, %v2410
    %v2427 = vpack.c.b16 %v2413, %v2412
    %v2428 = vpack.c.b16 %v2415, %v2414
    %v2429 = vpack.c.b16 %v2417, %v2416
    %v2430 = vpack.c.b16 %v2419, %v2418
    %v2431 = vpack.c.b16 %v2421, %v2420
    %v2432 = vpack.c.b16 %v2423, %v2422
    %v2433 = vpack.c.b16 %v2425, %v2424
    %v2435 = vsel %vm1387, %v2390, 0
    %v2438 = vsel %vm1387, %v2426, 0
    %v2441 = vsel %vm1387, %v2427, 0
    %v2444 = vsel %vm1387, %v2428, 0
    %v2447 = vsel %vm1387, %v2429, 0
    %v2450 = vsel %vm1387, %v2430, 0
    %v2453 = vsel %vm1387, %v2431, 0
    %v2456 = vsel %vm1387, %v2432, 0
    %v2459 = vsel %vm1387, %v2433, 0
    %2461 = vmatprep.subr.bf16.mxu0 0
    %2462 = vmatpush1.bf16.xpose.msra.mxu0 %v2438
    %2463 = vmatprep.subr.bf16.mxu0 0
    %2464 = vmatpush1.bf16.xpose.msra.mxu0 %v2441
    %2465 = vmatprep.subr.bf16.mxu0 0
    %2466 = vmatpush1.bf16.xpose.msra.mxu0 %v2444
    %2467 = vmatprep.subr.bf16.mxu0 0
    %2468 = vmatpush1.bf16.xpose.msra.mxu0 %v2447
    %2469 = vmatprep.subr.bf16.mxu0 0
    %2470 = vmatpush1.bf16.xpose.msra.mxu0 %v2450
    %2471 = vmatprep.subr.bf16.mxu0 0
    %2472 = vmatpush1.bf16.xpose.msra.mxu0 %v2453
    %2473 = vmatprep.subr.bf16.mxu0 0
    %2474 = vmatpush1.bf16.xpose.msra.mxu0 %v2456
    %2475 = vmatprep.subr.bf16.mxu0 0
    %2476 = vmatpush1.bf16.xpose.msra.mxu0 %v2459
    %2477 = vmatprep.subr.bf16.mxu0 0
    %2478 = vmatpush1.bf16.xpose.msra.mxu0 0
    %2479 = vmatprep.subr.bf16.mxu0 0
    %2480 = vmatpush1.bf16.xpose.msra.mxu0 0
    %2481 = vmatprep.subr.bf16.mxu0 0
    %2482 = vmatpush1.bf16.xpose.msra.mxu0 0
    %2483 = vmatprep.subr.bf16.mxu0 0
    %2484 = vmatpush1.bf16.xpose.msra.mxu0 0
    %2485 = vmatprep.subr.bf16.mxu0 0
    %2486 = vmatpush1.bf16.xpose.msra.mxu0 0
    %2487 = vmatprep.subr.bf16.mxu0 0
    %2488 = vmatpush1.bf16.xpose.msra.mxu0 0
    %2489 = vmatprep.subr.bf16.mxu0 0
    %2490 = vmatpush1.bf16.xpose.msra.mxu0 0
    %2491 = vmatprep.subr.bf16.mxu0 0
    %2492 = vmatpush1.bf16.xpose.msra.mxu0 0
    %2493 = vmatprep.mubr.bf16.mxu0 0
    %2494 = vmatmul.mubr.bf16.gmra.mrb[0].mxu0 %v2435
    %v2495 = vpop.f32.mrb[0].mxu0
    %v2496 = vadd.f32 0.0, %v2495
    %v2497 = vpop.f32.mrb[0].mxu0
    %v2498 = vpop.f32.mrb[0].mxu0
    %v2499 = vadd.f32 0.0, %v2498
    %v2500 = vpop.f32.mrb[0].mxu0
    %2501 = vdwg.mxu0
    %v2518 = vunpack.c.l.b16 %v255
    %v2519 = vunpack.c.l.b16 %v256
    %v2520 = vunpack.c.l.b16 %v257
    %v2521 = vunpack.c.l.b16 %v258
    %v2522 = vunpack.c.l.b16 %v259
    %v2523 = vunpack.c.l.b16 %v260
    %v2524 = vunpack.c.l.b16 %v261
    %v2525 = vunpack.c.l.b16 %v262
    %v2526 = vunpack.c.l.b16 %v263
    %v2527 = vunpack.c.l.b16 %v264
    %v2528 = vunpack.c.l.b16 %v265
    %v2529 = vunpack.c.l.b16 %v266
    %v2530 = vunpack.c.l.b16 %v267
    %v2531 = vunpack.c.l.b16 %v268
    %v2532 = vunpack.c.l.b16 %v269
    %v2533 = vunpack.c.l.b16 %v270
    %v2534 = vpack.c.b16 %v2519, %v2518
    %v2535 = vpack.c.b16 %v2521, %v2520
    %v2536 = vpack.c.b16 %v2523, %v2522
    %v2537 = vpack.c.b16 %v2525, %v2524
    %v2538 = vpack.c.b16 %v2527, %v2526
    %v2539 = vpack.c.b16 %v2529, %v2528
    %v2540 = vpack.c.b16 %v2531, %v2530
    %v2541 = vpack.c.b16 %v2533, %v2532
    %v2543 = vsel %vm1387, %v2391, 0
    %v2546 = vsel %vm1387, %v2534, 0
    %v2549 = vsel %vm1387, %v2535, 0
    %v2552 = vsel %vm1387, %v2536, 0
    %v2555 = vsel %vm1387, %v2537, 0
    %v2558 = vsel %vm1387, %v2538, 0
    %v2561 = vsel %vm1387, %v2539, 0
    %v2564 = vsel %vm1387, %v2540, 0
    %v2567 = vsel %vm1387, %v2541, 0
    %2569 = vmatprep.subr.bf16.mxu0 0
    %2570 = vmatpush1.bf16.xpose.msra.mxu0 %v2546
    %2571 = vmatprep.subr.bf16.mxu0 0
    %2572 = vmatpush1.bf16.xpose.msra.mxu0 %v2549
    %2573 = vmatprep.subr.bf16.mxu0 0
    %2574 = vmatpush1.bf16.xpose.msra.mxu0 %v2552
    %2575 = vmatprep.subr.bf16.mxu0 0
    %2576 = vmatpush1.bf16.xpose.msra.mxu0 %v2555
    %2577 = vmatprep.subr.bf16.mxu0 0
    %2578 = vmatpush1.bf16.xpose.msra.mxu0 %v2558
    %2579 = vmatprep.subr.bf16.mxu0 0
    %2580 = vmatpush1.bf16.xpose.msra.mxu0 %v2561
    %2581 = vmatprep.subr.bf16.mxu0 0
    %2582 = vmatpush1.bf16.xpose.msra.mxu0 %v2564
    %2583 = vmatprep.subr.bf16.mxu0 0
    %2584 = vmatpush1.bf16.xpose.msra.mxu0 %v2567
    %2585 = vmatprep.subr.bf16.mxu0 0
    %2586 = vmatpush1.bf16.xpose.msra.mxu0 0
    %2587 = vmatprep.subr.bf16.mxu0 0
    %2588 = vmatpush1.bf16.xpose.msra.mxu0 0
    %2589 = vmatprep.subr.bf16.mxu0 0
    %2590 = vmatpush1.bf16.xpose.msra.mxu0 0
    %2591 = vmatprep.subr.bf16.mxu0 0
    %2592 = vmatpush1.bf16.xpose.msra.mxu0 0
    %2593 = vmatprep.subr.bf16.mxu0 0
    %2594 = vmatpush1.bf16.xpose.msra.mxu0 0
    %2595 = vmatprep.subr.bf16.mxu0 0
    %2596 = vmatpush1.bf16.xpose.msra.mxu0 0
    %2597 = vmatprep.subr.bf16.mxu0 0
    %2598 = vmatpush1.bf16.xpose.msra.mxu0 0
    %2599 = vmatprep.subr.bf16.mxu0 0
    %2600 = vmatpush1.bf16.xpose.msra.mxu0 0
    %2601 = vmatprep.mubr.bf16.mxu0 0
    %2602 = vmatmul.mubr.bf16.gmra.mrb[0].mxu0 %v2543
    %v2603 = vpop.f32.mrb[0].mxu0
    %v2604 = vadd.f32 0.0, %v2603
    %v2605 = vpop.f32.mrb[0].mxu0
    %v2606 = vpop.f32.mrb[0].mxu0
    %v2607 = vadd.f32 0.0, %v2606
    %v2608 = vpop.f32.mrb[0].mxu0
    %2609 = vdwg.mxu0
    %v2626 = vunpack.c.l.b16 %v271
    %v2627 = vunpack.c.l.b16 %v272
    %v2628 = vunpack.c.l.b16 %v273
    %v2629 = vunpack.c.l.b16 %v274
    %v2630 = vunpack.c.l.b16 %v275
    %v2631 = vunpack.c.l.b16 %v276
    %v2632 = vunpack.c.l.b16 %v277
    %v2633 = vunpack.c.l.b16 %v278
    %v2634 = vunpack.c.l.b16 %v279
    %v2635 = vunpack.c.l.b16 %v280
    %v2636 = vunpack.c.l.b16 %v281
    %v2637 = vunpack.c.l.b16 %v282
    %v2638 = vunpack.c.l.b16 %v283
    %v2639 = vunpack.c.l.b16 %v284
    %v2640 = vunpack.c.l.b16 %v285
    %v2641 = vunpack.c.l.b16 %v286
    %v2642 = vpack.c.b16 %v2627, %v2626
    %v2643 = vpack.c.b16 %v2629, %v2628
    %v2644 = vpack.c.b16 %v2631, %v2630
    %v2645 = vpack.c.b16 %v2633, %v2632
    %v2646 = vpack.c.b16 %v2635, %v2634
    %v2647 = vpack.c.b16 %v2637, %v2636
    %v2648 = vpack.c.b16 %v2639, %v2638
    %v2649 = vpack.c.b16 %v2641, %v2640
    %v2651 = vsel %vm1387, %v2392, 0
    %v2654 = vsel %vm1387, %v2642, 0
    %v2657 = vsel %vm1387, %v2643, 0
    %v2660 = vsel %vm1387, %v2644, 0
    %v2663 = vsel %vm1387, %v2645, 0
    %v2666 = vsel %vm1387, %v2646, 0
    %v2669 = vsel %vm1387, %v2647, 0
    %v2672 = vsel %vm1387, %v2648, 0
    %v2675 = vsel %vm1387, %v2649, 0
    %2677 = vmatprep.subr.bf16.mxu0 0
    %2678 = vmatpush1.bf16.xpose.msra.mxu0 %v2654
    %2679 = vmatprep.subr.bf16.mxu0 0
    %2680 = vmatpush1.bf16.xpose.msra.mxu0 %v2657
    %2681 = vmatprep.subr.bf16.mxu0 0
    %2682 = vmatpush1.bf16.xpose.msra.mxu0 %v2660
    %2683 = vmatprep.subr.bf16.mxu0 0
    %2684 = vmatpush1.bf16.xpose.msra.mxu0 %v2663
    %2685 = vmatprep.subr.bf16.mxu0 0
    %2686 = vmatpush1.bf16.xpose.msra.mxu0 %v2666
    %2687 = vmatprep.subr.bf16.mxu0 0
    %2688 = vmatpush1.bf16.xpose.msra.mxu0 %v2669
    %2689 = vmatprep.subr.bf16.mxu0 0
    %2690 = vmatpush1.bf16.xpose.msra.mxu0 %v2672
    %2691 = vmatprep.subr.bf16.mxu0 0
    %2692 = vmatpush1.bf16.xpose.msra.mxu0 %v2675
    %2693 = vmatprep.subr.bf16.mxu0 0
    %2694 = vmatpush1.bf16.xpose.msra.mxu0 0
    %2695 = vmatprep.subr.bf16.mxu0 0
    %2696 = vmatpush1.bf16.xpose.msra.mxu0 0
    %2697 = vmatprep.subr.bf16.mxu0 0
    %2698 = vmatpush1.bf16.xpose.msra.mxu0 0
    %2699 = vmatprep.subr.bf16.mxu0 0
    %2700 = vmatpush1.bf16.xpose.msra.mxu0 0
    %2701 = vmatprep.subr.bf16.mxu0 0
    %2702 = vmatpush1.bf16.xpose.msra.mxu0 0
    %2703 = vmatprep.subr.bf16.mxu0 0
    %2704 = vmatpush1.bf16.xpose.msra.mxu0 0
    %2705 = vmatprep.subr.bf16.mxu0 0
    %2706 = vmatpush1.bf16.xpose.msra.mxu0 0
    %2707 = vmatprep.subr.bf16.mxu0 0
    %2708 = vmatpush1.bf16.xpose.msra.mxu0 0
    %2709 = vmatprep.mubr.bf16.mxu0 0
    %2710 = vmatmul.mubr.bf16.gmra.mrb[0].mxu0 %v2651
    %v2711 = vpop.f32.mrb[0].mxu0
    %v2712 = vadd.f32 0.0, %v2711
    %v2713 = vpop.f32.mrb[0].mxu0
    %v2714 = vpop.f32.mrb[0].mxu0
    %v2715 = vadd.f32 0.0, %v2714
    %v2716 = vpop.f32.mrb[0].mxu0
    %2717 = vdwg.mxu0
    %v2734 = vunpack.c.l.b16 %v287
    %v2735 = vunpack.c.l.b16 %v288
    %v2736 = vunpack.c.l.b16 %v289
    %v2737 = vunpack.c.l.b16 %v290
    %v2738 = vunpack.c.l.b16 %v291
    %v2739 = vunpack.c.l.b16 %v292
    %v2740 = vunpack.c.l.b16 %v293
    %v2741 = vunpack.c.l.b16 %v294
    %v2742 = vunpack.c.l.b16 %v295
    %v2743 = vunpack.c.l.b16 %v296
    %v2744 = vunpack.c.l.b16 %v297
    %v2745 = vunpack.c.l.b16 %v298
    %v2746 = vunpack.c.l.b16 %v299
    %v2747 = vunpack.c.l.b16 %v300
    %v2748 = vunpack.c.l.b16 %v301
    %v2749 = vunpack.c.l.b16 %v302
    %v2750 = vpack.c.b16 %v2735, %v2734
    %v2751 = vpack.c.b16 %v2737, %v2736
    %v2752 = vpack.c.b16 %v2739, %v2738
    %v2753 = vpack.c.b16 %v2741, %v2740
    %v2754 = vpack.c.b16 %v2743, %v2742
    %v2755 = vpack.c.b16 %v2745, %v2744
    %v2756 = vpack.c.b16 %v2747, %v2746
    %v2757 = vpack.c.b16 %v2749, %v2748
    %v2759 = vsel %vm1387, %v2393, 0
    %v2762 = vsel %vm1387, %v2750, 0
    %v2765 = vsel %vm1387, %v2751, 0
    %v2768 = vsel %vm1387, %v2752, 0
    %v2771 = vsel %vm1387, %v2753, 0
    %v2774 = vsel %vm1387, %v2754, 0
    %v2777 = vsel %vm1387, %v2755, 0
    %v2780 = vsel %vm1387, %v2756, 0
    %v2783 = vsel %vm1387, %v2757, 0
    %2785 = vmatprep.subr.bf16.mxu0 0
    %2786 = vmatpush1.bf16.xpose.msra.mxu0 %v2762
    %2787 = vmatprep.subr.bf16.mxu0 0
    %2788 = vmatpush1.bf16.xpose.msra.mxu0 %v2765
    %2789 = vmatprep.subr.bf16.mxu0 0
    %2790 = vmatpush1.bf16.xpose.msra.mxu0 %v2768
    %2791 = vmatprep.subr.bf16.mxu0 0
    %2792 = vmatpush1.bf16.xpose.msra.mxu0 %v2771
    %2793 = vmatprep.subr.bf16.mxu0 0
    %2794 = vmatpush1.bf16.xpose.msra.mxu0 %v2774
    %2795 = vmatprep.subr.bf16.mxu0 0
    %2796 = vmatpush1.bf16.xpose.msra.mxu0 %v2777
    %2797 = vmatprep.subr.bf16.mxu0 0
    %2798 = vmatpush1.bf16.xpose.msra.mxu0 %v2780
    %2799 = vmatprep.subr.bf16.mxu0 0
    %2800 = vmatpush1.bf16.xpose.msra.mxu0 %v2783
    %2801 = vmatprep.subr.bf16.mxu0 0
    %2802 = vmatpush1.bf16.xpose.msra.mxu0 0
    %2803 = vmatprep.subr.bf16.mxu0 0
    %2804 = vmatpush1.bf16.xpose.msra.mxu0 0
    %2805 = vmatprep.subr.bf16.mxu0 0
    %2806 = vmatpush1.bf16.xpose.msra.mxu0 0
    %2807 = vmatprep.subr.bf16.mxu0 0
    %2808 = vmatpush1.bf16.xpose.msra.mxu0 0
    %2809 = vmatprep.subr.bf16.mxu0 0
    %2810 = vmatpush1.bf16.xpose.msra.mxu0 0
    %2811 = vmatprep.subr.bf16.mxu0 0
    %2812 = vmatpush1.bf16.xpose.msra.mxu0 0
    %2813 = vmatprep.subr.bf16.mxu0 0
    %2814 = vmatpush1.bf16.xpose.msra.mxu0 0
    %2815 = vmatprep.subr.bf16.mxu0 0
    %2816 = vmatpush1.bf16.xpose.msra.mxu0 0
    %2817 = vmatprep.mubr.bf16.mxu0 0
    %2818 = vmatmul.mubr.bf16.gmra.mrb[0].mxu0 %v2759
    %v2819 = vpop.f32.mrb[0].mxu0
    %v2820 = vadd.f32 0.0, %v2819
    %v2821 = vpop.f32.mrb[0].mxu0
    %v2822 = vpop.f32.mrb[0].mxu0
    %v2823 = vadd.f32 0.0, %v2822
    %v2824 = vpop.f32.mrb[0].mxu0
    %2825 = vdwg.mxu0
    %v2826 = vadd.f32 %v2496, %v2604
    %v2827 = vadd.f32 %v2826, %v2712
    %v2828 = vadd.f32 %v2827, %v2820
    %v2829 = vadd.f32 %v2499, %v2607
    %v2830 = vadd.f32 %v2829, %v2715
    %v2831 = vadd.f32 %v2830, %v2823
    %v2832 = vadd.f32 %v34, %v2828
    %v2833 = vadd.f32 %v35, %v2831
    %v2834 = vmul.f32 %v2832, %v2832
    %v2835 = vmul.f32 %v2833, %v2833
    %2836 = vadd.xlane.f32.xlu0 %v2834
    %v2837 = vpop.xlane.xlu0 %2836
    %2838 = vadd.xlane.f32.xlu0 %v2835
    %v2839 = vpop.xlane.xlu0 %2838
    %v2840 = vmul.f32 %v2837, %v309
    %v2841 = vmul.f32 %v2839, %v309
    %v2842 = vadd.f32 %v2840, 1e-05
    %v2843 = vadd.f32 %v2841, 1e-05
    %v2844 = vrsqrt.pop %v2842
    %v2845 = vrsqrt.pop %v2843
    %v2846 = vmul.f32 %v2832, %v2844
    %v2847 = vmul.f32 %v2833, %v2845
    %v2848 = vpack.c.bf16 %v2847, %v2846
    %v2849 = vld [vmem:[%s7] sm:$0xff]
    %v2850 = vld [vmem:[%s7 + $0x8] sm:$0xff]
    %v2851 = vld [vmem:[%s7 + $0x10] sm:$0xff]
    %v2852 = vld [vmem:[%s7 + $0x18] sm:$0xff]
    %v2853 = vld [vmem:[%s7 + $0x20] sm:$0xff]
    %v2854 = vld [vmem:[%s7 + $0x28] sm:$0xff]
    %v2855 = vld [vmem:[%s7 + $0x30] sm:$0xff]
    %v2856 = vld [vmem:[%s7 + $0x38] sm:$0xff]
    %v2857 = vld [vmem:[%s7 + $0x40] sm:$0xff]
    %v2858 = vld [vmem:[%s7 + $0x48] sm:$0xff]
    %v2859 = vld [vmem:[%s7 + $0x50] sm:$0xff]
    %v2860 = vld [vmem:[%s7 + $0x58] sm:$0xff]
    %v2861 = vld [vmem:[%s7 + $0x60] sm:$0xff]
    %v2862 = vld [vmem:[%s7 + $0x68] sm:$0xff]
    %v2863 = vld [vmem:[%s7 + $0x70] sm:$0xff]
    %v2864 = vld [vmem:[%s7 + $0x78] sm:$0xff]
    %v2865 = vld [vmem:[%s7 + $0x80] sm:$0xff]
    %v2866 = vld [vmem:[%s7 + $0x88] sm:$0xff]
    %v2867 = vld [vmem:[%s7 + $0x90] sm:$0xff]
    %v2868 = vld [vmem:[%s7 + $0x98] sm:$0xff]
    %v2869 = vld [vmem:[%s7 + $0xa0] sm:$0xff]
    %v2870 = vld [vmem:[%s7 + $0xa8] sm:$0xff]
    %v2871 = vld [vmem:[%s7 + $0xb0] sm:$0xff]
    %v2872 = vld [vmem:[%s7 + $0xb8] sm:$0xff]
    %v2873 = vld [vmem:[%s7 + $0xc0] sm:$0xff]
    %v2874 = vld [vmem:[%s7 + $0xc8] sm:$0xff]
    %v2875 = vld [vmem:[%s7 + $0xd0] sm:$0xff]
    %v2876 = vld [vmem:[%s7 + $0xd8] sm:$0xff]
    %v2877 = vld [vmem:[%s7 + $0xe0] sm:$0xff]
    %v2878 = vld [vmem:[%s7 + $0xe8] sm:$0xff]
    %v2879 = vld [vmem:[%s7 + $0xf0] sm:$0xff]
    %v2880 = vld [vmem:[%s7 + $0xf8] sm:$0xff]
    %v2913 = vunpack.c.l.b16 %v2849
    %v2914 = vunpack.c.h.b16 %v2849
    %v2915 = vunpack.c.l.b16 %v2850
    %v2916 = vunpack.c.h.b16 %v2850
    %v2917 = vunpack.c.l.b16 %v2851
    %v2918 = vunpack.c.h.b16 %v2851
    %v2919 = vunpack.c.l.b16 %v2852
    %v2920 = vunpack.c.h.b16 %v2852
    %v2921 = vunpack.c.l.b16 %v2853
    %v2922 = vunpack.c.h.b16 %v2853
    %v2923 = vunpack.c.l.b16 %v2854
    %v2924 = vunpack.c.h.b16 %v2854
    %v2925 = vunpack.c.l.b16 %v2855
    %v2926 = vunpack.c.h.b16 %v2855
    %v2927 = vunpack.c.l.b16 %v2856
    %v2928 = vunpack.c.h.b16 %v2856
    %v2929 = vunpack.c.l.b16 %v2857
    %v2930 = vunpack.c.h.b16 %v2857
    %v2931 = vunpack.c.l.b16 %v2858
    %v2932 = vunpack.c.h.b16 %v2858
    %v2933 = vunpack.c.l.b16 %v2859
    %v2934 = vunpack.c.h.b16 %v2859
    %v2935 = vunpack.c.l.b16 %v2860
    %v2936 = vunpack.c.h.b16 %v2860
    %v2937 = vunpack.c.l.b16 %v2861
    %v2938 = vunpack.c.h.b16 %v2861
    %v2939 = vunpack.c.l.b16 %v2862
    %v2940 = vunpack.c.h.b16 %v2862
    %v2941 = vunpack.c.l.b16 %v2863
    %v2942 = vunpack.c.h.b16 %v2863
    %v2943 = vunpack.c.l.b16 %v2864
    %v2944 = vunpack.c.h.b16 %v2864
    %v2945 = vunpack.c.l.b16 %v2865
    %v2946 = vunpack.c.h.b16 %v2865
    %v2947 = vunpack.c.l.b16 %v2866
    %v2948 = vunpack.c.h.b16 %v2866
    %v2949 = vunpack.c.l.b16 %v2867
    %v2950 = vunpack.c.h.b16 %v2867
    %v2951 = vunpack.c.l.b16 %v2868
    %v2952 = vunpack.c.h.b16 %v2868
    %v2953 = vunpack.c.l.b16 %v2869
    %v2954 = vunpack.c.h.b16 %v2869
    %v2955 = vunpack.c.l.b16 %v2870
    %v2956 = vunpack.c.h.b16 %v2870
    %v2957 = vunpack.c.l.b16 %v2871
    %v2958 = vunpack.c.h.b16 %v2871
    %v2959 = vunpack.c.l.b16 %v2872
    %v2960 = vunpack.c.h.b16 %v2872
    %v2961 = vunpack.c.l.b16 %v2873
    %v2962 = vunpack.c.h.b16 %v2873
    %v2963 = vunpack.c.l.b16 %v2874
    %v2964 = vunpack.c.h.b16 %v2874
    %v2965 = vunpack.c.l.b16 %v2875
    %v2966 = vunpack.c.h.b16 %v2875
    %v2967 = vunpack.c.l.b16 %v2876
    %v2968 = vunpack.c.h.b16 %v2876
    %v2969 = vunpack.c.l.b16 %v2877
    %v2970 = vunpack.c.h.b16 %v2877
    %v2971 = vunpack.c.l.b16 %v2878
    %v2972 = vunpack.c.h.b16 %v2878
    %v2973 = vunpack.c.l.b16 %v2879
    %v2974 = vunpack.c.h.b16 %v2879
    %v2975 = vunpack.c.l.b16 %v2880
    %v2976 = vunpack.c.h.b16 %v2880
    %v2977 = vpack.c.b16 %v2917, %v2913
    %v2978 = vpack.c.b16 %v2918, %v2914
    %v2979 = vpack.c.b16 %v2919, %v2915
    %v2980 = vpack.c.b16 %v2920, %v2916
    %v2981 = vpack.c.b16 %v2925, %v2921
    %v2982 = vpack.c.b16 %v2926, %v2922
    %v2983 = vpack.c.b16 %v2927, %v2923
    %v2984 = vpack.c.b16 %v2928, %v2924
    %v2985 = vpack.c.b16 %v2933, %v2929
    %v2986 = vpack.c.b16 %v2934, %v2930
    %v2987 = vpack.c.b16 %v2935, %v2931
    %v2988 = vpack.c.b16 %v2936, %v2932
    %v2989 = vpack.c.b16 %v2941, %v2937
    %v2990 = vpack.c.b16 %v2942, %v2938
    %v2991 = vpack.c.b16 %v2943, %v2939
    %v2992 = vpack.c.b16 %v2944, %v2940
    %v2993 = vpack.c.b16 %v2949, %v2945
    %v2994 = vpack.c.b16 %v2950, %v2946
    %v2995 = vpack.c.b16 %v2951, %v2947
    %v2996 = vpack.c.b16 %v2952, %v2948
    %v2997 = vpack.c.b16 %v2957, %v2953
    %v2998 = vpack.c.b16 %v2958, %v2954
    %v2999 = vpack.c.b16 %v2959, %v2955
    %v3000 = vpack.c.b16 %v2960, %v2956
    %v3001 = vpack.c.b16 %v2965, %v2961
    %v3002 = vpack.c.b16 %v2966, %v2962
    %v3003 = vpack.c.b16 %v2967, %v2963
    %v3004 = vpack.c.b16 %v2968, %v2964
    %v3005 = vpack.c.b16 %v2973, %v2969
    %v3006 = vpack.c.b16 %v2974, %v2970
    %v3007 = vpack.c.b16 %v2975, %v2971
    %v3008 = vpack.c.b16 %v2976, %v2972
    %3041 = vmatprep.subr.bf16.mxu0 %v2978
    %3042 = vmatpush1.bf16.msra.mxu0 %v2977
    %3043 = vmatprep.subr.bf16.mxu0 %v2982
    %3044 = vmatpush1.bf16.msra.mxu0 %v2981
    %3045 = vmatprep.subr.bf16.mxu0 %v2986
    %3046 = vmatpush1.bf16.msra.mxu0 %v2985
    %3047 = vmatprep.subr.bf16.mxu0 %v2990
    %3048 = vmatpush1.bf16.msra.mxu0 %v2989
    %3049 = vmatprep.subr.bf16.mxu0 %v2994
    %3050 = vmatpush1.bf16.msra.mxu0 %v2993
    %3051 = vmatprep.subr.bf16.mxu0 %v2998
    %3052 = vmatpush1.bf16.msra.mxu0 %v2997
    %3053 = vmatprep.subr.bf16.mxu0 %v3002
    %3054 = vmatpush1.bf16.msra.mxu0 %v3001
    %3055 = vmatprep.subr.bf16.mxu0 %v3006
    %3056 = vmatpush1.bf16.msra.mxu0 %v3005
    %3057 = vmatprep.subr.bf16.mxu0 0
    %3058 = vmatpush1.bf16.msra.mxu0 0
    %3059 = vmatprep.subr.bf16.mxu0 0
    %3060 = vmatpush1.bf16.msra.mxu0 0
    %3061 = vmatprep.subr.bf16.mxu0 0
    %3062 = vmatpush1.bf16.msra.mxu0 0
    %3063 = vmatprep.subr.bf16.mxu0 0
    %3064 = vmatpush1.bf16.msra.mxu0 0
    %3065 = vmatprep.subr.bf16.mxu0 0
    %3066 = vmatpush1.bf16.msra.mxu0 0
    %3067 = vmatprep.subr.bf16.mxu0 0
    %3068 = vmatpush1.bf16.msra.mxu0 0
    %3069 = vmatprep.subr.bf16.mxu0 0
    %3070 = vmatpush1.bf16.msra.mxu0 0
    %3071 = vmatprep.subr.bf16.mxu0 0
    %3072 = vmatpush1.bf16.msra.mxu0 0
    %3073 = vmatprep.mubr.bf16.mxu0 0
    %3074 = vmatmul.mubr.bf16.gmra.mrb[0].mxu0 %v2848
    %v3075 = vpop.f32.mrb[0].mxu0
    %v3076 = vadd.f32 0.0, %v3075
    %v3077 = vpop.f32.mrb[0].mxu0
    %v3078 = vadd.f32 0.0, %v3077
    %v3079 = vpop.f32.mrb[0].mxu0
    %v3080 = vadd.f32 0.0, %v3079
    %v3081 = vpop.f32.mrb[0].mxu0
    %v3082 = vadd.f32 0.0, %v3081
    %3083 = vdwg.mxu0
    %3084 = vmatprep.subr.bf16.mxu0 %v2980
    %3085 = vmatpush1.bf16.msra.mxu0 %v2979
    %3086 = vmatprep.subr.bf16.mxu0 %v2984
    %3087 = vmatpush1.bf16.msra.mxu0 %v2983
    %3088 = vmatprep.subr.bf16.mxu0 %v2988
    %3089 = vmatpush1.bf16.msra.mxu0 %v2987
    %3090 = vmatprep.subr.bf16.mxu0 %v2992
    %3091 = vmatpush1.bf16.msra.mxu0 %v2991
    %3092 = vmatprep.subr.bf16.mxu0 %v2996
    %3093 = vmatpush1.bf16.msra.mxu0 %v2995
    %3094 = vmatprep.subr.bf16.mxu0 %v3000
    %3095 = vmatpush1.bf16.msra.mxu0 %v2999
    %3096 = vmatprep.subr.bf16.mxu0 %v3004
    %3097 = vmatpush1.bf16.msra.mxu0 %v3003
    %3098 = vmatprep.subr.bf16.mxu0 %v3008
    %3099 = vmatpush1.bf16.msra.mxu0 %v3007
    %3100 = vmatprep.subr.bf16.mxu0 0
    %3101 = vmatpush1.bf16.msra.mxu0 0
    %3102 = vmatprep.subr.bf16.mxu0 0
    %3103 = vmatpush1.bf16.msra.mxu0 0
    %3104 = vmatprep.subr.bf16.mxu0 0
    %3105 = vmatpush1.bf16.msra.mxu0 0
    %3106 = vmatprep.subr.bf16.mxu0 0
    %3107 = vmatpush1.bf16.msra.mxu0 0
    %3108 = vmatprep.subr.bf16.mxu0 0
    %3109 = vmatpush1.bf16.msra.mxu0 0
    %3110 = vmatprep.subr.bf16.mxu0 0
    %3111 = vmatpush1.bf16.msra.mxu0 0
    %3112 = vmatprep.subr.bf16.mxu0 0
    %3113 = vmatpush1.bf16.msra.mxu0 0
    %3114 = vmatprep.subr.bf16.mxu0 0
    %3115 = vmatpush1.bf16.msra.mxu0 0
    %3116 = vmatprep.mubr.bf16.mxu0 0
    %3117 = vmatmul.mubr.bf16.gmra.mrb[0].mxu0 %v2848
    %v3118 = vpop.f32.mrb[0].mxu0
    %v3119 = vadd.f32 0.0, %v3118
    %v3120 = vpop.f32.mrb[0].mxu0
    %v3121 = vadd.f32 0.0, %v3120
    %v3122 = vpop.f32.mrb[0].mxu0
    %v3123 = vadd.f32 0.0, %v3122
    %v3124 = vpop.f32.mrb[0].mxu0
    %v3125 = vadd.f32 0.0, %v3124
    %3126 = vdwg.mxu0
    %v3127 = vxor.u32 %v3076, 2147483648
    %v3128 = vxor.u32 %v3078, 2147483648
    %v3129 = vxor.u32 %v3080, 2147483648
    %v3130 = vxor.u32 %v3082, 2147483648
    %v3131 = vmul.f32 %v3127, 1.442695
    %v3132 = vpow.pop %v3131
    %v3133 = vmul.f32 %v3128, 1.442695
    %v3134 = vpow.pop %v3133
    %v3135 = vmul.f32 %v3129, 1.442695
    %v3136 = vpow.pop %v3135
    %v3137 = vmul.f32 %v3130, 1.442695
    %v3138 = vpow.pop %v3137
    %v3139 = vadd.f32 %v3132, 1.0
    %v3140 = vadd.f32 %v3134, 1.0
    %v3141 = vadd.f32 %v3136, 1.0
    %v3142 = vadd.f32 %v3138, 1.0
    %v3143 = vrcp.pop %v3139
    %v3144 = vmul.f32 1.0, %v3143
    %v3145 = vrcp.pop %v3140
    %v3146 = vmul.f32 1.0, %v3145
    %v3147 = vrcp.pop %v3141
    %v3148 = vmul.f32 1.0, %v3147
    %v3149 = vrcp.pop %v3142
    %v3150 = vmul.f32 1.0, %v3149
    %v3151 = vmul.f32 %v3076, %v3144
    %v3152 = vmul.f32 %v3078, %v3146
    %v3153 = vmul.f32 %v3080, %v3148
    %v3154 = vmul.f32 %v3082, %v3150
    %v3155 = vmul.f32 %v3151, %v3119
    %v3156 = vmul.f32 %v3152, %v3121
    %v3157 = vmul.f32 %v3153, %v3123
    %v3158 = vmul.f32 %v3154, %v3125
    %v3159 = vpack.c.bf16 %v3157, %v3155
    %v3160 = vpack.c.bf16 %v3158, %v3156
    %v3161 = vld [vmem:[%s8] sm:$0xf]
    %v3162 = vld [vmem:[%s8 + $0x4] sm:$0xf]
    %v3163 = vld [vmem:[%s8 + $0x8] sm:$0xf]
    %v3164 = vld [vmem:[%s8 + $0xc] sm:$0xf]
    %v3165 = vld [vmem:[%s8 + $0x10] sm:$0xf]
    %v3166 = vld [vmem:[%s8 + $0x14] sm:$0xf]
    %v3167 = vld [vmem:[%s8 + $0x18] sm:$0xf]
    %v3168 = vld [vmem:[%s8 + $0x1c] sm:$0xf]
    %v3169 = vld [vmem:[%s8 + $0x20] sm:$0xf]
    %v3170 = vld [vmem:[%s8 + $0x24] sm:$0xf]
    %v3171 = vld [vmem:[%s8 + $0x28] sm:$0xf]
    %v3172 = vld [vmem:[%s8 + $0x2c] sm:$0xf]
    %v3173 = vld [vmem:[%s8 + $0x30] sm:$0xf]
    %v3174 = vld [vmem:[%s8 + $0x34] sm:$0xf]
    %v3175 = vld [vmem:[%s8 + $0x38] sm:$0xf]
    %v3176 = vld [vmem:[%s8 + $0x3c] sm:$0xf]
    %v3177 = vld [vmem:[%s8 + $0x40] sm:$0xf]
    %v3178 = vld [vmem:[%s8 + $0x44] sm:$0xf]
    %v3179 = vld [vmem:[%s8 + $0x48] sm:$0xf]
    %v3180 = vld [vmem:[%s8 + $0x4c] sm:$0xf]
    %v3181 = vld [vmem:[%s8 + $0x50] sm:$0xf]
    %v3182 = vld [vmem:[%s8 + $0x54] sm:$0xf]
    %v3183 = vld [vmem:[%s8 + $0x58] sm:$0xf]
    %v3184 = vld [vmem:[%s8 + $0x5c] sm:$0xf]
    %v3185 = vld [vmem:[%s8 + $0x60] sm:$0xf]
    %v3186 = vld [vmem:[%s8 + $0x64] sm:$0xf]
    %v3187 = vld [vmem:[%s8 + $0x68] sm:$0xf]
    %v3188 = vld [vmem:[%s8 + $0x6c] sm:$0xf]
    %v3189 = vld [vmem:[%s8 + $0x70] sm:$0xf]
    %v3190 = vld [vmem:[%s8 + $0x74] sm:$0xf]
    %v3191 = vld [vmem:[%s8 + $0x78] sm:$0xf]
    %v3192 = vld [vmem:[%s8 + $0x7c] sm:$0xf]
    %v3225 = vunpack.c.l.b16 %v3161
    %v3226 = vunpack.c.l.b16 %v3162
    %v3227 = vunpack.c.l.b16 %v3163
    %v3228 = vunpack.c.l.b16 %v3164
    %v3229 = vunpack.c.l.b16 %v3165
    %v3230 = vunpack.c.l.b16 %v3166
    %v3231 = vunpack.c.l.b16 %v3167
    %v3232 = vunpack.c.l.b16 %v3168
    %v3233 = vunpack.c.l.b16 %v3169
    %v3234 = vunpack.c.l.b16 %v3170
    %v3235 = vunpack.c.l.b16 %v3171
    %v3236 = vunpack.c.l.b16 %v3172
    %v3237 = vunpack.c.l.b16 %v3173
    %v3238 = vunpack.c.l.b16 %v3174
    %v3239 = vunpack.c.l.b16 %v3175
    %v3240 = vunpack.c.l.b16 %v3176
    %v3241 = vunpack.c.l.b16 %v3177
    %v3242 = vunpack.c.l.b16 %v3178
    %v3243 = vunpack.c.l.b16 %v3179
    %v3244 = vunpack.c.l.b16 %v3180
    %v3245 = vunpack.c.l.b16 %v3181
    %v3246 = vunpack.c.l.b16 %v3182
    %v3247 = vunpack.c.l.b16 %v3183
    %v3248 = vunpack.c.l.b16 %v3184
    %v3249 = vunpack.c.l.b16 %v3185
    %v3250 = vunpack.c.l.b16 %v3186
    %v3251 = vunpack.c.l.b16 %v3187
    %v3252 = vunpack.c.l.b16 %v3188
    %v3253 = vunpack.c.l.b16 %v3189
    %v3254 = vunpack.c.l.b16 %v3190
    %v3255 = vunpack.c.l.b16 %v3191
    %v3256 = vunpack.c.l.b16 %v3192
    %v3257 = vpack.c.b16 %v3226, %v3225
    %v3258 = vpack.c.b16 %v3228, %v3227
    %v3259 = vpack.c.b16 %v3230, %v3229
    %v3260 = vpack.c.b16 %v3232, %v3231
    %v3261 = vpack.c.b16 %v3234, %v3233
    %v3262 = vpack.c.b16 %v3236, %v3235
    %v3263 = vpack.c.b16 %v3238, %v3237
    %v3264 = vpack.c.b16 %v3240, %v3239
    %v3265 = vpack.c.b16 %v3242, %v3241
    %v3266 = vpack.c.b16 %v3244, %v3243
    %v3267 = vpack.c.b16 %v3246, %v3245
    %v3268 = vpack.c.b16 %v3248, %v3247
    %v3269 = vpack.c.b16 %v3250, %v3249
    %v3270 = vpack.c.b16 %v3252, %v3251
    %v3271 = vpack.c.b16 %v3254, %v3253
    %v3272 = vpack.c.b16 %v3256, %v3255
    %3289 = vmatprep.subr.bf16.mxu0 0
    %3290 = vmatpush1.bf16.msra.mxu0 %v3257
    %3291 = vmatprep.subr.bf16.mxu0 0
    %3292 = vmatpush1.bf16.msra.mxu0 %v3258
    %3293 = vmatprep.subr.bf16.mxu0 0
    %3294 = vmatpush1.bf16.msra.mxu0 %v3259
    %3295 = vmatprep.subr.bf16.mxu0 0
    %3296 = vmatpush1.bf16.msra.mxu0 %v3260
    %3297 = vmatprep.subr.bf16.mxu0 0
    %3298 = vmatpush1.bf16.msra.mxu0 %v3261
    %3299 = vmatprep.subr.bf16.mxu0 0
    %3300 = vmatpush1.bf16.msra.mxu0 %v3262
    %3301 = vmatprep.subr.bf16.mxu0 0
    %3302 = vmatpush1.bf16.msra.mxu0 %v3263
    %3303 = vmatprep.subr.bf16.mxu0 0
    %3304 = vmatpush1.bf16.msra.mxu0 %v3264
    %3305 = vmatprep.subr.bf16.mxu0 0
    %3306 = vmatpush1.bf16.msra.mxu0 %v3265
    %3307 = vmatprep.subr.bf16.mxu0 0
    %3308 = vmatpush1.bf16.msra.mxu0 %v3266
    %3309 = vmatprep.subr.bf16.mxu0 0
    %3310 = vmatpush1.bf16.msra.mxu0 %v3267
    %3311 = vmatprep.subr.bf16.mxu0 0
    %3312 = vmatpush1.bf16.msra.mxu0 %v3268
    %3313 = vmatprep.subr.bf16.mxu0 0
    %3314 = vmatpush1.bf16.msra.mxu0 %v3269
    %3315 = vmatprep.subr.bf16.mxu0 0
    %3316 = vmatpush1.bf16.msra.mxu0 %v3270
    %3317 = vmatprep.subr.bf16.mxu0 0
    %3318 = vmatpush1.bf16.msra.mxu0 %v3271
    %3319 = vmatprep.subr.bf16.mxu0 0
    %3320 = vmatpush1.bf16.msra.mxu0 %v3272
    %3321 = vmatprep.mubr.bf16.mxu0 %v3160
    %3322 = vmatmul.mubr.bf16.gmra.mrb[0].mxu0 %v3159
    %v3323 = vpop.f32.mrb[0].mxu0
    %v3324 = vadd.f32 0.0, %v3323
    %v3325 = vpop.f32.mrb[0].mxu0
    %v3326 = vpop.f32.mrb[0].mxu0
    %v3327 = vadd.f32 0.0, %v3326
    %v3328 = vpop.f32.mrb[0].mxu0
    %3329 = vdwg.mxu0
    %v3330 = vadd.f32 %v2832, %v3324
    %v3331 = vadd.f32 %v2833, %v3327
    %s3332 = scalar_lea.vmem %s6, 1024
    %v3333 = vld [vmem:[%s3332] sm:$0xf]
    %v3334 = vld [vmem:[%s3332 + $0x4] sm:$0xf]
    %v3335 = vld [vmem:[%s3332 + $0x8] sm:$0xf]
    %v3336 = vld [vmem:[%s3332 + $0xc] sm:$0xf]
    %v3337 = vld [vmem:[%s3332 + $0x10] sm:$0xf]
    %v3338 = vld [vmem:[%s3332 + $0x14] sm:$0xf]
    %v3339 = vld [vmem:[%s3332 + $0x18] sm:$0xf]
    %v3340 = vld [vmem:[%s3332 + $0x1c] sm:$0xf]
    %v3341 = vld [vmem:[%s3332 + $0x20] sm:$0xf]
    %v3342 = vld [vmem:[%s3332 + $0x24] sm:$0xf]
    %v3343 = vld [vmem:[%s3332 + $0x28] sm:$0xf]
    %v3344 = vld [vmem:[%s3332 + $0x2c] sm:$0xf]
    %v3345 = vld [vmem:[%s3332 + $0x30] sm:$0xf]
    %v3346 = vld [vmem:[%s3332 + $0x34] sm:$0xf]
    %v3347 = vld [vmem:[%s3332 + $0x38] sm:$0xf]
    %v3348 = vld [vmem:[%s3332 + $0x3c] sm:$0xf]
    %v3349 = vld [vmem:[%s3332 + $0x40] sm:$0xf]
    %v3350 = vld [vmem:[%s3332 + $0x44] sm:$0xf]
    %v3351 = vld [vmem:[%s3332 + $0x48] sm:$0xf]
    %v3352 = vld [vmem:[%s3332 + $0x4c] sm:$0xf]
    %v3353 = vld [vmem:[%s3332 + $0x50] sm:$0xf]
    %v3354 = vld [vmem:[%s3332 + $0x54] sm:$0xf]
    %v3355 = vld [vmem:[%s3332 + $0x58] sm:$0xf]
    %v3356 = vld [vmem:[%s3332 + $0x5c] sm:$0xf]
    %v3357 = vld [vmem:[%s3332 + $0x60] sm:$0xf]
    %v3358 = vld [vmem:[%s3332 + $0x64] sm:$0xf]
    %v3359 = vld [vmem:[%s3332 + $0x68] sm:$0xf]
    %v3360 = vld [vmem:[%s3332 + $0x6c] sm:$0xf]
    %v3361 = vld [vmem:[%s3332 + $0x70] sm:$0xf]
    %v3362 = vld [vmem:[%s3332 + $0x74] sm:$0xf]
    %v3363 = vld [vmem:[%s3332 + $0x78] sm:$0xf]
    %v3364 = vld [vmem:[%s3332 + $0x7c] sm:$0xf]
    %v3365 = vld [vmem:[%s3332 + $0x80] sm:$0xf]
    %v3366 = vld [vmem:[%s3332 + $0x84] sm:$0xf]
    %v3367 = vld [vmem:[%s3332 + $0x88] sm:$0xf]
    %v3368 = vld [vmem:[%s3332 + $0x8c] sm:$0xf]
    %v3369 = vld [vmem:[%s3332 + $0x90] sm:$0xf]
    %v3370 = vld [vmem:[%s3332 + $0x94] sm:$0xf]
    %v3371 = vld [vmem:[%s3332 + $0x98] sm:$0xf]
    %v3372 = vld [vmem:[%s3332 + $0x9c] sm:$0xf]
    %v3373 = vld [vmem:[%s3332 + $0xa0] sm:$0xf]
    %v3374 = vld [vmem:[%s3332 + $0xa4] sm:$0xf]
    %v3375 = vld [vmem:[%s3332 + $0xa8] sm:$0xf]
    %v3376 = vld [vmem:[%s3332 + $0xac] sm:$0xf]
    %v3377 = vld [vmem:[%s3332 + $0xb0] sm:$0xf]
    %v3378 = vld [vmem:[%s3332 + $0xb4] sm:$0xf]
    %v3379 = vld [vmem:[%s3332 + $0xb8] sm:$0xf]
    %v3380 = vld [vmem:[%s3332 + $0xbc] sm:$0xf]
    %v3381 = vld [vmem:[%s3332 + $0xc0] sm:$0xf]
    %v3382 = vld [vmem:[%s3332 + $0xc4] sm:$0xf]
    %v3383 = vld [vmem:[%s3332 + $0xc8] sm:$0xf]
    %v3384 = vld [vmem:[%s3332 + $0xcc] sm:$0xf]
    %v3385 = vld [vmem:[%s3332 + $0xd0] sm:$0xf]
    %v3386 = vld [vmem:[%s3332 + $0xd4] sm:$0xf]
    %v3387 = vld [vmem:[%s3332 + $0xd8] sm:$0xf]
    %v3388 = vld [vmem:[%s3332 + $0xdc] sm:$0xf]
    %v3389 = vld [vmem:[%s3332 + $0xe0] sm:$0xf]
    %v3390 = vld [vmem:[%s3332 + $0xe4] sm:$0xf]
    %v3391 = vld [vmem:[%s3332 + $0xe8] sm:$0xf]
    %v3392 = vld [vmem:[%s3332 + $0xec] sm:$0xf]
    %v3393 = vld [vmem:[%s3332 + $0xf0] sm:$0xf]
    %v3394 = vld [vmem:[%s3332 + $0xf4] sm:$0xf]
    %v3395 = vld [vmem:[%s3332 + $0xf8] sm:$0xf]
    %v3396 = vld [vmem:[%s3332 + $0xfc] sm:$0xf]
    %v3397 = vld [vmem:[%s3332 + $0x100] sm:$0xf]
    %v3398 = vld [vmem:[%s3332 + $0x104] sm:$0xf]
    %v3399 = vld [vmem:[%s3332 + $0x108] sm:$0xf]
    %v3400 = vld [vmem:[%s3332 + $0x10c] sm:$0xf]
    %v3401 = vld [vmem:[%s3332 + $0x110] sm:$0xf]
    %v3402 = vld [vmem:[%s3332 + $0x114] sm:$0xf]
    %v3403 = vld [vmem:[%s3332 + $0x118] sm:$0xf]
    %v3404 = vld [vmem:[%s3332 + $0x11c] sm:$0xf]
    %v3405 = vld [vmem:[%s3332 + $0x120] sm:$0xf]
    %v3406 = vld [vmem:[%s3332 + $0x124] sm:$0xf]
    %v3407 = vld [vmem:[%s3332 + $0x128] sm:$0xf]
    %v3408 = vld [vmem:[%s3332 + $0x12c] sm:$0xf]
    %v3409 = vld [vmem:[%s3332 + $0x130] sm:$0xf]
    %v3410 = vld [vmem:[%s3332 + $0x134] sm:$0xf]
    %v3411 = vld [vmem:[%s3332 + $0x138] sm:$0xf]
    %v3412 = vld [vmem:[%s3332 + $0x13c] sm:$0xf]
    %v3413 = vld [vmem:[%s3332 + $0x140] sm:$0xf]
    %v3414 = vld [vmem:[%s3332 + $0x144] sm:$0xf]
    %v3415 = vld [vmem:[%s3332 + $0x148] sm:$0xf]
    %v3416 = vld [vmem:[%s3332 + $0x14c] sm:$0xf]
    %v3417 = vld [vmem:[%s3332 + $0x150] sm:$0xf]
    %v3418 = vld [vmem:[%s3332 + $0x154] sm:$0xf]
    %v3419 = vld [vmem:[%s3332 + $0x158] sm:$0xf]
    %v3420 = vld [vmem:[%s3332 + $0x15c] sm:$0xf]
    %v3421 = vld [vmem:[%s3332 + $0x160] sm:$0xf]
    %v3422 = vld [vmem:[%s3332 + $0x164] sm:$0xf]
    %v3423 = vld [vmem:[%s3332 + $0x168] sm:$0xf]
    %v3424 = vld [vmem:[%s3332 + $0x16c] sm:$0xf]
    %v3425 = vld [vmem:[%s3332 + $0x170] sm:$0xf]
    %v3426 = vld [vmem:[%s3332 + $0x174] sm:$0xf]
    %v3427 = vld [vmem:[%s3332 + $0x178] sm:$0xf]
    %v3428 = vld [vmem:[%s3332 + $0x17c] sm:$0xf]
    %v3429 = vld [vmem:[%s3332 + $0x180] sm:$0xf]
    %v3430 = vld [vmem:[%s3332 + $0x184] sm:$0xf]
    %v3431 = vld [vmem:[%s3332 + $0x188] sm:$0xf]
    %v3432 = vld [vmem:[%s3332 + $0x18c] sm:$0xf]
    %v3433 = vld [vmem:[%s3332 + $0x190] sm:$0xf]
    %v3434 = vld [vmem:[%s3332 + $0x194] sm:$0xf]
    %v3435 = vld [vmem:[%s3332 + $0x198] sm:$0xf]
    %v3436 = vld [vmem:[%s3332 + $0x19c] sm:$0xf]
    %v3437 = vld [vmem:[%s3332 + $0x1a0] sm:$0xf]
    %v3438 = vld [vmem:[%s3332 + $0x1a4] sm:$0xf]
    %v3439 = vld [vmem:[%s3332 + $0x1a8] sm:$0xf]
    %v3440 = vld [vmem:[%s3332 + $0x1ac] sm:$0xf]
    %v3441 = vld [vmem:[%s3332 + $0x1b0] sm:$0xf]
    %v3442 = vld [vmem:[%s3332 + $0x1b4] sm:$0xf]
    %v3443 = vld [vmem:[%s3332 + $0x1b8] sm:$0xf]
    %v3444 = vld [vmem:[%s3332 + $0x1bc] sm:$0xf]
    %v3445 = vld [vmem:[%s3332 + $0x1c0] sm:$0xf]
    %v3446 = vld [vmem:[%s3332 + $0x1c4] sm:$0xf]
    %v3447 = vld [vmem:[%s3332 + $0x1c8] sm:$0xf]
    %v3448 = vld [vmem:[%s3332 + $0x1cc] sm:$0xf]
    %v3449 = vld [vmem:[%s3332 + $0x1d0] sm:$0xf]
    %v3450 = vld [vmem:[%s3332 + $0x1d4] sm:$0xf]
    %v3451 = vld [vmem:[%s3332 + $0x1d8] sm:$0xf]
    %v3452 = vld [vmem:[%s3332 + $0x1dc] sm:$0xf]
    %v3453 = vld [vmem:[%s3332 + $0x1e0] sm:$0xf]
    %v3454 = vld [vmem:[%s3332 + $0x1e4] sm:$0xf]
    %v3455 = vld [vmem:[%s3332 + $0x1e8] sm:$0xf]
    %v3456 = vld [vmem:[%s3332 + $0x1ec] sm:$0xf]
    %v3457 = vld [vmem:[%s3332 + $0x1f0] sm:$0xf]
    %v3458 = vld [vmem:[%s3332 + $0x1f4] sm:$0xf]
    %v3459 = vld [vmem:[%s3332 + $0x1f8] sm:$0xf]
    %v3460 = vld [vmem:[%s3332 + $0x1fc] sm:$0xf]
    %v3461 = vld [vmem:[%s3332 + $0x200] sm:$0xf]
    %v3462 = vld [vmem:[%s3332 + $0x204] sm:$0xf]
    %v3463 = vld [vmem:[%s3332 + $0x208] sm:$0xf]
    %v3464 = vld [vmem:[%s3332 + $0x20c] sm:$0xf]
    %v3465 = vld [vmem:[%s3332 + $0x210] sm:$0xf]
    %v3466 = vld [vmem:[%s3332 + $0x214] sm:$0xf]
    %v3467 = vld [vmem:[%s3332 + $0x218] sm:$0xf]
    %v3468 = vld [vmem:[%s3332 + $0x21c] sm:$0xf]
    %v3469 = vld [vmem:[%s3332 + $0x220] sm:$0xf]
    %v3470 = vld [vmem:[%s3332 + $0x224] sm:$0xf]
    %v3471 = vld [vmem:[%s3332 + $0x228] sm:$0xf]
    %v3472 = vld [vmem:[%s3332 + $0x22c] sm:$0xf]
    %v3473 = vld [vmem:[%s3332 + $0x230] sm:$0xf]
    %v3474 = vld [vmem:[%s3332 + $0x234] sm:$0xf]
    %v3475 = vld [vmem:[%s3332 + $0x238] sm:$0xf]
    %v3476 = vld [vmem:[%s3332 + $0x23c] sm:$0xf]
    %v3477 = vld [vmem:[%s3332 + $0x240] sm:$0xf]
    %v3478 = vld [vmem:[%s3332 + $0x244] sm:$0xf]
    %v3479 = vld [vmem:[%s3332 + $0x248] sm:$0xf]
    %v3480 = vld [vmem:[%s3332 + $0x24c] sm:$0xf]
    %v3481 = vld [vmem:[%s3332 + $0x250] sm:$0xf]
    %v3482 = vld [vmem:[%s3332 + $0x254] sm:$0xf]
    %v3483 = vld [vmem:[%s3332 + $0x258] sm:$0xf]
    %v3484 = vld [vmem:[%s3332 + $0x25c] sm:$0xf]
    %v3485 = vld [vmem:[%s3332 + $0x260] sm:$0xf]
    %v3486 = vld [vmem:[%s3332 + $0x264] sm:$0xf]
    %v3487 = vld [vmem:[%s3332 + $0x268] sm:$0xf]
    %v3488 = vld [vmem:[%s3332 + $0x26c] sm:$0xf]
    %v3489 = vld [vmem:[%s3332 + $0x270] sm:$0xf]
    %v3490 = vld [vmem:[%s3332 + $0x274] sm:$0xf]
    %v3491 = vld [vmem:[%s3332 + $0x278] sm:$0xf]
    %v3492 = vld [vmem:[%s3332 + $0x27c] sm:$0xf]
    %v3493 = vld [vmem:[%s3332 + $0x280] sm:$0xf]
    %v3494 = vld [vmem:[%s3332 + $0x284] sm:$0xf]
    %v3495 = vld [vmem:[%s3332 + $0x288] sm:$0xf]
    %v3496 = vld [vmem:[%s3332 + $0x28c] sm:$0xf]
    %v3497 = vld [vmem:[%s3332 + $0x290] sm:$0xf]
    %v3498 = vld [vmem:[%s3332 + $0x294] sm:$0xf]
    %v3499 = vld [vmem:[%s3332 + $0x298] sm:$0xf]
    %v3500 = vld [vmem:[%s3332 + $0x29c] sm:$0xf]
    %v3501 = vld [vmem:[%s3332 + $0x2a0] sm:$0xf]
    %v3502 = vld [vmem:[%s3332 + $0x2a4] sm:$0xf]
    %v3503 = vld [vmem:[%s3332 + $0x2a8] sm:$0xf]
    %v3504 = vld [vmem:[%s3332 + $0x2ac] sm:$0xf]
    %v3505 = vld [vmem:[%s3332 + $0x2b0] sm:$0xf]
    %v3506 = vld [vmem:[%s3332 + $0x2b4] sm:$0xf]
    %v3507 = vld [vmem:[%s3332 + $0x2b8] sm:$0xf]
    %v3508 = vld [vmem:[%s3332 + $0x2bc] sm:$0xf]
    %v3509 = vld [vmem:[%s3332 + $0x2c0] sm:$0xf]
    %v3510 = vld [vmem:[%s3332 + $0x2c4] sm:$0xf]
    %v3511 = vld [vmem:[%s3332 + $0x2c8] sm:$0xf]
    %v3512 = vld [vmem:[%s3332 + $0x2cc] sm:$0xf]
    %v3513 = vld [vmem:[%s3332 + $0x2d0] sm:$0xf]
    %v3514 = vld [vmem:[%s3332 + $0x2d4] sm:$0xf]
    %v3515 = vld [vmem:[%s3332 + $0x2d8] sm:$0xf]
    %v3516 = vld [vmem:[%s3332 + $0x2dc] sm:$0xf]
    %v3517 = vld [vmem:[%s3332 + $0x2e0] sm:$0xf]
    %v3518 = vld [vmem:[%s3332 + $0x2e4] sm:$0xf]
    %v3519 = vld [vmem:[%s3332 + $0x2e8] sm:$0xf]
    %v3520 = vld [vmem:[%s3332 + $0x2ec] sm:$0xf]
    %v3521 = vld [vmem:[%s3332 + $0x2f0] sm:$0xf]
    %v3522 = vld [vmem:[%s3332 + $0x2f4] sm:$0xf]
    %v3523 = vld [vmem:[%s3332 + $0x2f8] sm:$0xf]
    %v3524 = vld [vmem:[%s3332 + $0x2fc] sm:$0xf]
    %v3525 = vld [vmem:[%s3332 + $0x300] sm:$0xf]
    %v3526 = vld [vmem:[%s3332 + $0x304] sm:$0xf]
    %v3527 = vld [vmem:[%s3332 + $0x308] sm:$0xf]
    %v3528 = vld [vmem:[%s3332 + $0x30c] sm:$0xf]
    %v3529 = vld [vmem:[%s3332 + $0x310] sm:$0xf]
    %v3530 = vld [vmem:[%s3332 + $0x314] sm:$0xf]
    %v3531 = vld [vmem:[%s3332 + $0x318] sm:$0xf]
    %v3532 = vld [vmem:[%s3332 + $0x31c] sm:$0xf]
    %v3533 = vld [vmem:[%s3332 + $0x320] sm:$0xf]
    %v3534 = vld [vmem:[%s3332 + $0x324] sm:$0xf]
    %v3535 = vld [vmem:[%s3332 + $0x328] sm:$0xf]
    %v3536 = vld [vmem:[%s3332 + $0x32c] sm:$0xf]
    %v3537 = vld [vmem:[%s3332 + $0x330] sm:$0xf]
    %v3538 = vld [vmem:[%s3332 + $0x334] sm:$0xf]
    %v3539 = vld [vmem:[%s3332 + $0x338] sm:$0xf]
    %v3540 = vld [vmem:[%s3332 + $0x33c] sm:$0xf]
    %v3541 = vld [vmem:[%s3332 + $0x340] sm:$0xf]
    %v3542 = vld [vmem:[%s3332 + $0x344] sm:$0xf]
    %v3543 = vld [vmem:[%s3332 + $0x348] sm:$0xf]
    %v3544 = vld [vmem:[%s3332 + $0x34c] sm:$0xf]
    %v3545 = vld [vmem:[%s3332 + $0x350] sm:$0xf]
    %v3546 = vld [vmem:[%s3332 + $0x354] sm:$0xf]
    %v3547 = vld [vmem:[%s3332 + $0x358] sm:$0xf]
    %v3548 = vld [vmem:[%s3332 + $0x35c] sm:$0xf]
    %v3549 = vld [vmem:[%s3332 + $0x360] sm:$0xf]
    %v3550 = vld [vmem:[%s3332 + $0x364] sm:$0xf]
    %v3551 = vld [vmem:[%s3332 + $0x368] sm:$0xf]
    %v3552 = vld [vmem:[%s3332 + $0x36c] sm:$0xf]
    %v3553 = vld [vmem:[%s3332 + $0x370] sm:$0xf]
    %v3554 = vld [vmem:[%s3332 + $0x374] sm:$0xf]
    %v3555 = vld [vmem:[%s3332 + $0x378] sm:$0xf]
    %v3556 = vld [vmem:[%s3332 + $0x37c] sm:$0xf]
    %v3557 = vld [vmem:[%s3332 + $0x380] sm:$0xf]
    %v3558 = vld [vmem:[%s3332 + $0x384] sm:$0xf]
    %v3559 = vld [vmem:[%s3332 + $0x388] sm:$0xf]
    %v3560 = vld [vmem:[%s3332 + $0x38c] sm:$0xf]
    %v3561 = vld [vmem:[%s3332 + $0x390] sm:$0xf]
    %v3562 = vld [vmem:[%s3332 + $0x394] sm:$0xf]
    %v3563 = vld [vmem:[%s3332 + $0x398] sm:$0xf]
    %v3564 = vld [vmem:[%s3332 + $0x39c] sm:$0xf]
    %v3565 = vld [vmem:[%s3332 + $0x3a0] sm:$0xf]
    %v3566 = vld [vmem:[%s3332 + $0x3a4] sm:$0xf]
    %v3567 = vld [vmem:[%s3332 + $0x3a8] sm:$0xf]
    %v3568 = vld [vmem:[%s3332 + $0x3ac] sm:$0xf]
    %v3569 = vld [vmem:[%s3332 + $0x3b0] sm:$0xf]
    %v3570 = vld [vmem:[%s3332 + $0x3b4] sm:$0xf]
    %v3571 = vld [vmem:[%s3332 + $0x3b8] sm:$0xf]
    %v3572 = vld [vmem:[%s3332 + $0x3bc] sm:$0xf]
    %v3573 = vld [vmem:[%s3332 + $0x3c0] sm:$0xf]
    %v3574 = vld [vmem:[%s3332 + $0x3c4] sm:$0xf]
    %v3575 = vld [vmem:[%s3332 + $0x3c8] sm:$0xf]
    %v3576 = vld [vmem:[%s3332 + $0x3cc] sm:$0xf]
    %v3577 = vld [vmem:[%s3332 + $0x3d0] sm:$0xf]
    %v3578 = vld [vmem:[%s3332 + $0x3d4] sm:$0xf]
    %v3579 = vld [vmem:[%s3332 + $0x3d8] sm:$0xf]
    %v3580 = vld [vmem:[%s3332 + $0x3dc] sm:$0xf]
    %v3581 = vld [vmem:[%s3332 + $0x3e0] sm:$0xf]
    %v3582 = vld [vmem:[%s3332 + $0x3e4] sm:$0xf]
    %v3583 = vld [vmem:[%s3332 + $0x3e8] sm:$0xf]
    %v3584 = vld [vmem:[%s3332 + $0x3ec] sm:$0xf]
    %v3585 = vld [vmem:[%s3332 + $0x3f0] sm:$0xf]
    %v3586 = vld [vmem:[%s3332 + $0x3f4] sm:$0xf]
    %v3587 = vld [vmem:[%s3332 + $0x3f8] sm:$0xf]
    %v3588 = vld [vmem:[%s3332 + $0x3fc] sm:$0xf]
    %v3589 = vmul.f32 %v3330, %v3330
    %v3590 = vmul.f32 %v3331, %v3331
    %3591 = vadd.xlane.f32.xlu0 %v3589
    %v3592 = vpop.xlane.xlu0 %3591
    %3593 = vadd.xlane.f32.xlu0 %v3590
    %v3594 = vpop.xlane.xlu0 %3593
    %v3595 = vmul.f32 %v3592, %v309
    %v3596 = vmul.f32 %v3594, %v309
    %v3597 = vadd.f32 %v3595, 1e-05
    %v3598 = vadd.f32 %v3596, 1e-05
    %v3599 = vrsqrt.pop %v3597
    %v3600 = vrsqrt.pop %v3598
    %v3601 = vmul.f32 %v3330, %v3599
    %v3602 = vmul.f32 %v3331, %v3600
    %v3603 = vpack.c.bf16 %v3602, %v3601
    %v3620 = vunpack.c.l.b16 %v3333
    %v3621 = vunpack.c.l.b16 %v3334
    %v3622 = vunpack.c.l.b16 %v3335
    %v3623 = vunpack.c.l.b16 %v3336
    %v3624 = vunpack.c.l.b16 %v3337
    %v3625 = vunpack.c.l.b16 %v3338
    %v3626 = vunpack.c.l.b16 %v3339
    %v3627 = vunpack.c.l.b16 %v3340
    %v3628 = vunpack.c.l.b16 %v3341
    %v3629 = vunpack.c.l.b16 %v3342
    %v3630 = vunpack.c.l.b16 %v3343
    %v3631 = vunpack.c.l.b16 %v3344
    %v3632 = vunpack.c.l.b16 %v3345
    %v3633 = vunpack.c.l.b16 %v3346
    %v3634 = vunpack.c.l.b16 %v3347
    %v3635 = vunpack.c.l.b16 %v3348
    %v3636 = vpack.c.b16 %v3621, %v3620
    %v3637 = vpack.c.b16 %v3623, %v3622
    %v3638 = vpack.c.b16 %v3625, %v3624
    %v3639 = vpack.c.b16 %v3627, %v3626
    %v3640 = vpack.c.b16 %v3629, %v3628
    %v3641 = vpack.c.b16 %v3631, %v3630
    %v3642 = vpack.c.b16 %v3633, %v3632
    %v3643 = vpack.c.b16 %v3635, %v3634
    %3652 = vmatprep.subr.bf16.mxu0 0
    %3653 = vmatpush1.bf16.msra.mxu0 %v3636
    %3654 = vmatprep.subr.bf16.mxu0 0
    %3655 = vmatpush1.bf16.msra.mxu0 %v3637
    %3656 = vmatprep.subr.bf16.mxu0 0
    %3657 = vmatpush1.bf16.msra.mxu0 %v3638
    %3658 = vmatprep.subr.bf16.mxu0 0
    %3659 = vmatpush1.bf16.msra.mxu0 %v3639
    %3660 = vmatprep.subr.bf16.mxu0 0
    %3661 = vmatpush1.bf16.msra.mxu0 %v3640
    %3662 = vmatprep.subr.bf16.mxu0 0
    %3663 = vmatpush1.bf16.msra.mxu0 %v3641
    %3664 = vmatprep.subr.bf16.mxu0 0
    %3665 = vmatpush1.bf16.msra.mxu0 %v3642
    %3666 = vmatprep.subr.bf16.mxu0 0
    %3667 = vmatpush1.bf16.msra.mxu0 %v3643
    %3668 = vmatprep.subr.bf16.mxu0 0
    %3669 = vmatpush1.bf16.msra.mxu0 0
    %3670 = vmatprep.subr.bf16.mxu0 0
    %3671 = vmatpush1.bf16.msra.mxu0 0
    %3672 = vmatprep.subr.bf16.mxu0 0
    %3673 = vmatpush1.bf16.msra.mxu0 0
    %3674 = vmatprep.subr.bf16.mxu0 0
    %3675 = vmatpush1.bf16.msra.mxu0 0
    %3676 = vmatprep.subr.bf16.mxu0 0
    %3677 = vmatpush1.bf16.msra.mxu0 0
    %3678 = vmatprep.subr.bf16.mxu0 0
    %3679 = vmatpush1.bf16.msra.mxu0 0
    %3680 = vmatprep.subr.bf16.mxu0 0
    %3681 = vmatpush1.bf16.msra.mxu0 0
    %3682 = vmatprep.subr.bf16.mxu0 0
    %3683 = vmatpush1.bf16.msra.mxu0 0
    %3684 = vmatprep.mubr.bf16.mxu0 0
    %3685 = vmatmul.mubr.bf16.gmra.mrb[0].mxu0 %v3603
    %v3686 = vpop.f32.mrb[0].mxu0
    %v3687 = vadd.f32 0.0, %v3686
    %v3688 = vpop.f32.mrb[0].mxu0
    %v3689 = vpop.f32.mrb[0].mxu0
    %v3690 = vadd.f32 0.0, %v3689
    %v3691 = vpop.f32.mrb[0].mxu0
    %3692 = vdwg.mxu0
    %v3709 = vunpack.c.l.b16 %v3349
    %v3710 = vunpack.c.l.b16 %v3350
    %v3711 = vunpack.c.l.b16 %v3351
    %v3712 = vunpack.c.l.b16 %v3352
    %v3713 = vunpack.c.l.b16 %v3353
    %v3714 = vunpack.c.l.b16 %v3354
    %v3715 = vunpack.c.l.b16 %v3355
    %v3716 = vunpack.c.l.b16 %v3356
    %v3717 = vunpack.c.l.b16 %v3357
    %v3718 = vunpack.c.l.b16 %v3358
    %v3719 = vunpack.c.l.b16 %v3359
    %v3720 = vunpack.c.l.b16 %v3360
    %v3721 = vunpack.c.l.b16 %v3361
    %v3722 = vunpack.c.l.b16 %v3362
    %v3723 = vunpack.c.l.b16 %v3363
    %v3724 = vunpack.c.l.b16 %v3364
    %v3725 = vpack.c.b16 %v3710, %v3709
    %v3726 = vpack.c.b16 %v3712, %v3711
    %v3727 = vpack.c.b16 %v3714, %v3713
    %v3728 = vpack.c.b16 %v3716, %v3715
    %v3729 = vpack.c.b16 %v3718, %v3717
    %v3730 = vpack.c.b16 %v3720, %v3719
    %v3731 = vpack.c.b16 %v3722, %v3721
    %v3732 = vpack.c.b16 %v3724, %v3723
    %3741 = vmatprep.subr.bf16.mxu0 0
    %3742 = vmatpush1.bf16.msra.mxu0 %v3725
    %3743 = vmatprep.subr.bf16.mxu0 0
    %3744 = vmatpush1.bf16.msra.mxu0 %v3726
    %3745 = vmatprep.subr.bf16.mxu0 0
    %3746 = vmatpush1.bf16.msra.mxu0 %v3727
    %3747 = vmatprep.subr.bf16.mxu0 0
    %3748 = vmatpush1.bf16.msra.mxu0 %v3728
    %3749 = vmatprep.subr.bf16.mxu0 0
    %3750 = vmatpush1.bf16.msra.mxu0 %v3729
    %3751 = vmatprep.subr.bf16.mxu0 0
    %3752 = vmatpush1.bf16.msra.mxu0 %v3730
    %3753 = vmatprep.subr.bf16.mxu0 0
    %3754 = vmatpush1.bf16.msra.mxu0 %v3731
    %3755 = vmatprep.subr.bf16.mxu0 0
    %3756 = vmatpush1.bf16.msra.mxu0 %v3732
    %3757 = vmatprep.subr.bf16.mxu0 0
    %3758 = vmatpush1.bf16.msra.mxu0 0
    %3759 = vmatprep.subr.bf16.mxu0 0
    %3760 = vmatpush1.bf16.msra.mxu0 0
    %3761 = vmatprep.subr.bf16.mxu0 0
    %3762 = vmatpush1.bf16.msra.mxu0 0
    %3763 = vmatprep.subr.bf16.mxu0 0
    %3764 = vmatpush1.bf16.msra.mxu0 0
    %3765 = vmatprep.subr.bf16.mxu0 0
    %3766 = vmatpush1.bf16.msra.mxu0 0
    %3767 = vmatprep.subr.bf16.mxu0 0
    %3768 = vmatpush1.bf16.msra.mxu0 0
    %3769 = vmatprep.subr.bf16.mxu0 0
    %3770 = vmatpush1.bf16.msra.mxu0 0
    %3771 = vmatprep.subr.bf16.mxu0 0
    %3772 = vmatpush1.bf16.msra.mxu0 0
    %3773 = vmatprep.mubr.bf16.mxu0 0
    %3774 = vmatmul.mubr.bf16.gmra.mrb[0].mxu0 %v3603
    %v3775 = vpop.f32.mrb[0].mxu0
    %v3776 = vadd.f32 0.0, %v3775
    %v3777 = vpop.f32.mrb[0].mxu0
    %v3778 = vpop.f32.mrb[0].mxu0
    %v3779 = vadd.f32 0.0, %v3778
    %v3780 = vpop.f32.mrb[0].mxu0
    %3781 = vdwg.mxu0
    %v3798 = vunpack.c.l.b16 %v3365
    %v3799 = vunpack.c.l.b16 %v3366
    %v3800 = vunpack.c.l.b16 %v3367
    %v3801 = vunpack.c.l.b16 %v3368
    %v3802 = vunpack.c.l.b16 %v3369
    %v3803 = vunpack.c.l.b16 %v3370
    %v3804 = vunpack.c.l.b16 %v3371
    %v3805 = vunpack.c.l.b16 %v3372
    %v3806 = vunpack.c.l.b16 %v3373
    %v3807 = vunpack.c.l.b16 %v3374
    %v3808 = vunpack.c.l.b16 %v3375
    %v3809 = vunpack.c.l.b16 %v3376
    %v3810 = vunpack.c.l.b16 %v3377
    %v3811 = vunpack.c.l.b16 %v3378
    %v3812 = vunpack.c.l.b16 %v3379
    %v3813 = vunpack.c.l.b16 %v3380
    %v3814 = vpack.c.b16 %v3799, %v3798
    %v3815 = vpack.c.b16 %v3801, %v3800
    %v3816 = vpack.c.b16 %v3803, %v3802
    %v3817 = vpack.c.b16 %v3805, %v3804
    %v3818 = vpack.c.b16 %v3807, %v3806
    %v3819 = vpack.c.b16 %v3809, %v3808
    %v3820 = vpack.c.b16 %v3811, %v3810
    %v3821 = vpack.c.b16 %v3813, %v3812
    %3830 = vmatprep.subr.bf16.mxu0 0
    %3831 = vmatpush1.bf16.msra.mxu0 %v3814
    %3832 = vmatprep.subr.bf16.mxu0 0
    %3833 = vmatpush1.bf16.msra.mxu0 %v3815
    %3834 = vmatprep.subr.bf16.mxu0 0
    %3835 = vmatpush1.bf16.msra.mxu0 %v3816
    %3836 = vmatprep.subr.bf16.mxu0 0
    %3837 = vmatpush1.bf16.msra.mxu0 %v3817
    %3838 = vmatprep.subr.bf16.mxu0 0
    %3839 = vmatpush1.bf16.msra.mxu0 %v3818
    %3840 = vmatprep.subr.bf16.mxu0 0
    %3841 = vmatpush1.bf16.msra.mxu0 %v3819
    %3842 = vmatprep.subr.bf16.mxu0 0
    %3843 = vmatpush1.bf16.msra.mxu0 %v3820
    %3844 = vmatprep.subr.bf16.mxu0 0
    %3845 = vmatpush1.bf16.msra.mxu0 %v3821
    %3846 = vmatprep.subr.bf16.mxu0 0
    %3847 = vmatpush1.bf16.msra.mxu0 0
    %3848 = vmatprep.subr.bf16.mxu0 0
    %3849 = vmatpush1.bf16.msra.mxu0 0
    %3850 = vmatprep.subr.bf16.mxu0 0
    %3851 = vmatpush1.bf16.msra.mxu0 0
    %3852 = vmatprep.subr.bf16.mxu0 0
    %3853 = vmatpush1.bf16.msra.mxu0 0
    %3854 = vmatprep.subr.bf16.mxu0 0
    %3855 = vmatpush1.bf16.msra.mxu0 0
    %3856 = vmatprep.subr.bf16.mxu0 0
    %3857 = vmatpush1.bf16.msra.mxu0 0
    %3858 = vmatprep.subr.bf16.mxu0 0
    %3859 = vmatpush1.bf16.msra.mxu0 0
    %3860 = vmatprep.subr.bf16.mxu0 0
    %3861 = vmatpush1.bf16.msra.mxu0 0
    %3862 = vmatprep.mubr.bf16.mxu0 0
    %3863 = vmatmul.mubr.bf16.gmra.mrb[0].mxu0 %v3603
    %v3864 = vpop.f32.mrb[0].mxu0
    %v3865 = vadd.f32 0.0, %v3864
    %v3866 = vpop.f32.mrb[0].mxu0
    %v3867 = vpop.f32.mrb[0].mxu0
    %v3868 = vadd.f32 0.0, %v3867
    %v3869 = vpop.f32.mrb[0].mxu0
    %3870 = vdwg.mxu0
    %v3887 = vunpack.c.l.b16 %v3381
    %v3888 = vunpack.c.l.b16 %v3382
    %v3889 = vunpack.c.l.b16 %v3383
    %v3890 = vunpack.c.l.b16 %v3384
    %v3891 = vunpack.c.l.b16 %v3385
    %v3892 = vunpack.c.l.b16 %v3386
    %v3893 = vunpack.c.l.b16 %v3387
    %v3894 = vunpack.c.l.b16 %v3388
    %v3895 = vunpack.c.l.b16 %v3389
    %v3896 = vunpack.c.l.b16 %v3390
    %v3897 = vunpack.c.l.b16 %v3391
    %v3898 = vunpack.c.l.b16 %v3392
    %v3899 = vunpack.c.l.b16 %v3393
    %v3900 = vunpack.c.l.b16 %v3394
    %v3901 = vunpack.c.l.b16 %v3395
    %v3902 = vunpack.c.l.b16 %v3396
    %v3903 = vpack.c.b16 %v3888, %v3887
    %v3904 = vpack.c.b16 %v3890, %v3889
    %v3905 = vpack.c.b16 %v3892, %v3891
    %v3906 = vpack.c.b16 %v3894, %v3893
    %v3907 = vpack.c.b16 %v3896, %v3895
    %v3908 = vpack.c.b16 %v3898, %v3897
    %v3909 = vpack.c.b16 %v3900, %v3899
    %v3910 = vpack.c.b16 %v3902, %v3901
    %3919 = vmatprep.subr.bf16.mxu0 0
    %3920 = vmatpush1.bf16.msra.mxu0 %v3903
    %3921 = vmatprep.subr.bf16.mxu0 0
    %3922 = vmatpush1.bf16.msra.mxu0 %v3904
    %3923 = vmatprep.subr.bf16.mxu0 0
    %3924 = vmatpush1.bf16.msra.mxu0 %v3905
    %3925 = vmatprep.subr.bf16.mxu0 0
    %3926 = vmatpush1.bf16.msra.mxu0 %v3906
    %3927 = vmatprep.subr.bf16.mxu0 0
    %3928 = vmatpush1.bf16.msra.mxu0 %v3907
    %3929 = vmatprep.subr.bf16.mxu0 0
    %3930 = vmatpush1.bf16.msra.mxu0 %v3908
    %3931 = vmatprep.subr.bf16.mxu0 0
    %3932 = vmatpush1.bf16.msra.mxu0 %v3909
    %3933 = vmatprep.subr.bf16.mxu0 0
    %3934 = vmatpush1.bf16.msra.mxu0 %v3910
    %3935 = vmatprep.subr.bf16.mxu0 0
    %3936 = vmatpush1.bf16.msra.mxu0 0
    %3937 = vmatprep.subr.bf16.mxu0 0
    %3938 = vmatpush1.bf16.msra.mxu0 0
    %3939 = vmatprep.subr.bf16.mxu0 0
    %3940 = vmatpush1.bf16.msra.mxu0 0
    %3941 = vmatprep.subr.bf16.mxu0 0
    %3942 = vmatpush1.bf16.msra.mxu0 0
    %3943 = vmatprep.subr.bf16.mxu0 0
    %3944 = vmatpush1.bf16.msra.mxu0 0
    %3945 = vmatprep.subr.bf16.mxu0 0
    %3946 = vmatpush1.bf16.msra.mxu0 0
    %3947 = vmatprep.subr.bf16.mxu0 0
    %3948 = vmatpush1.bf16.msra.mxu0 0
    %3949 = vmatprep.subr.bf16.mxu0 0
    %3950 = vmatpush1.bf16.msra.mxu0 0
    %3951 = vmatprep.mubr.bf16.mxu0 0
    %3952 = vmatmul.mubr.bf16.gmra.mrb[0].mxu0 %v3603
    %v3953 = vpop.f32.mrb[0].mxu0
    %v3954 = vadd.f32 0.0, %v3953
    %v3955 = vpop.f32.mrb[0].mxu0
    %v3956 = vpop.f32.mrb[0].mxu0
    %v3957 = vadd.f32 0.0, %v3956
    %v3958 = vpop.f32.mrb[0].mxu0
    %3959 = vdwg.mxu0
    %v3976 = vunpack.c.l.b16 %v3397
    %v3977 = vunpack.c.l.b16 %v3398
    %v3978 = vunpack.c.l.b16 %v3399
    %v3979 = vunpack.c.l.b16 %v3400
    %v3980 = vunpack.c.l.b16 %v3401
    %v3981 = vunpack.c.l.b16 %v3402
    %v3982 = vunpack.c.l.b16 %v3403
    %v3983 = vunpack.c.l.b16 %v3404
    %v3984 = vunpack.c.l.b16 %v3405
    %v3985 = vunpack.c.l.b16 %v3406
    %v3986 = vunpack.c.l.b16 %v3407
    %v3987 = vunpack.c.l.b16 %v3408
    %v3988 = vunpack.c.l.b16 %v3409
    %v3989 = vunpack.c.l.b16 %v3410
    %v3990 = vunpack.c.l.b16 %v3411
    %v3991 = vunpack.c.l.b16 %v3412
    %v3992 = vpack.c.b16 %v3977, %v3976
    %v3993 = vpack.c.b16 %v3979, %v3978
    %v3994 = vpack.c.b16 %v3981, %v3980
    %v3995 = vpack.c.b16 %v3983, %v3982
    %v3996 = vpack.c.b16 %v3985, %v3984
    %v3997 = vpack.c.b16 %v3987, %v3986
    %v3998 = vpack.c.b16 %v3989, %v3988
    %v3999 = vpack.c.b16 %v3991, %v3990
    %4008 = vmatprep.subr.bf16.mxu0 0
    %4009 = vmatpush1.bf16.msra.mxu0 %v3992
    %4010 = vmatprep.subr.bf16.mxu0 0
    %4011 = vmatpush1.bf16.msra.mxu0 %v3993
    %4012 = vmatprep.subr.bf16.mxu0 0
    %4013 = vmatpush1.bf16.msra.mxu0 %v3994
    %4014 = vmatprep.subr.bf16.mxu0 0
    %4015 = vmatpush1.bf16.msra.mxu0 %v3995
    %4016 = vmatprep.subr.bf16.mxu0 0
    %4017 = vmatpush1.bf16.msra.mxu0 %v3996
    %4018 = vmatprep.subr.bf16.mxu0 0
    %4019 = vmatpush1.bf16.msra.mxu0 %v3997
    %4020 = vmatprep.subr.bf16.mxu0 0
    %4021 = vmatpush1.bf16.msra.mxu0 %v3998
    %4022 = vmatprep.subr.bf16.mxu0 0
    %4023 = vmatpush1.bf16.msra.mxu0 %v3999
    %4024 = vmatprep.subr.bf16.mxu0 0
    %4025 = vmatpush1.bf16.msra.mxu0 0
    %4026 = vmatprep.subr.bf16.mxu0 0
    %4027 = vmatpush1.bf16.msra.mxu0 0
    %4028 = vmatprep.subr.bf16.mxu0 0
    %4029 = vmatpush1.bf16.msra.mxu0 0
    %4030 = vmatprep.subr.bf16.mxu0 0
    %4031 = vmatpush1.bf16.msra.mxu0 0
    %4032 = vmatprep.subr.bf16.mxu0 0
    %4033 = vmatpush1.bf16.msra.mxu0 0
    %4034 = vmatprep.subr.bf16.mxu0 0
    %4035 = vmatpush1.bf16.msra.mxu0 0
    %4036 = vmatprep.subr.bf16.mxu0 0
    %4037 = vmatpush1.bf16.msra.mxu0 0
    %4038 = vmatprep.subr.bf16.mxu0 0
    %4039 = vmatpush1.bf16.msra.mxu0 0
    %4040 = vmatprep.mubr.bf16.mxu0 0
    %4041 = vmatmul.mubr.bf16.gmra.mrb[0].mxu0 %v3603
    %v4042 = vpop.f32.mrb[0].mxu0
    %v4043 = vadd.f32 0.0, %v4042
    %v4044 = vpop.f32.mrb[0].mxu0
    %v4045 = vpop.f32.mrb[0].mxu0
    %v4046 = vadd.f32 0.0, %v4045
    %v4047 = vpop.f32.mrb[0].mxu0
    %4048 = vdwg.mxu0
    %v4065 = vunpack.c.l.b16 %v3413
    %v4066 = vunpack.c.l.b16 %v3414
    %v4067 = vunpack.c.l.b16 %v3415
    %v4068 = vunpack.c.l.b16 %v3416
    %v4069 = vunpack.c.l.b16 %v3417
    %v4070 = vunpack.c.l.b16 %v3418
    %v4071 = vunpack.c.l.b16 %v3419
    %v4072 = vunpack.c.l.b16 %v3420
    %v4073 = vunpack.c.l.b16 %v3421
    %v4074 = vunpack.c.l.b16 %v3422
    %v4075 = vunpack.c.l.b16 %v3423
    %v4076 = vunpack.c.l.b16 %v3424
    %v4077 = vunpack.c.l.b16 %v3425
    %v4078 = vunpack.c.l.b16 %v3426
    %v4079 = vunpack.c.l.b16 %v3427
    %v4080 = vunpack.c.l.b16 %v3428
    %v4081 = vpack.c.b16 %v4066, %v4065
    %v4082 = vpack.c.b16 %v4068, %v4067
    %v4083 = vpack.c.b16 %v4070, %v4069
    %v4084 = vpack.c.b16 %v4072, %v4071
    %v4085 = vpack.c.b16 %v4074, %v4073
    %v4086 = vpack.c.b16 %v4076, %v4075
    %v4087 = vpack.c.b16 %v4078, %v4077
    %v4088 = vpack.c.b16 %v4080, %v4079
    %4097 = vmatprep.subr.bf16.mxu0 0
    %4098 = vmatpush1.bf16.msra.mxu0 %v4081
    %4099 = vmatprep.subr.bf16.mxu0 0
    %4100 = vmatpush1.bf16.msra.mxu0 %v4082
    %4101 = vmatprep.subr.bf16.mxu0 0
    %4102 = vmatpush1.bf16.msra.mxu0 %v4083
    %4103 = vmatprep.subr.bf16.mxu0 0
    %4104 = vmatpush1.bf16.msra.mxu0 %v4084
    %4105 = vmatprep.subr.bf16.mxu0 0
    %4106 = vmatpush1.bf16.msra.mxu0 %v4085
    %4107 = vmatprep.subr.bf16.mxu0 0
    %4108 = vmatpush1.bf16.msra.mxu0 %v4086
    %4109 = vmatprep.subr.bf16.mxu0 0
    %4110 = vmatpush1.bf16.msra.mxu0 %v4087
    %4111 = vmatprep.subr.bf16.mxu0 0
    %4112 = vmatpush1.bf16.msra.mxu0 %v4088
    %4113 = vmatprep.subr.bf16.mxu0 0
    %4114 = vmatpush1.bf16.msra.mxu0 0
    %4115 = vmatprep.subr.bf16.mxu0 0
    %4116 = vmatpush1.bf16.msra.mxu0 0
    %4117 = vmatprep.subr.bf16.mxu0 0
    %4118 = vmatpush1.bf16.msra.mxu0 0
    %4119 = vmatprep.subr.bf16.mxu0 0
    %4120 = vmatpush1.bf16.msra.mxu0 0
    %4121 = vmatprep.subr.bf16.mxu0 0
    %4122 = vmatpush1.bf16.msra.mxu0 0
    %4123 = vmatprep.subr.bf16.mxu0 0
    %4124 = vmatpush1.bf16.msra.mxu0 0
    %4125 = vmatprep.subr.bf16.mxu0 0
    %4126 = vmatpush1.bf16.msra.mxu0 0
    %4127 = vmatprep.subr.bf16.mxu0 0
    %4128 = vmatpush1.bf16.msra.mxu0 0
    %4129 = vmatprep.mubr.bf16.mxu0 0
    %4130 = vmatmul.mubr.bf16.gmra.mrb[0].mxu0 %v3603
    %v4131 = vpop.f32.mrb[0].mxu0
    %v4132 = vadd.f32 0.0, %v4131
    %v4133 = vpop.f32.mrb[0].mxu0
    %v4134 = vpop.f32.mrb[0].mxu0
    %v4135 = vadd.f32 0.0, %v4134
    %v4136 = vpop.f32.mrb[0].mxu0
    %4137 = vdwg.mxu0
    %v4154 = vunpack.c.l.b16 %v3429
    %v4155 = vunpack.c.l.b16 %v3430
    %v4156 = vunpack.c.l.b16 %v3431
    %v4157 = vunpack.c.l.b16 %v3432
    %v4158 = vunpack.c.l.b16 %v3433
    %v4159 = vunpack.c.l.b16 %v3434
    %v4160 = vunpack.c.l.b16 %v3435
    %v4161 = vunpack.c.l.b16 %v3436
    %v4162 = vunpack.c.l.b16 %v3437
    %v4163 = vunpack.c.l.b16 %v3438
    %v4164 = vunpack.c.l.b16 %v3439
    %v4165 = vunpack.c.l.b16 %v3440
    %v4166 = vunpack.c.l.b16 %v3441
    %v4167 = vunpack.c.l.b16 %v3442
    %v4168 = vunpack.c.l.b16 %v3443
    %v4169 = vunpack.c.l.b16 %v3444
    %v4170 = vpack.c.b16 %v4155, %v4154
    %v4171 = vpack.c.b16 %v4157, %v4156
    %v4172 = vpack.c.b16 %v4159, %v4158
    %v4173 = vpack.c.b16 %v4161, %v4160
    %v4174 = vpack.c.b16 %v4163, %v4162
    %v4175 = vpack.c.b16 %v4165, %v4164
    %v4176 = vpack.c.b16 %v4167, %v4166
    %v4177 = vpack.c.b16 %v4169, %v4168
    %4186 = vmatprep.subr.bf16.mxu0 0
    %4187 = vmatpush1.bf16.msra.mxu0 %v4170
    %4188 = vmatprep.subr.bf16.mxu0 0
    %4189 = vmatpush1.bf16.msra.mxu0 %v4171
    %4190 = vmatprep.subr.bf16.mxu0 0
    %4191 = vmatpush1.bf16.msra.mxu0 %v4172
    %4192 = vmatprep.subr.bf16.mxu0 0
    %4193 = vmatpush1.bf16.msra.mxu0 %v4173
    %4194 = vmatprep.subr.bf16.mxu0 0
    %4195 = vmatpush1.bf16.msra.mxu0 %v4174
    %4196 = vmatprep.subr.bf16.mxu0 0
    %4197 = vmatpush1.bf16.msra.mxu0 %v4175
    %4198 = vmatprep.subr.bf16.mxu0 0
    %4199 = vmatpush1.bf16.msra.mxu0 %v4176
    %4200 = vmatprep.subr.bf16.mxu0 0
    %4201 = vmatpush1.bf16.msra.mxu0 %v4177
    %4202 = vmatprep.subr.bf16.mxu0 0
    %4203 = vmatpush1.bf16.msra.mxu0 0
    %4204 = vmatprep.subr.bf16.mxu0 0
    %4205 = vmatpush1.bf16.msra.mxu0 0
    %4206 = vmatprep.subr.bf16.mxu0 0
    %4207 = vmatpush1.bf16.msra.mxu0 0
    %4208 = vmatprep.subr.bf16.mxu0 0
    %4209 = vmatpush1.bf16.msra.mxu0 0
    %4210 = vmatprep.subr.bf16.mxu0 0
    %4211 = vmatpush1.bf16.msra.mxu0 0
    %4212 = vmatprep.subr.bf16.mxu0 0
    %4213 = vmatpush1.bf16.msra.mxu0 0
    %4214 = vmatprep.subr.bf16.mxu0 0
    %4215 = vmatpush1.bf16.msra.mxu0 0
    %4216 = vmatprep.subr.bf16.mxu0 0
    %4217 = vmatpush1.bf16.msra.mxu0 0
    %4218 = vmatprep.mubr.bf16.mxu0 0
    %4219 = vmatmul.mubr.bf16.gmra.mrb[0].mxu0 %v3603
    %v4220 = vpop.f32.mrb[0].mxu0
    %v4221 = vadd.f32 0.0, %v4220
    %v4222 = vpop.f32.mrb[0].mxu0
    %v4223 = vpop.f32.mrb[0].mxu0
    %v4224 = vadd.f32 0.0, %v4223
    %v4225 = vpop.f32.mrb[0].mxu0
    %4226 = vdwg.mxu0
    %v4243 = vunpack.c.l.b16 %v3445
    %v4244 = vunpack.c.l.b16 %v3446
    %v4245 = vunpack.c.l.b16 %v3447
    %v4246 = vunpack.c.l.b16 %v3448
    %v4247 = vunpack.c.l.b16 %v3449
    %v4248 = vunpack.c.l.b16 %v3450
    %v4249 = vunpack.c.l.b16 %v3451
    %v4250 = vunpack.c.l.b16 %v3452
    %v4251 = vunpack.c.l.b16 %v3453
    %v4252 = vunpack.c.l.b16 %v3454
    %v4253 = vunpack.c.l.b16 %v3455
    %v4254 = vunpack.c.l.b16 %v3456
    %v4255 = vunpack.c.l.b16 %v3457
    %v4256 = vunpack.c.l.b16 %v3458
    %v4257 = vunpack.c.l.b16 %v3459
    %v4258 = vunpack.c.l.b16 %v3460
    %v4259 = vpack.c.b16 %v4244, %v4243
    %v4260 = vpack.c.b16 %v4246, %v4245
    %v4261 = vpack.c.b16 %v4248, %v4247
    %v4262 = vpack.c.b16 %v4250, %v4249
    %v4263 = vpack.c.b16 %v4252, %v4251
    %v4264 = vpack.c.b16 %v4254, %v4253
    %v4265 = vpack.c.b16 %v4256, %v4255
    %v4266 = vpack.c.b16 %v4258, %v4257
    %4275 = vmatprep.subr.bf16.mxu0 0
    %4276 = vmatpush1.bf16.msra.mxu0 %v4259
    %4277 = vmatprep.subr.bf16.mxu0 0
    %4278 = vmatpush1.bf16.msra.mxu0 %v4260
    %4279 = vmatprep.subr.bf16.mxu0 0
    %4280 = vmatpush1.bf16.msra.mxu0 %v4261
    %4281 = vmatprep.subr.bf16.mxu0 0
    %4282 = vmatpush1.bf16.msra.mxu0 %v4262
    %4283 = vmatprep.subr.bf16.mxu0 0
    %4284 = vmatpush1.bf16.msra.mxu0 %v4263
    %4285 = vmatprep.subr.bf16.mxu0 0
    %4286 = vmatpush1.bf16.msra.mxu0 %v4264
    %4287 = vmatprep.subr.bf16.mxu0 0
    %4288 = vmatpush1.bf16.msra.mxu0 %v4265
    %4289 = vmatprep.subr.bf16.mxu0 0
    %4290 = vmatpush1.bf16.msra.mxu0 %v4266
    %4291 = vmatprep.subr.bf16.mxu0 0
    %4292 = vmatpush1.bf16.msra.mxu0 0
    %4293 = vmatprep.subr.bf16.mxu0 0
    %4294 = vmatpush1.bf16.msra.mxu0 0
    %4295 = vmatprep.subr.bf16.mxu0 0
    %4296 = vmatpush1.bf16.msra.mxu0 0
    %4297 = vmatprep.subr.bf16.mxu0 0
    %4298 = vmatpush1.bf16.msra.mxu0 0
    %4299 = vmatprep.subr.bf16.mxu0 0
    %4300 = vmatpush1.bf16.msra.mxu0 0
    %4301 = vmatprep.subr.bf16.mxu0 0
    %4302 = vmatpush1.bf16.msra.mxu0 0
    %4303 = vmatprep.subr.bf16.mxu0 0
    %4304 = vmatpush1.bf16.msra.mxu0 0
    %4305 = vmatprep.subr.bf16.mxu0 0
    %4306 = vmatpush1.bf16.msra.mxu0 0
    %4307 = vmatprep.mubr.bf16.mxu0 0
    %4308 = vmatmul.mubr.bf16.gmra.mrb[0].mxu0 %v3603
    %v4309 = vpop.f32.mrb[0].mxu0
    %v4310 = vadd.f32 0.0, %v4309
    %v4311 = vpop.f32.mrb[0].mxu0
    %v4312 = vpop.f32.mrb[0].mxu0
    %v4313 = vadd.f32 0.0, %v4312
    %v4314 = vpop.f32.mrb[0].mxu0
    %4315 = vdwg.mxu0
    %v4332 = vunpack.c.l.b16 %v3461
    %v4333 = vunpack.c.l.b16 %v3462
    %v4334 = vunpack.c.l.b16 %v3463
    %v4335 = vunpack.c.l.b16 %v3464
    %v4336 = vunpack.c.l.b16 %v3465
    %v4337 = vunpack.c.l.b16 %v3466
    %v4338 = vunpack.c.l.b16 %v3467
    %v4339 = vunpack.c.l.b16 %v3468
    %v4340 = vunpack.c.l.b16 %v3469
    %v4341 = vunpack.c.l.b16 %v3470
    %v4342 = vunpack.c.l.b16 %v3471
    %v4343 = vunpack.c.l.b16 %v3472
    %v4344 = vunpack.c.l.b16 %v3473
    %v4345 = vunpack.c.l.b16 %v3474
    %v4346 = vunpack.c.l.b16 %v3475
    %v4347 = vunpack.c.l.b16 %v3476
    %v4348 = vpack.c.b16 %v4333, %v4332
    %v4349 = vpack.c.b16 %v4335, %v4334
    %v4350 = vpack.c.b16 %v4337, %v4336
    %v4351 = vpack.c.b16 %v4339, %v4338
    %v4352 = vpack.c.b16 %v4341, %v4340
    %v4353 = vpack.c.b16 %v4343, %v4342
    %v4354 = vpack.c.b16 %v4345, %v4344
    %v4355 = vpack.c.b16 %v4347, %v4346
    %4364 = vmatprep.subr.bf16.mxu0 0
    %4365 = vmatpush1.bf16.msra.mxu0 %v4348
    %4366 = vmatprep.subr.bf16.mxu0 0
    %4367 = vmatpush1.bf16.msra.mxu0 %v4349
    %4368 = vmatprep.subr.bf16.mxu0 0
    %4369 = vmatpush1.bf16.msra.mxu0 %v4350
    %4370 = vmatprep.subr.bf16.mxu0 0
    %4371 = vmatpush1.bf16.msra.mxu0 %v4351
    %4372 = vmatprep.subr.bf16.mxu0 0
    %4373 = vmatpush1.bf16.msra.mxu0 %v4352
    %4374 = vmatprep.subr.bf16.mxu0 0
    %4375 = vmatpush1.bf16.msra.mxu0 %v4353
    %4376 = vmatprep.subr.bf16.mxu0 0
    %4377 = vmatpush1.bf16.msra.mxu0 %v4354
    %4378 = vmatprep.subr.bf16.mxu0 0
    %4379 = vmatpush1.bf16.msra.mxu0 %v4355
    %4380 = vmatprep.subr.bf16.mxu0 0
    %4381 = vmatpush1.bf16.msra.mxu0 0
    %4382 = vmatprep.subr.bf16.mxu0 0
    %4383 = vmatpush1.bf16.msra.mxu0 0
    %4384 = vmatprep.subr.bf16.mxu0 0
    %4385 = vmatpush1.bf16.msra.mxu0 0
    %4386 = vmatprep.subr.bf16.mxu0 0
    %4387 = vmatpush1.bf16.msra.mxu0 0
    %4388 = vmatprep.subr.bf16.mxu0 0
    %4389 = vmatpush1.bf16.msra.mxu0 0
    %4390 = vmatprep.subr.bf16.mxu0 0
    %4391 = vmatpush1.bf16.msra.mxu0 0
    %4392 = vmatprep.subr.bf16.mxu0 0
    %4393 = vmatpush1.bf16.msra.mxu0 0
    %4394 = vmatprep.subr.bf16.mxu0 0
    %4395 = vmatpush1.bf16.msra.mxu0 0
    %4396 = vmatprep.mubr.bf16.mxu0 0
    %4397 = vmatmul.mubr.bf16.gmra.mrb[0].mxu0 %v3603
    %v4398 = vpop.f32.mrb[0].mxu0
    %v4399 = vadd.f32 0.0, %v4398
    %v4400 = vpop.f32.mrb[0].mxu0
    %v4401 = vpop.f32.mrb[0].mxu0
    %v4402 = vadd.f32 0.0, %v4401
    %v4403 = vpop.f32.mrb[0].mxu0
    %4404 = vdwg.mxu0
    %v4421 = vunpack.c.l.b16 %v3477
    %v4422 = vunpack.c.l.b16 %v3478
    %v4423 = vunpack.c.l.b16 %v3479
    %v4424 = vunpack.c.l.b16 %v3480
    %v4425 = vunpack.c.l.b16 %v3481
    %v4426 = vunpack.c.l.b16 %v3482
    %v4427 = vunpack.c.l.b16 %v3483
    %v4428 = vunpack.c.l.b16 %v3484
    %v4429 = vunpack.c.l.b16 %v3485
    %v4430 = vunpack.c.l.b16 %v3486
    %v4431 = vunpack.c.l.b16 %v3487
    %v4432 = vunpack.c.l.b16 %v3488
    %v4433 = vunpack.c.l.b16 %v3489
    %v4434 = vunpack.c.l.b16 %v3490
    %v4435 = vunpack.c.l.b16 %v3491
    %v4436 = vunpack.c.l.b16 %v3492
    %v4437 = vpack.c.b16 %v4422, %v4421
    %v4438 = vpack.c.b16 %v4424, %v4423
    %v4439 = vpack.c.b16 %v4426, %v4425
    %v4440 = vpack.c.b16 %v4428, %v4427
    %v4441 = vpack.c.b16 %v4430, %v4429
    %v4442 = vpack.c.b16 %v4432, %v4431
    %v4443 = vpack.c.b16 %v4434, %v4433
    %v4444 = vpack.c.b16 %v4436, %v4435
    %4453 = vmatprep.subr.bf16.mxu0 0
    %4454 = vmatpush1.bf16.msra.mxu0 %v4437
    %4455 = vmatprep.subr.bf16.mxu0 0
    %4456 = vmatpush1.bf16.msra.mxu0 %v4438
    %4457 = vmatprep.subr.bf16.mxu0 0
    %4458 = vmatpush1.bf16.msra.mxu0 %v4439
    %4459 = vmatprep.subr.bf16.mxu0 0
    %4460 = vmatpush1.bf16.msra.mxu0 %v4440
    %4461 = vmatprep.subr.bf16.mxu0 0
    %4462 = vmatpush1.bf16.msra.mxu0 %v4441
    %4463 = vmatprep.subr.bf16.mxu0 0
    %4464 = vmatpush1.bf16.msra.mxu0 %v4442
    %4465 = vmatprep.subr.bf16.mxu0 0
    %4466 = vmatpush1.bf16.msra.mxu0 %v4443
    %4467 = vmatprep.subr.bf16.mxu0 0
    %4468 = vmatpush1.bf16.msra.mxu0 %v4444
    %4469 = vmatprep.subr.bf16.mxu0 0
    %4470 = vmatpush1.bf16.msra.mxu0 0
    %4471 = vmatprep.subr.bf16.mxu0 0
    %4472 = vmatpush1.bf16.msra.mxu0 0
    %4473 = vmatprep.subr.bf16.mxu0 0
    %4474 = vmatpush1.bf16.msra.mxu0 0
    %4475 = vmatprep.subr.bf16.mxu0 0
    %4476 = vmatpush1.bf16.msra.mxu0 0
    %4477 = vmatprep.subr.bf16.mxu0 0
    %4478 = vmatpush1.bf16.msra.mxu0 0
    %4479 = vmatprep.subr.bf16.mxu0 0
    %4480 = vmatpush1.bf16.msra.mxu0 0
    %4481 = vmatprep.subr.bf16.mxu0 0
    %4482 = vmatpush1.bf16.msra.mxu0 0
    %4483 = vmatprep.subr.bf16.mxu0 0
    %4484 = vmatpush1.bf16.msra.mxu0 0
    %4485 = vmatprep.mubr.bf16.mxu0 0
    %4486 = vmatmul.mubr.bf16.gmra.mrb[0].mxu0 %v3603
    %v4487 = vpop.f32.mrb[0].mxu0
    %v4488 = vadd.f32 0.0, %v4487
    %v4489 = vpop.f32.mrb[0].mxu0
    %v4490 = vpop.f32.mrb[0].mxu0
    %v4491 = vadd.f32 0.0, %v4490
    %v4492 = vpop.f32.mrb[0].mxu0
    %4493 = vdwg.mxu0
    %v4510 = vunpack.c.l.b16 %v3493
    %v4511 = vunpack.c.l.b16 %v3494
    %v4512 = vunpack.c.l.b16 %v3495
    %v4513 = vunpack.c.l.b16 %v3496
    %v4514 = vunpack.c.l.b16 %v3497
    %v4515 = vunpack.c.l.b16 %v3498
    %v4516 = vunpack.c.l.b16 %v3499
    %v4517 = vunpack.c.l.b16 %v3500
    %v4518 = vunpack.c.l.b16 %v3501
    %v4519 = vunpack.c.l.b16 %v3502
    %v4520 = vunpack.c.l.b16 %v3503
    %v4521 = vunpack.c.l.b16 %v3504
    %v4522 = vunpack.c.l.b16 %v3505
    %v4523 = vunpack.c.l.b16 %v3506
    %v4524 = vunpack.c.l.b16 %v3507
    %v4525 = vunpack.c.l.b16 %v3508
    %v4526 = vpack.c.b16 %v4511, %v4510
    %v4527 = vpack.c.b16 %v4513, %v4512
    %v4528 = vpack.c.b16 %v4515, %v4514
    %v4529 = vpack.c.b16 %v4517, %v4516
    %v4530 = vpack.c.b16 %v4519, %v4518
    %v4531 = vpack.c.b16 %v4521, %v4520
    %v4532 = vpack.c.b16 %v4523, %v4522
    %v4533 = vpack.c.b16 %v4525, %v4524
    %4542 = vmatprep.subr.bf16.mxu0 0
    %4543 = vmatpush1.bf16.msra.mxu0 %v4526
    %4544 = vmatprep.subr.bf16.mxu0 0
    %4545 = vmatpush1.bf16.msra.mxu0 %v4527
    %4546 = vmatprep.subr.bf16.mxu0 0
    %4547 = vmatpush1.bf16.msra.mxu0 %v4528
    %4548 = vmatprep.subr.bf16.mxu0 0
    %4549 = vmatpush1.bf16.msra.mxu0 %v4529
    %4550 = vmatprep.subr.bf16.mxu0 0
    %4551 = vmatpush1.bf16.msra.mxu0 %v4530
    %4552 = vmatprep.subr.bf16.mxu0 0
    %4553 = vmatpush1.bf16.msra.mxu0 %v4531
    %4554 = vmatprep.subr.bf16.mxu0 0
    %4555 = vmatpush1.bf16.msra.mxu0 %v4532
    %4556 = vmatprep.subr.bf16.mxu0 0
    %4557 = vmatpush1.bf16.msra.mxu0 %v4533
    %4558 = vmatprep.subr.bf16.mxu0 0
    %4559 = vmatpush1.bf16.msra.mxu0 0
    %4560 = vmatprep.subr.bf16.mxu0 0
    %4561 = vmatpush1.bf16.msra.mxu0 0
    %4562 = vmatprep.subr.bf16.mxu0 0
    %4563 = vmatpush1.bf16.msra.mxu0 0
    %4564 = vmatprep.subr.bf16.mxu0 0
    %4565 = vmatpush1.bf16.msra.mxu0 0
    %4566 = vmatprep.subr.bf16.mxu0 0
    %4567 = vmatpush1.bf16.msra.mxu0 0
    %4568 = vmatprep.subr.bf16.mxu0 0
    %4569 = vmatpush1.bf16.msra.mxu0 0
    %4570 = vmatprep.subr.bf16.mxu0 0
    %4571 = vmatpush1.bf16.msra.mxu0 0
    %4572 = vmatprep.subr.bf16.mxu0 0
    %4573 = vmatpush1.bf16.msra.mxu0 0
    %4574 = vmatprep.mubr.bf16.mxu0 0
    %4575 = vmatmul.mubr.bf16.gmra.mrb[0].mxu0 %v3603
    %v4576 = vpop.f32.mrb[0].mxu0
    %v4577 = vadd.f32 0.0, %v4576
    %v4578 = vpop.f32.mrb[0].mxu0
    %v4579 = vpop.f32.mrb[0].mxu0
    %v4580 = vadd.f32 0.0, %v4579
    %v4581 = vpop.f32.mrb[0].mxu0
    %4582 = vdwg.mxu0
    %v4599 = vunpack.c.l.b16 %v3509
    %v4600 = vunpack.c.l.b16 %v3510
    %v4601 = vunpack.c.l.b16 %v3511
    %v4602 = vunpack.c.l.b16 %v3512
    %v4603 = vunpack.c.l.b16 %v3513
    %v4604 = vunpack.c.l.b16 %v3514
    %v4605 = vunpack.c.l.b16 %v3515
    %v4606 = vunpack.c.l.b16 %v3516
    %v4607 = vunpack.c.l.b16 %v3517
    %v4608 = vunpack.c.l.b16 %v3518
    %v4609 = vunpack.c.l.b16 %v3519
    %v4610 = vunpack.c.l.b16 %v3520
    %v4611 = vunpack.c.l.b16 %v3521
    %v4612 = vunpack.c.l.b16 %v3522
    %v4613 = vunpack.c.l.b16 %v3523
    %v4614 = vunpack.c.l.b16 %v3524
    %v4615 = vpack.c.b16 %v4600, %v4599
    %v4616 = vpack.c.b16 %v4602, %v4601
    %v4617 = vpack.c.b16 %v4604, %v4603
    %v4618 = vpack.c.b16 %v4606, %v4605
    %v4619 = vpack.c.b16 %v4608, %v4607
    %v4620 = vpack.c.b16 %v4610, %v4609
    %v4621 = vpack.c.b16 %v4612, %v4611
    %v4622 = vpack.c.b16 %v4614, %v4613
    %4631 = vmatprep.subr.bf16.mxu0 0
    %4632 = vmatpush1.bf16.msra.mxu0 %v4615
    %4633 = vmatprep.subr.bf16.mxu0 0
    %4634 = vmatpush1.bf16.msra.mxu0 %v4616
    %4635 = vmatprep.subr.bf16.mxu0 0
    %4636 = vmatpush1.bf16.msra.mxu0 %v4617
    %4637 = vmatprep.subr.bf16.mxu0 0
    %4638 = vmatpush1.bf16.msra.mxu0 %v4618
    %4639 = vmatprep.subr.bf16.mxu0 0
    %4640 = vmatpush1.bf16.msra.mxu0 %v4619
    %4641 = vmatprep.subr.bf16.mxu0 0
    %4642 = vmatpush1.bf16.msra.mxu0 %v4620
    %4643 = vmatprep.subr.bf16.mxu0 0
    %4644 = vmatpush1.bf16.msra.mxu0 %v4621
    %4645 = vmatprep.subr.bf16.mxu0 0
    %4646 = vmatpush1.bf16.msra.mxu0 %v4622
    %4647 = vmatprep.subr.bf16.mxu0 0
    %4648 = vmatpush1.bf16.msra.mxu0 0
    %4649 = vmatprep.subr.bf16.mxu0 0
    %4650 = vmatpush1.bf16.msra.mxu0 0
    %4651 = vmatprep.subr.bf16.mxu0 0
    %4652 = vmatpush1.bf16.msra.mxu0 0
    %4653 = vmatprep.subr.bf16.mxu0 0
    %4654 = vmatpush1.bf16.msra.mxu0 0
    %4655 = vmatprep.subr.bf16.mxu0 0
    %4656 = vmatpush1.bf16.msra.mxu0 0
    %4657 = vmatprep.subr.bf16.mxu0 0
    %4658 = vmatpush1.bf16.msra.mxu0 0
    %4659 = vmatprep.subr.bf16.mxu0 0
    %4660 = vmatpush1.bf16.msra.mxu0 0
    %4661 = vmatprep.subr.bf16.mxu0 0
    %4662 = vmatpush1.bf16.msra.mxu0 0
    %4663 = vmatprep.mubr.bf16.mxu0 0
    %4664 = vmatmul.mubr.bf16.gmra.mrb[0].mxu0 %v3603
    %v4665 = vpop.f32.mrb[0].mxu0
    %v4666 = vadd.f32 0.0, %v4665
    %v4667 = vpop.f32.mrb[0].mxu0
    %v4668 = vpop.f32.mrb[0].mxu0
    %v4669 = vadd.f32 0.0, %v4668
    %v4670 = vpop.f32.mrb[0].mxu0
    %4671 = vdwg.mxu0
    %v4673 = vsel %vm1387, %v3687, 0
    %v4676 = vsel %vm1387, %v3690, 0
    %v4679 = vsel %vm1387, %v3776, 0
    %v4682 = vsel %vm1387, %v3779, 0
    %v4685 = vsel %vm1387, %v3865, 0
    %v4688 = vsel %vm1387, %v3868, 0
    %v4691 = vsel %vm1387, %v3954, 0
    %v4694 = vsel %vm1387, %v3957, 0
    %v4697 = vsel %vm1387, %v4043, 0
    %v4700 = vsel %vm1387, %v4046, 0
    %v4703 = vsel %vm1387, %v4132, 0
    %v4706 = vsel %vm1387, %v4135, 0
    %v4709 = vsel %vm1387, %v4221, 0
    %v4712 = vsel %vm1387, %v4224, 0
    %v4715 = vsel %vm1387, %v4310, 0
    %v4718 = vsel %vm1387, %v4313, 0
    %4720 = vmatprep.subr.mxu0 0.0
    %4721 = vmatpush1.msra.mxu0 %v43
    %4722 = vmatprep.subr.mxu0 0.0
    %4723 = vmatpush1.msra.mxu0 %v44
    %4724 = vmatprep.subr.mxu0 0.0
    %4725 = vmatpush1.msra.mxu0 %v45
    %4726 = vmatprep.subr.mxu0 0.0
    %4727 = vmatpush1.msra.mxu0 %v46
    %4728 = vmatprep.subr.mxu0 0.0
    %4729 = vmatpush1.msra.mxu0 0.0
    %4730 = vmatprep.subr.mxu0 0.0
    %4731 = vmatpush1.msra.mxu0 0.0
    %4732 = vmatprep.subr.mxu0 0.0
    %4733 = vmatpush1.msra.mxu0 0.0
    %4734 = vmatprep.subr.mxu0 0.0
    %4735 = vmatpush1.msra.mxu0 0.0
    %4736 = vmatprep.subr.mxu0 0.0
    %4737 = vmatpush1.msra.mxu0 0.0
    %4738 = vmatprep.subr.mxu0 0.0
    %4739 = vmatpush1.msra.mxu0 0.0
    %4740 = vmatprep.subr.mxu0 0.0
    %4741 = vmatpush1.msra.mxu0 0.0
    %4742 = vmatprep.subr.mxu0 0.0
    %4743 = vmatpush1.msra.mxu0 0.0
    %4744 = vmatprep.subr.mxu0 0.0
    %4745 = vmatpush1.msra.mxu0 0.0
    %4746 = vmatprep.subr.mxu0 0.0
    %4747 = vmatpush1.msra.mxu0 0.0
    %4748 = vmatprep.subr.mxu0 0.0
    %4749 = vmatpush1.msra.mxu0 0.0
    %4750 = vmatprep.subr.mxu0 0.0
    %4751 = vmatpush1.msra.mxu0 0.0
    %4752 = vmatprep.subr.mxu0 0.0
    %4753 = vmatpush1.msra.mxu0 0.0
    %4754 = vmatprep.subr.mxu0 0.0
    %4755 = vmatpush1.msra.mxu0 0.0
    %4756 = vmatprep.subr.mxu0 0.0
    %4757 = vmatpush1.msra.mxu0 0.0
    %4758 = vmatprep.subr.mxu0 0.0
    %4759 = vmatpush1.msra.mxu0 0.0
    %4760 = vmatprep.subr.mxu0 0.0
    %4761 = vmatpush1.msra.mxu0 0.0
    %4762 = vmatprep.subr.mxu0 0.0
    %4763 = vmatpush1.msra.mxu0 0.0
    %4764 = vmatprep.subr.mxu0 0.0
    %4765 = vmatpush1.msra.mxu0 0.0
    %4766 = vmatprep.subr.mxu0 0.0
    %4767 = vmatpush1.msra.mxu0 0.0
    %4768 = vmatprep.subr.mxu0 0.0
    %4769 = vmatpush1.msra.mxu0 0.0
    %4770 = vmatprep.subr.mxu0 0.0
    %4771 = vmatpush1.msra.mxu0 0.0
    %4772 = vmatprep.subr.mxu0 0.0
    %4773 = vmatpush1.msra.mxu0 0.0
    %4774 = vmatprep.subr.mxu0 0.0
    %4775 = vmatpush1.msra.mxu0 0.0
    %4776 = vmatprep.subr.mxu0 0.0
    %4777 = vmatpush1.msra.mxu0 0.0
    %4778 = vmatprep.subr.mxu0 0.0
    %4779 = vmatpush1.msra.mxu0 0.0
    %4780 = vmatprep.subr.mxu0 0.0
    %4781 = vmatpush1.msra.mxu0 0.0
    %4782 = vmatprep.subr.mxu0 0.0
    %4783 = vmatpush1.msra.mxu0 0.0
    %4784 = vmatprep.mubr.f32.mxu0 0.0
    %4785 = vmatmul.mubr.f32.gmra.mrb[0].mxu0 %v4673
    %v4786 = vpop.f32.mrb[0].mxu0
    %v4787 = vadd.f32 0.0, %v4786
    %v4788 = vpop.f32.mrb[0].mxu0
    %4789 = vmatprep.mubr.f32.mxu0 0.0
    %4790 = vmatmul.mubr.f32.gmra.mrb[0].mxu0 %v4676
    %v4791 = vpop.f32.mrb[0].mxu0
    %v4792 = vadd.f32 0.0, %v4791
    %v4793 = vpop.f32.mrb[0].mxu0
    %4794 = vmatprep.mubr.f32.mxu0 0.0
    %4795 = vmatmul.mubr.f32.gmra.mrb[0].mxu0 %v4679
    %v4796 = vpop.f32.mrb[0].mxu0
    %v4797 = vadd.f32 0.0, %v4796
    %v4798 = vpop.f32.mrb[0].mxu0
    %4799 = vmatprep.mubr.f32.mxu0 0.0
    %4800 = vmatmul.mubr.f32.gmra.mrb[0].mxu0 %v4682
    %v4801 = vpop.f32.mrb[0].mxu0
    %v4802 = vadd.f32 0.0, %v4801
    %v4803 = vpop.f32.mrb[0].mxu0
    %4804 = vmatprep.mubr.f32.mxu0 0.0
    %4805 = vmatmul.mubr.f32.gmra.mrb[0].mxu0 %v4685
    %v4806 = vpop.f32.mrb[0].mxu0
    %v4807 = vadd.f32 0.0, %v4806
    %v4808 = vpop.f32.mrb[0].mxu0
    %4809 = vmatprep.mubr.f32.mxu0 0.0
    %4810 = vmatmul.mubr.f32.gmra.mrb[0].mxu0 %v4688
    %v4811 = vpop.f32.mrb[0].mxu0
    %v4812 = vadd.f32 0.0, %v4811
    %v4813 = vpop.f32.mrb[0].mxu0
    %4814 = vmatprep.mubr.f32.mxu0 0.0
    %4815 = vmatmul.mubr.f32.gmra.mrb[0].mxu0 %v4691
    %v4816 = vpop.f32.mrb[0].mxu0
    %v4817 = vadd.f32 0.0, %v4816
    %v4818 = vpop.f32.mrb[0].mxu0
    %4819 = vmatprep.mubr.f32.mxu0 0.0
    %4820 = vmatmul.mubr.f32.gmra.mrb[0].mxu0 %v4694
    %v4821 = vpop.f32.mrb[0].mxu0
    %v4822 = vadd.f32 0.0, %v4821
    %v4823 = vpop.f32.mrb[0].mxu0
    %4824 = vmatprep.mubr.f32.mxu0 0.0
    %4825 = vmatmul.mubr.f32.gmra.mrb[0].mxu0 %v4697
    %v4826 = vpop.f32.mrb[0].mxu0
    %v4827 = vadd.f32 0.0, %v4826
    %v4828 = vpop.f32.mrb[0].mxu0
    %4829 = vmatprep.mubr.f32.mxu0 0.0
    %4830 = vmatmul.mubr.f32.gmra.mrb[0].mxu0 %v4700
    %v4831 = vpop.f32.mrb[0].mxu0
    %v4832 = vadd.f32 0.0, %v4831
    %v4833 = vpop.f32.mrb[0].mxu0
    %4834 = vmatprep.mubr.f32.mxu0 0.0
    %4835 = vmatmul.mubr.f32.gmra.mrb[0].mxu0 %v4703
    %v4836 = vpop.f32.mrb[0].mxu0
    %v4837 = vadd.f32 0.0, %v4836
    %v4838 = vpop.f32.mrb[0].mxu0
    %4839 = vmatprep.mubr.f32.mxu0 0.0
    %4840 = vmatmul.mubr.f32.gmra.mrb[0].mxu0 %v4706
    %v4841 = vpop.f32.mrb[0].mxu0
    %v4842 = vadd.f32 0.0, %v4841
    %v4843 = vpop.f32.mrb[0].mxu0
    %4844 = vmatprep.mubr.f32.mxu0 0.0
    %4845 = vmatmul.mubr.f32.gmra.mrb[0].mxu0 %v4709
    %v4846 = vpop.f32.mrb[0].mxu0
    %v4847 = vadd.f32 0.0, %v4846
    %v4848 = vpop.f32.mrb[0].mxu0
    %4849 = vmatprep.mubr.f32.mxu0 0.0
    %4850 = vmatmul.mubr.f32.gmra.mrb[0].mxu0 %v4712
    %v4851 = vpop.f32.mrb[0].mxu0
    %v4852 = vadd.f32 0.0, %v4851
    %v4853 = vpop.f32.mrb[0].mxu0
    %4854 = vmatprep.mubr.f32.mxu0 0.0
    %4855 = vmatmul.mubr.f32.gmra.mrb[0].mxu0 %v4715
    %v4856 = vpop.f32.mrb[0].mxu0
    %v4857 = vadd.f32 0.0, %v4856
    %v4858 = vpop.f32.mrb[0].mxu0
    %4859 = vmatprep.mubr.f32.mxu0 0.0
    %4860 = vmatmul.mubr.f32.gmra.mrb[0].mxu0 %v4718
    %v4861 = vpop.f32.mrb[0].mxu0
    %v4862 = vadd.f32 0.0, %v4861
    %v4863 = vpop.f32.mrb[0].mxu0
    %4864 = vdwg.mxu0
    %v4865 = vmul.f32 %v3687, %v38
    %v4866 = vmul.f32 %v3690, %v39
    %v4867 = vmul.f32 %v3776, %v38
    %v4868 = vmul.f32 %v3779, %v39
    %v4869 = vmul.f32 %v3865, %v38
    %v4870 = vmul.f32 %v3868, %v39
    %v4871 = vmul.f32 %v3954, %v38
    %v4872 = vmul.f32 %v3957, %v39
    %v4873 = vmul.f32 %v4043, %v38
    %v4874 = vmul.f32 %v4046, %v39
    %v4875 = vmul.f32 %v4132, %v38
    %v4876 = vmul.f32 %v4135, %v39
    %v4877 = vmul.f32 %v4221, %v38
    %v4878 = vmul.f32 %v4224, %v39
    %v4879 = vmul.f32 %v4310, %v38
    %v4880 = vmul.f32 %v4313, %v39
    %v4881 = vmul.f32 %v4787, %v41
    %v4882 = vmul.f32 %v4792, %v42
    %v4883 = vmul.f32 %v4797, %v41
    %v4884 = vmul.f32 %v4802, %v42
    %v4885 = vmul.f32 %v4807, %v41
    %v4886 = vmul.f32 %v4812, %v42
    %v4887 = vmul.f32 %v4817, %v41
    %v4888 = vmul.f32 %v4822, %v42
    %v4889 = vmul.f32 %v4827, %v41
    %v4890 = vmul.f32 %v4832, %v42
    %v4891 = vmul.f32 %v4837, %v41
    %v4892 = vmul.f32 %v4842, %v42
    %v4893 = vmul.f32 %v4847, %v41
    %v4894 = vmul.f32 %v4852, %v42
    %v4895 = vmul.f32 %v4857, %v41
    %v4896 = vmul.f32 %v4862, %v42
    %v4897 = vadd.f32 %v4865, %v4881
    %v4898 = vadd.f32 %v4866, %v4882
    %v4899 = vadd.f32 %v4867, %v4883
    %v4900 = vadd.f32 %v4868, %v4884
    %v4901 = vadd.f32 %v4869, %v4885
    %v4902 = vadd.f32 %v4870, %v4886
    %v4903 = vadd.f32 %v4871, %v4887
    %v4904 = vadd.f32 %v4872, %v4888
    %v4905 = vadd.f32 %v4873, %v4889
    %v4906 = vadd.f32 %v4874, %v4890
    %v4907 = vadd.f32 %v4875, %v4891
    %v4908 = vadd.f32 %v4876, %v4892
    %v4909 = vadd.f32 %v4877, %v4893
    %v4910 = vadd.f32 %v4878, %v4894
    %v4911 = vadd.f32 %v4879, %v4895
    %v4912 = vadd.f32 %v4880, %v4896
    %v4914 = vsel %vm1387, %v4897, 0
    %v4917 = vsel %vm1387, %v4898, 0
    %v4920 = vsel %vm1387, %v4905, 0
    %v4923 = vsel %vm1387, %v4906, 0
    %4925 = vmatprep.subr.mxu0 0.0
    %4926 = vmatpush1.xpose.msra.mxu0 %v4920
    %4927 = vmatprep.subr.mxu0 0.0
    %4928 = vmatpush1.xpose.msra.mxu0 %v4923
    %4929 = vmatprep.subr.mxu0 0.0
    %4930 = vmatpush1.xpose.msra.mxu0 0.0
    %4931 = vmatprep.subr.mxu0 0.0
    %4932 = vmatpush1.xpose.msra.mxu0 0.0
    %4933 = vmatprep.subr.mxu0 0.0
    %4934 = vmatpush1.xpose.msra.mxu0 0.0
    %4935 = vmatprep.subr.mxu0 0.0
    %4936 = vmatpush1.xpose.msra.mxu0 0.0
    %4937 = vmatprep.subr.mxu0 0.0
    %4938 = vmatpush1.xpose.msra.mxu0 0.0
    %4939 = vmatprep.subr.mxu0 0.0
    %4940 = vmatpush1.xpose.msra.mxu0 0.0
    %4941 = vmatprep.subr.mxu0 0.0
    %4942 = vmatpush1.xpose.msra.mxu0 0.0
    %4943 = vmatprep.subr.mxu0 0.0
    %4944 = vmatpush1.xpose.msra.mxu0 0.0
    %4945 = vmatprep.subr.mxu0 0.0
    %4946 = vmatpush1.xpose.msra.mxu0 0.0
    %4947 = vmatprep.subr.mxu0 0.0
    %4948 = vmatpush1.xpose.msra.mxu0 0.0
    %4949 = vmatprep.subr.mxu0 0.0
    %4950 = vmatpush1.xpose.msra.mxu0 0.0
    %4951 = vmatprep.subr.mxu0 0.0
    %4952 = vmatpush1.xpose.msra.mxu0 0.0
    %4953 = vmatprep.subr.mxu0 0.0
    %4954 = vmatpush1.xpose.msra.mxu0 0.0
    %4955 = vmatprep.subr.mxu0 0.0
    %4956 = vmatpush1.xpose.msra.mxu0 0.0
    %4957 = vmatprep.subr.mxu0 0.0
    %4958 = vmatpush1.xpose.msra.mxu0 0.0
    %4959 = vmatprep.subr.mxu0 0.0
    %4960 = vmatpush1.xpose.msra.mxu0 0.0
    %4961 = vmatprep.subr.mxu0 0.0
    %4962 = vmatpush1.xpose.msra.mxu0 0.0
    %4963 = vmatprep.subr.mxu0 0.0
    %4964 = vmatpush1.xpose.msra.mxu0 0.0
    %4965 = vmatprep.subr.mxu0 0.0
    %4966 = vmatpush1.xpose.msra.mxu0 0.0
    %4967 = vmatprep.subr.mxu0 0.0
    %4968 = vmatpush1.xpose.msra.mxu0 0.0
    %4969 = vmatprep.subr.mxu0 0.0
    %4970 = vmatpush1.xpose.msra.mxu0 0.0
    %4971 = vmatprep.subr.mxu0 0.0
    %4972 = vmatpush1.xpose.msra.mxu0 0.0
    %4973 = vmatprep.subr.mxu0 0.0
    %4974 = vmatpush1.xpose.msra.mxu0 0.0
    %4975 = vmatprep.subr.mxu0 0.0
    %4976 = vmatpush1.xpose.msra.mxu0 0.0
    %4977 = vmatprep.subr.mxu0 0.0
    %4978 = vmatpush1.xpose.msra.mxu0 0.0
    %4979 = vmatprep.subr.mxu0 0.0
    %4980 = vmatpush1.xpose.msra.mxu0 0.0
    %4981 = vmatprep.subr.mxu0 0.0
    %4982 = vmatpush1.xpose.msra.mxu0 0.0
    %4983 = vmatprep.subr.mxu0 0.0
    %4984 = vmatpush1.xpose.msra.mxu0 0.0
    %4985 = vmatprep.subr.mxu0 0.0
    %4986 = vmatpush1.xpose.msra.mxu0 0.0
    %4987 = vmatprep.subr.mxu0 0.0
    %4988 = vmatpush1.xpose.msra.mxu0 0.0
    %4989 = vmatprep.mubr.f32.mxu0 0.0
    %4990 = vmatmul.mubr.f32.gmra.mrb[0].mxu0 %v4914
    %v4991 = vpop.f32.mrb[0].mxu0
    %v4992 = vadd.f32 %v36, %v4991
    %v4993 = vpop.f32.mrb[0].mxu0
    %4994 = vmatprep.mubr.f32.mxu0 0.0
    %4995 = vmatmul.mubr.f32.gmra.mrb[0].mxu0 %v4917
    %v4996 = vpop.f32.mrb[0].mxu0
    %v4997 = vadd.f32 %v37, %v4996
    %v4998 = vpop.f32.mrb[0].mxu0
    %4999 = vdwg.mxu0
    %v5001 = vsel %vm1387, %v4899, 0
    %v5004 = vsel %vm1387, %v4900, 0
    %v5007 = vsel %vm1387, %v4907, 0
    %v5010 = vsel %vm1387, %v4908, 0
    %5012 = vmatprep.subr.mxu0 0.0
    %5013 = vmatpush1.xpose.msra.mxu0 %v5007
    %5014 = vmatprep.subr.mxu0 0.0
    %5015 = vmatpush1.xpose.msra.mxu0 %v5010
    %5016 = vmatprep.subr.mxu0 0.0
    %5017 = vmatpush1.xpose.msra.mxu0 0.0
    %5018 = vmatprep.subr.mxu0 0.0
    %5019 = vmatpush1.xpose.msra.mxu0 0.0
    %5020 = vmatprep.subr.mxu0 0.0
    %5021 = vmatpush1.xpose.msra.mxu0 0.0
    %5022 = vmatprep.subr.mxu0 0.0
    %5023 = vmatpush1.xpose.msra.mxu0 0.0
    %5024 = vmatprep.subr.mxu0 0.0
    %5025 = vmatpush1.xpose.msra.mxu0 0.0
    %5026 = vmatprep.subr.mxu0 0.0
    %5027 = vmatpush1.xpose.msra.mxu0 0.0
    %5028 = vmatprep.subr.mxu0 0.0
    %5029 = vmatpush1.xpose.msra.mxu0 0.0
    %5030 = vmatprep.subr.mxu0 0.0
    %5031 = vmatpush1.xpose.msra.mxu0 0.0
    %5032 = vmatprep.subr.mxu0 0.0
    %5033 = vmatpush1.xpose.msra.mxu0 0.0
    %5034 = vmatprep.subr.mxu0 0.0
    %5035 = vmatpush1.xpose.msra.mxu0 0.0
    %5036 = vmatprep.subr.mxu0 0.0
    %5037 = vmatpush1.xpose.msra.mxu0 0.0
    %5038 = vmatprep.subr.mxu0 0.0
    %5039 = vmatpush1.xpose.msra.mxu0 0.0
    %5040 = vmatprep.subr.mxu0 0.0
    %5041 = vmatpush1.xpose.msra.mxu0 0.0
    %5042 = vmatprep.subr.mxu0 0.0
    %5043 = vmatpush1.xpose.msra.mxu0 0.0
    %5044 = vmatprep.subr.mxu0 0.0
    %5045 = vmatpush1.xpose.msra.mxu0 0.0
    %5046 = vmatprep.subr.mxu0 0.0
    %5047 = vmatpush1.xpose.msra.mxu0 0.0
    %5048 = vmatprep.subr.mxu0 0.0
    %5049 = vmatpush1.xpose.msra.mxu0 0.0
    %5050 = vmatprep.subr.mxu0 0.0
    %5051 = vmatpush1.xpose.msra.mxu0 0.0
    %5052 = vmatprep.subr.mxu0 0.0
    %5053 = vmatpush1.xpose.msra.mxu0 0.0
    %5054 = vmatprep.subr.mxu0 0.0
    %5055 = vmatpush1.xpose.msra.mxu0 0.0
    %5056 = vmatprep.subr.mxu0 0.0
    %5057 = vmatpush1.xpose.msra.mxu0 0.0
    %5058 = vmatprep.subr.mxu0 0.0
    %5059 = vmatpush1.xpose.msra.mxu0 0.0
    %5060 = vmatprep.subr.mxu0 0.0
    %5061 = vmatpush1.xpose.msra.mxu0 0.0
    %5062 = vmatprep.subr.mxu0 0.0
    %5063 = vmatpush1.xpose.msra.mxu0 0.0
    %5064 = vmatprep.subr.mxu0 0.0
    %5065 = vmatpush1.xpose.msra.mxu0 0.0
    %5066 = vmatprep.subr.mxu0 0.0
    %5067 = vmatpush1.xpose.msra.mxu0 0.0
    %5068 = vmatprep.subr.mxu0 0.0
    %5069 = vmatpush1.xpose.msra.mxu0 0.0
    %5070 = vmatprep.subr.mxu0 0.0
    %5071 = vmatpush1.xpose.msra.mxu0 0.0
    %5072 = vmatprep.subr.mxu0 0.0
    %5073 = vmatpush1.xpose.msra.mxu0 0.0
    %5074 = vmatprep.subr.mxu0 0.0
    %5075 = vmatpush1.xpose.msra.mxu0 0.0
    %5076 = vmatprep.mubr.f32.mxu0 0.0
    %5077 = vmatmul.mubr.f32.gmra.mrb[0].mxu0 %v5001
    %v5078 = vpop.f32.mrb[0].mxu0
    %v5079 = vadd.f32 %v36, %v5078
    %v5080 = vpop.f32.mrb[0].mxu0
    %5081 = vmatprep.mubr.f32.mxu0 0.0
    %5082 = vmatmul.mubr.f32.gmra.mrb[0].mxu0 %v5004
    %v5083 = vpop.f32.mrb[0].mxu0
    %v5084 = vadd.f32 %v37, %v5083
    %v5085 = vpop.f32.mrb[0].mxu0
    %5086 = vdwg.mxu0
    %v5088 = vsel %vm1387, %v4901, 0
    %v5091 = vsel %vm1387, %v4902, 0
    %v5094 = vsel %vm1387, %v4909, 0
    %v5097 = vsel %vm1387, %v4910, 0
    %5099 = vmatprep.subr.mxu0 0.0
    %5100 = vmatpush1.xpose.msra.mxu0 %v5094
    %5101 = vmatprep.subr.mxu0 0.0
    %5102 = vmatpush1.xpose.msra.mxu0 %v5097
    %5103 = vmatprep.subr.mxu0 0.0
    %5104 = vmatpush1.xpose.msra.mxu0 0.0
    %5105 = vmatprep.subr.mxu0 0.0
    %5106 = vmatpush1.xpose.msra.mxu0 0.0
    %5107 = vmatprep.subr.mxu0 0.0
    %5108 = vmatpush1.xpose.msra.mxu0 0.0
    %5109 = vmatprep.subr.mxu0 0.0
    %5110 = vmatpush1.xpose.msra.mxu0 0.0
    %5111 = vmatprep.subr.mxu0 0.0
    %5112 = vmatpush1.xpose.msra.mxu0 0.0
    %5113 = vmatprep.subr.mxu0 0.0
    %5114 = vmatpush1.xpose.msra.mxu0 0.0
    %5115 = vmatprep.subr.mxu0 0.0
    %5116 = vmatpush1.xpose.msra.mxu0 0.0
    %5117 = vmatprep.subr.mxu0 0.0
    %5118 = vmatpush1.xpose.msra.mxu0 0.0
    %5119 = vmatprep.subr.mxu0 0.0
    %5120 = vmatpush1.xpose.msra.mxu0 0.0
    %5121 = vmatprep.subr.mxu0 0.0
    %5122 = vmatpush1.xpose.msra.mxu0 0.0
    %5123 = vmatprep.subr.mxu0 0.0
    %5124 = vmatpush1.xpose.msra.mxu0 0.0
    %5125 = vmatprep.subr.mxu0 0.0
    %5126 = vmatpush1.xpose.msra.mxu0 0.0
    %5127 = vmatprep.subr.mxu0 0.0
    %5128 = vmatpush1.xpose.msra.mxu0 0.0
    %5129 = vmatprep.subr.mxu0 0.0
    %5130 = vmatpush1.xpose.msra.mxu0 0.0
    %5131 = vmatprep.subr.mxu0 0.0
    %5132 = vmatpush1.xpose.msra.mxu0 0.0
    %5133 = vmatprep.subr.mxu0 0.0
    %5134 = vmatpush1.xpose.msra.mxu0 0.0
    %5135 = vmatprep.subr.mxu0 0.0
    %5136 = vmatpush1.xpose.msra.mxu0 0.0
    %5137 = vmatprep.subr.mxu0 0.0
    %5138 = vmatpush1.xpose.msra.mxu0 0.0
    %5139 = vmatprep.subr.mxu0 0.0
    %5140 = vmatpush1.xpose.msra.mxu0 0.0
    %5141 = vmatprep.subr.mxu0 0.0
    %5142 = vmatpush1.xpose.msra.mxu0 0.0
    %5143 = vmatprep.subr.mxu0 0.0
    %5144 = vmatpush1.xpose.msra.mxu0 0.0
    %5145 = vmatprep.subr.mxu0 0.0
    %5146 = vmatpush1.xpose.msra.mxu0 0.0
    %5147 = vmatprep.subr.mxu0 0.0
    %5148 = vmatpush1.xpose.msra.mxu0 0.0
    %5149 = vmatprep.subr.mxu0 0.0
    %5150 = vmatpush1.xpose.msra.mxu0 0.0
    %5151 = vmatprep.subr.mxu0 0.0
    %5152 = vmatpush1.xpose.msra.mxu0 0.0
    %5153 = vmatprep.subr.mxu0 0.0
    %5154 = vmatpush1.xpose.msra.mxu0 0.0
    %5155 = vmatprep.subr.mxu0 0.0
    %5156 = vmatpush1.xpose.msra.mxu0 0.0
    %5157 = vmatprep.subr.mxu0 0.0
    %5158 = vmatpush1.xpose.msra.mxu0 0.0
    %5159 = vmatprep.subr.mxu0 0.0
    %5160 = vmatpush1.xpose.msra.mxu0 0.0
    %5161 = vmatprep.subr.mxu0 0.0
    %5162 = vmatpush1.xpose.msra.mxu0 0.0
    %5163 = vmatprep.mubr.f32.mxu0 0.0
    %5164 = vmatmul.mubr.f32.gmra.mrb[0].mxu0 %v5088
    %v5165 = vpop.f32.mrb[0].mxu0
    %v5166 = vadd.f32 %v36, %v5165
    %v5167 = vpop.f32.mrb[0].mxu0
    %5168 = vmatprep.mubr.f32.mxu0 0.0
    %5169 = vmatmul.mubr.f32.gmra.mrb[0].mxu0 %v5091
    %v5170 = vpop.f32.mrb[0].mxu0
    %v5171 = vadd.f32 %v37, %v5170
    %v5172 = vpop.f32.mrb[0].mxu0
    %5173 = vdwg.mxu0
    %v5175 = vsel %vm1387, %v4903, 0
    %v5178 = vsel %vm1387, %v4904, 0
    %v5181 = vsel %vm1387, %v4911, 0
    %v5184 = vsel %vm1387, %v4912, 0
    %5186 = vmatprep.subr.mxu0 0.0
    %5187 = vmatpush1.xpose.msra.mxu0 %v5181
    %5188 = vmatprep.subr.mxu0 0.0
    %5189 = vmatpush1.xpose.msra.mxu0 %v5184
    %5190 = vmatprep.subr.mxu0 0.0
    %5191 = vmatpush1.xpose.msra.mxu0 0.0
    %5192 = vmatprep.subr.mxu0 0.0
    %5193 = vmatpush1.xpose.msra.mxu0 0.0
    %5194 = vmatprep.subr.mxu0 0.0
    %5195 = vmatpush1.xpose.msra.mxu0 0.0
    %5196 = vmatprep.subr.mxu0 0.0
    %5197 = vmatpush1.xpose.msra.mxu0 0.0
    %5198 = vmatprep.subr.mxu0 0.0
    %5199 = vmatpush1.xpose.msra.mxu0 0.0
    %5200 = vmatprep.subr.mxu0 0.0
    %5201 = vmatpush1.xpose.msra.mxu0 0.0
    %5202 = vmatprep.subr.mxu0 0.0
    %5203 = vmatpush1.xpose.msra.mxu0 0.0
    %5204 = vmatprep.subr.mxu0 0.0
    %5205 = vmatpush1.xpose.msra.mxu0 0.0
    %5206 = vmatprep.subr.mxu0 0.0
    %5207 = vmatpush1.xpose.msra.mxu0 0.0
    %5208 = vmatprep.subr.mxu0 0.0
    %5209 = vmatpush1.xpose.msra.mxu0 0.0
    %5210 = vmatprep.subr.mxu0 0.0
    %5211 = vmatpush1.xpose.msra.mxu0 0.0
    %5212 = vmatprep.subr.mxu0 0.0
    %5213 = vmatpush1.xpose.msra.mxu0 0.0
    %5214 = vmatprep.subr.mxu0 0.0
    %5215 = vmatpush1.xpose.msra.mxu0 0.0
    %5216 = vmatprep.subr.mxu0 0.0
    %5217 = vmatpush1.xpose.msra.mxu0 0.0
    %5218 = vmatprep.subr.mxu0 0.0
    %5219 = vmatpush1.xpose.msra.mxu0 0.0
    %5220 = vmatprep.subr.mxu0 0.0
    %5221 = vmatpush1.xpose.msra.mxu0 0.0
    %5222 = vmatprep.subr.mxu0 0.0
    %5223 = vmatpush1.xpose.msra.mxu0 0.0
    %5224 = vmatprep.subr.mxu0 0.0
    %5225 = vmatpush1.xpose.msra.mxu0 0.0
    %5226 = vmatprep.subr.mxu0 0.0
    %5227 = vmatpush1.xpose.msra.mxu0 0.0
    %5228 = vmatprep.subr.mxu0 0.0
    %5229 = vmatpush1.xpose.msra.mxu0 0.0
    %5230 = vmatprep.subr.mxu0 0.0
    %5231 = vmatpush1.xpose.msra.mxu0 0.0
    %5232 = vmatprep.subr.mxu0 0.0
    %5233 = vmatpush1.xpose.msra.mxu0 0.0
    %5234 = vmatprep.subr.mxu0 0.0
    %5235 = vmatpush1.xpose.msra.mxu0 0.0
    %5236 = vmatprep.subr.mxu0 0.0
    %5237 = vmatpush1.xpose.msra.mxu0 0.0
    %5238 = vmatprep.subr.mxu0 0.0
    %5239 = vmatpush1.xpose.msra.mxu0 0.0
    %5240 = vmatprep.subr.mxu0 0.0
    %5241 = vmatpush1.xpose.msra.mxu0 0.0
    %5242 = vmatprep.subr.mxu0 0.0
    %5243 = vmatpush1.xpose.msra.mxu0 0.0
    %5244 = vmatprep.subr.mxu0 0.0
    %5245 = vmatpush1.xpose.msra.mxu0 0.0
    %5246 = vmatprep.subr.mxu0 0.0
    %5247 = vmatpush1.xpose.msra.mxu0 0.0
    %5248 = vmatprep.subr.mxu0 0.0
    %5249 = vmatpush1.xpose.msra.mxu0 0.0
    %5250 = vmatprep.mubr.f32.mxu0 0.0
    %5251 = vmatmul.mubr.f32.gmra.mrb[0].mxu0 %v5175
    %v5252 = vpop.f32.mrb[0].mxu0
    %v5253 = vadd.f32 %v36, %v5252
    %v5254 = vpop.f32.mrb[0].mxu0
    %5255 = vmatprep.mubr.f32.mxu0 0.0
    %5256 = vmatmul.mubr.f32.gmra.mrb[0].mxu0 %v5178
    %v5257 = vpop.f32.mrb[0].mxu0
    %v5258 = vadd.f32 %v37, %v5257
    %v5259 = vpop.f32.mrb[0].mxu0
    %5260 = vdwg.mxu0
    %v5261 = vsel %vm1977, %v4992, -inf
    %5262 = vmax.xlane.f32.xlu0 %v5261
    %v5263 = vpop.xlane.xlu0 %5262
    %v5264 = vsel %vm1977, %v4997, -inf
    %5265 = vmax.xlane.f32.xlu0 %v5264
    %v5266 = vpop.xlane.xlu0 %5265
    %v5267 = vsel %vm1977, %v5079, -inf
    %5268 = vmax.xlane.f32.xlu0 %v5267
    %v5269 = vpop.xlane.xlu0 %5268
    %v5270 = vsel %vm1977, %v5084, -inf
    %5271 = vmax.xlane.f32.xlu0 %v5270
    %v5272 = vpop.xlane.xlu0 %5271
    %v5273 = vsel %vm1977, %v5166, -inf
    %5274 = vmax.xlane.f32.xlu0 %v5273
    %v5275 = vpop.xlane.xlu0 %5274
    %v5276 = vsel %vm1977, %v5171, -inf
    %5277 = vmax.xlane.f32.xlu0 %v5276
    %v5278 = vpop.xlane.xlu0 %5277
    %v5279 = vsel %vm1977, %v5253, -inf
    %5280 = vmax.xlane.f32.xlu0 %v5279
    %v5281 = vpop.xlane.xlu0 %5280
    %v5282 = vsel %vm1977, %v5258, -inf
    %5283 = vmax.xlane.f32.xlu0 %v5282
    %v5284 = vpop.xlane.xlu0 %5283
    %v5285 = vsub.f32 %v4992, %v5263
    %v5286 = vsub.f32 %v4997, %v5266
    %v5287 = vsub.f32 %v5079, %v5269
    %v5288 = vsub.f32 %v5084, %v5272
    %v5289 = vsub.f32 %v5166, %v5275
    %v5290 = vsub.f32 %v5171, %v5278
    %v5291 = vsub.f32 %v5253, %v5281
    %v5292 = vsub.f32 %v5258, %v5284
    %v5293 = vmul.f32 %v5285, 1.442695
    %v5294 = vpow.pop %v5293
    %v5295 = vmul.f32 %v5286, 1.442695
    %v5296 = vpow.pop %v5295
    %v5297 = vmul.f32 %v5287, 1.442695
    %v5298 = vpow.pop %v5297
    %v5299 = vmul.f32 %v5288, 1.442695
    %v5300 = vpow.pop %v5299
    %v5301 = vmul.f32 %v5289, 1.442695
    %v5302 = vpow.pop %v5301
    %v5303 = vmul.f32 %v5290, 1.442695
    %v5304 = vpow.pop %v5303
    %v5305 = vmul.f32 %v5291, 1.442695
    %v5306 = vpow.pop %v5305
    %v5307 = vmul.f32 %v5292, 1.442695
    %v5308 = vpow.pop %v5307
    %v5309 = vsel %vm1977, %v5294, 0.0
    %5310 = vadd.xlane.f32.xlu0 %v5309
    %v5311 = vpop.xlane.xlu0 %5310
    %v5312 = vsel %vm1977, %v5296, 0.0
    %5313 = vadd.xlane.f32.xlu0 %v5312
    %v5314 = vpop.xlane.xlu0 %5313
    %v5315 = vsel %vm1977, %v5298, 0.0
    %5316 = vadd.xlane.f32.xlu0 %v5315
    %v5317 = vpop.xlane.xlu0 %5316
    %v5318 = vsel %vm1977, %v5300, 0.0
    %5319 = vadd.xlane.f32.xlu0 %v5318
    %v5320 = vpop.xlane.xlu0 %5319
    %v5321 = vsel %vm1977, %v5302, 0.0
    %5322 = vadd.xlane.f32.xlu0 %v5321
    %v5323 = vpop.xlane.xlu0 %5322
    %v5324 = vsel %vm1977, %v5304, 0.0
    %5325 = vadd.xlane.f32.xlu0 %v5324
    %v5326 = vpop.xlane.xlu0 %5325
    %v5327 = vsel %vm1977, %v5306, 0.0
    %5328 = vadd.xlane.f32.xlu0 %v5327
    %v5329 = vpop.xlane.xlu0 %5328
    %v5330 = vsel %vm1977, %v5308, 0.0
    %5331 = vadd.xlane.f32.xlu0 %v5330
    %v5332 = vpop.xlane.xlu0 %5331
    %v5333 = vrcp.pop %v5311
    %v5334 = vrcp.pop %v5314
    %v5335 = vrcp.pop %v5317
    %v5336 = vrcp.pop %v5320
    %v5337 = vrcp.pop %v5323
    %v5338 = vrcp.pop %v5326
    %v5339 = vrcp.pop %v5329
    %v5340 = vrcp.pop %v5332
    %v5341 = vmul.f32 %v5294, %v5333
    %v5342 = vmul.f32 %v5296, %v5334
    %v5343 = vmul.f32 %v5298, %v5335
    %v5344 = vmul.f32 %v5300, %v5336
    %v5345 = vmul.f32 %v5302, %v5337
    %v5346 = vmul.f32 %v5304, %v5338
    %v5347 = vmul.f32 %v5306, %v5339
    %v5348 = vmul.f32 %v5308, %v5340
    %v5350 = vsel %vm1977, %v5341, 0
    %v5353 = vsel %vm1977, %v5342, 0
    %5355 = vmatprep.subr.mxu0 0.0
    %5356 = vmatpush1.msra.mxu0 %v4399
    %5357 = vmatprep.subr.mxu0 0.0
    %5358 = vmatpush1.msra.mxu0 %v4402
    %5359 = vmatprep.subr.mxu0 0.0
    %5360 = vmatpush1.msra.mxu0 0.0
    %5361 = vmatprep.subr.mxu0 0.0
    %5362 = vmatpush1.msra.mxu0 0.0
    %5363 = vmatprep.subr.mxu0 0.0
    %5364 = vmatpush1.msra.mxu0 0.0
    %5365 = vmatprep.subr.mxu0 0.0
    %5366 = vmatpush1.msra.mxu0 0.0
    %5367 = vmatprep.subr.mxu0 0.0
    %5368 = vmatpush1.msra.mxu0 0.0
    %5369 = vmatprep.subr.mxu0 0.0
    %5370 = vmatpush1.msra.mxu0 0.0
    %5371 = vmatprep.subr.mxu0 0.0
    %5372 = vmatpush1.msra.mxu0 0.0
    %5373 = vmatprep.subr.mxu0 0.0
    %5374 = vmatpush1.msra.mxu0 0.0
    %5375 = vmatprep.subr.mxu0 0.0
    %5376 = vmatpush1.msra.mxu0 0.0
    %5377 = vmatprep.subr.mxu0 0.0
    %5378 = vmatpush1.msra.mxu0 0.0
    %5379 = vmatprep.subr.mxu0 0.0
    %5380 = vmatpush1.msra.mxu0 0.0
    %5381 = vmatprep.subr.mxu0 0.0
    %5382 = vmatpush1.msra.mxu0 0.0
    %5383 = vmatprep.subr.mxu0 0.0
    %5384 = vmatpush1.msra.mxu0 0.0
    %5385 = vmatprep.subr.mxu0 0.0
    %5386 = vmatpush1.msra.mxu0 0.0
    %5387 = vmatprep.subr.mxu0 0.0
    %5388 = vmatpush1.msra.mxu0 0.0
    %5389 = vmatprep.subr.mxu0 0.0
    %5390 = vmatpush1.msra.mxu0 0.0
    %5391 = vmatprep.subr.mxu0 0.0
    %5392 = vmatpush1.msra.mxu0 0.0
    %5393 = vmatprep.subr.mxu0 0.0
    %5394 = vmatpush1.msra.mxu0 0.0
    %5395 = vmatprep.subr.mxu0 0.0
    %5396 = vmatpush1.msra.mxu0 0.0
    %5397 = vmatprep.subr.mxu0 0.0
    %5398 = vmatpush1.msra.mxu0 0.0
    %5399 = vmatprep.subr.mxu0 0.0
    %5400 = vmatpush1.msra.mxu0 0.0
    %5401 = vmatprep.subr.mxu0 0.0
    %5402 = vmatpush1.msra.mxu0 0.0
    %5403 = vmatprep.subr.mxu0 0.0
    %5404 = vmatpush1.msra.mxu0 0.0
    %5405 = vmatprep.subr.mxu0 0.0
    %5406 = vmatpush1.msra.mxu0 0.0
    %5407 = vmatprep.subr.mxu0 0.0
    %5408 = vmatpush1.msra.mxu0 0.0
    %5409 = vmatprep.subr.mxu0 0.0
    %5410 = vmatpush1.msra.mxu0 0.0
    %5411 = vmatprep.subr.mxu0 0.0
    %5412 = vmatpush1.msra.mxu0 0.0
    %5413 = vmatprep.subr.mxu0 0.0
    %5414 = vmatpush1.msra.mxu0 0.0
    %5415 = vmatprep.subr.mxu0 0.0
    %5416 = vmatpush1.msra.mxu0 0.0
    %5417 = vmatprep.subr.mxu0 0.0
    %5418 = vmatpush1.msra.mxu0 0.0
    %5419 = vmatprep.mubr.f32.mxu0 0.0
    %5420 = vmatmul.mubr.f32.gmra.mrb[0].mxu0 %v5350
    %v5421 = vpop.f32.mrb[0].mxu0
    %v5422 = vadd.f32 0.0, %v5421
    %v5423 = vpop.f32.mrb[0].mxu0
    %5424 = vmatprep.mubr.f32.mxu0 0.0
    %5425 = vmatmul.mubr.f32.gmra.mrb[0].mxu0 %v5353
    %v5426 = vpop.f32.mrb[0].mxu0
    %v5427 = vadd.f32 0.0, %v5426
    %v5428 = vpop.f32.mrb[0].mxu0
    %5429 = vdwg.mxu0
    %v5431 = vsel %vm1977, %v5343, 0
    %v5434 = vsel %vm1977, %v5344, 0
    %5436 = vmatprep.subr.mxu0 0.0
    %5437 = vmatpush1.msra.mxu0 %v4488
    %5438 = vmatprep.subr.mxu0 0.0
    %5439 = vmatpush1.msra.mxu0 %v4491
    %5440 = vmatprep.subr.mxu0 0.0
    %5441 = vmatpush1.msra.mxu0 0.0
    %5442 = vmatprep.subr.mxu0 0.0
    %5443 = vmatpush1.msra.mxu0 0.0
    %5444 = vmatprep.subr.mxu0 0.0
    %5445 = vmatpush1.msra.mxu0 0.0
    %5446 = vmatprep.subr.mxu0 0.0
    %5447 = vmatpush1.msra.mxu0 0.0
    %5448 = vmatprep.subr.mxu0 0.0
    %5449 = vmatpush1.msra.mxu0 0.0
    %5450 = vmatprep.subr.mxu0 0.0
    %5451 = vmatpush1.msra.mxu0 0.0
    %5452 = vmatprep.subr.mxu0 0.0
    %5453 = vmatpush1.msra.mxu0 0.0
    %5454 = vmatprep.subr.mxu0 0.0
    %5455 = vmatpush1.msra.mxu0 0.0
    %5456 = vmatprep.subr.mxu0 0.0
    %5457 = vmatpush1.msra.mxu0 0.0
    %5458 = vmatprep.subr.mxu0 0.0
    %5459 = vmatpush1.msra.mxu0 0.0
    %5460 = vmatprep.subr.mxu0 0.0
    %5461 = vmatpush1.msra.mxu0 0.0
    %5462 = vmatprep.subr.mxu0 0.0
    %5463 = vmatpush1.msra.mxu0 0.0
    %5464 = vmatprep.subr.mxu0 0.0
    %5465 = vmatpush1.msra.mxu0 0.0
    %5466 = vmatprep.subr.mxu0 0.0
    %5467 = vmatpush1.msra.mxu0 0.0
    %5468 = vmatprep.subr.mxu0 0.0
    %5469 = vmatpush1.msra.mxu0 0.0
    %5470 = vmatprep.subr.mxu0 0.0
    %5471 = vmatpush1.msra.mxu0 0.0
    %5472 = vmatprep.subr.mxu0 0.0
    %5473 = vmatpush1.msra.mxu0 0.0
    %5474 = vmatprep.subr.mxu0 0.0
    %5475 = vmatpush1.msra.mxu0 0.0
    %5476 = vmatprep.subr.mxu0 0.0
    %5477 = vmatpush1.msra.mxu0 0.0
    %5478 = vmatprep.subr.mxu0 0.0
    %5479 = vmatpush1.msra.mxu0 0.0
    %5480 = vmatprep.subr.mxu0 0.0
    %5481 = vmatpush1.msra.mxu0 0.0
    %5482 = vmatprep.subr.mxu0 0.0
    %5483 = vmatpush1.msra.mxu0 0.0
    %5484 = vmatprep.subr.mxu0 0.0
    %5485 = vmatpush1.msra.mxu0 0.0
    %5486 = vmatprep.subr.mxu0 0.0
    %5487 = vmatpush1.msra.mxu0 0.0
    %5488 = vmatprep.subr.mxu0 0.0
    %5489 = vmatpush1.msra.mxu0 0.0
    %5490 = vmatprep.subr.mxu0 0.0
    %5491 = vmatpush1.msra.mxu0 0.0
    %5492 = vmatprep.subr.mxu0 0.0
    %5493 = vmatpush1.msra.mxu0 0.0
    %5494 = vmatprep.subr.mxu0 0.0
    %5495 = vmatpush1.msra.mxu0 0.0
    %5496 = vmatprep.subr.mxu0 0.0
    %5497 = vmatpush1.msra.mxu0 0.0
    %5498 = vmatprep.subr.mxu0 0.0
    %5499 = vmatpush1.msra.mxu0 0.0
    %5500 = vmatprep.mubr.f32.mxu0 0.0
    %5501 = vmatmul.mubr.f32.gmra.mrb[0].mxu0 %v5431
    %v5502 = vpop.f32.mrb[0].mxu0
    %v5503 = vadd.f32 0.0, %v5502
    %v5504 = vpop.f32.mrb[0].mxu0
    %5505 = vmatprep.mubr.f32.mxu0 0.0
    %5506 = vmatmul.mubr.f32.gmra.mrb[0].mxu0 %v5434
    %v5507 = vpop.f32.mrb[0].mxu0
    %v5508 = vadd.f32 0.0, %v5507
    %v5509 = vpop.f32.mrb[0].mxu0
    %5510 = vdwg.mxu0
    %v5512 = vsel %vm1977, %v5345, 0
    %v5515 = vsel %vm1977, %v5346, 0
    %5517 = vmatprep.subr.mxu0 0.0
    %5518 = vmatpush1.msra.mxu0 %v4577
    %5519 = vmatprep.subr.mxu0 0.0
    %5520 = vmatpush1.msra.mxu0 %v4580
    %5521 = vmatprep.subr.mxu0 0.0
    %5522 = vmatpush1.msra.mxu0 0.0
    %5523 = vmatprep.subr.mxu0 0.0
    %5524 = vmatpush1.msra.mxu0 0.0
    %5525 = vmatprep.subr.mxu0 0.0
    %5526 = vmatpush1.msra.mxu0 0.0
    %5527 = vmatprep.subr.mxu0 0.0
    %5528 = vmatpush1.msra.mxu0 0.0
    %5529 = vmatprep.subr.mxu0 0.0
    %5530 = vmatpush1.msra.mxu0 0.0
    %5531 = vmatprep.subr.mxu0 0.0
    %5532 = vmatpush1.msra.mxu0 0.0
    %5533 = vmatprep.subr.mxu0 0.0
    %5534 = vmatpush1.msra.mxu0 0.0
    %5535 = vmatprep.subr.mxu0 0.0
    %5536 = vmatpush1.msra.mxu0 0.0
    %5537 = vmatprep.subr.mxu0 0.0
    %5538 = vmatpush1.msra.mxu0 0.0
    %5539 = vmatprep.subr.mxu0 0.0
    %5540 = vmatpush1.msra.mxu0 0.0
    %5541 = vmatprep.subr.mxu0 0.0
    %5542 = vmatpush1.msra.mxu0 0.0
    %5543 = vmatprep.subr.mxu0 0.0
    %5544 = vmatpush1.msra.mxu0 0.0
    %5545 = vmatprep.subr.mxu0 0.0
    %5546 = vmatpush1.msra.mxu0 0.0
    %5547 = vmatprep.subr.mxu0 0.0
    %5548 = vmatpush1.msra.mxu0 0.0
    %5549 = vmatprep.subr.mxu0 0.0
    %5550 = vmatpush1.msra.mxu0 0.0
    %5551 = vmatprep.subr.mxu0 0.0
    %5552 = vmatpush1.msra.mxu0 0.0
    %5553 = vmatprep.subr.mxu0 0.0
    %5554 = vmatpush1.msra.mxu0 0.0
    %5555 = vmatprep.subr.mxu0 0.0
    %5556 = vmatpush1.msra.mxu0 0.0
    %5557 = vmatprep.subr.mxu0 0.0
    %5558 = vmatpush1.msra.mxu0 0.0
    %5559 = vmatprep.subr.mxu0 0.0
    %5560 = vmatpush1.msra.mxu0 0.0
    %5561 = vmatprep.subr.mxu0 0.0
    %5562 = vmatpush1.msra.mxu0 0.0
    %5563 = vmatprep.subr.mxu0 0.0
    %5564 = vmatpush1.msra.mxu0 0.0
    %5565 = vmatprep.subr.mxu0 0.0
    %5566 = vmatpush1.msra.mxu0 0.0
    %5567 = vmatprep.subr.mxu0 0.0
    %5568 = vmatpush1.msra.mxu0 0.0
    %5569 = vmatprep.subr.mxu0 0.0
    %5570 = vmatpush1.msra.mxu0 0.0
    %5571 = vmatprep.subr.mxu0 0.0
    %5572 = vmatpush1.msra.mxu0 0.0
    %5573 = vmatprep.subr.mxu0 0.0
    %5574 = vmatpush1.msra.mxu0 0.0
    %5575 = vmatprep.subr.mxu0 0.0
    %5576 = vmatpush1.msra.mxu0 0.0
    %5577 = vmatprep.subr.mxu0 0.0
    %5578 = vmatpush1.msra.mxu0 0.0
    %5579 = vmatprep.subr.mxu0 0.0
    %5580 = vmatpush1.msra.mxu0 0.0
    %5581 = vmatprep.mubr.f32.mxu0 0.0
    %5582 = vmatmul.mubr.f32.gmra.mrb[0].mxu0 %v5512
    %v5583 = vpop.f32.mrb[0].mxu0
    %v5584 = vadd.f32 0.0, %v5583
    %v5585 = vpop.f32.mrb[0].mxu0
    %5586 = vmatprep.mubr.f32.mxu0 0.0
    %5587 = vmatmul.mubr.f32.gmra.mrb[0].mxu0 %v5515
    %v5588 = vpop.f32.mrb[0].mxu0
    %v5589 = vadd.f32 0.0, %v5588
    %v5590 = vpop.f32.mrb[0].mxu0
    %5591 = vdwg.mxu0
    %v5593 = vsel %vm1977, %v5347, 0
    %v5596 = vsel %vm1977, %v5348, 0
    %5598 = vmatprep.subr.mxu0 0.0
    %5599 = vmatpush1.msra.mxu0 %v4666
    %5600 = vmatprep.subr.mxu0 0.0
    %5601 = vmatpush1.msra.mxu0 %v4669
    %5602 = vmatprep.subr.mxu0 0.0
    %5603 = vmatpush1.msra.mxu0 0.0
    %5604 = vmatprep.subr.mxu0 0.0
    %5605 = vmatpush1.msra.mxu0 0.0
    %5606 = vmatprep.subr.mxu0 0.0
    %5607 = vmatpush1.msra.mxu0 0.0
    %5608 = vmatprep.subr.mxu0 0.0
    %5609 = vmatpush1.msra.mxu0 0.0
    %5610 = vmatprep.subr.mxu0 0.0
    %5611 = vmatpush1.msra.mxu0 0.0
    %5612 = vmatprep.subr.mxu0 0.0
    %5613 = vmatpush1.msra.mxu0 0.0
    %5614 = vmatprep.subr.mxu0 0.0
    %5615 = vmatpush1.msra.mxu0 0.0
    %5616 = vmatprep.subr.mxu0 0.0
    %5617 = vmatpush1.msra.mxu0 0.0
    %5618 = vmatprep.subr.mxu0 0.0
    %5619 = vmatpush1.msra.mxu0 0.0
    %5620 = vmatprep.subr.mxu0 0.0
    %5621 = vmatpush1.msra.mxu0 0.0
    %5622 = vmatprep.subr.mxu0 0.0
    %5623 = vmatpush1.msra.mxu0 0.0
    %5624 = vmatprep.subr.mxu0 0.0
    %5625 = vmatpush1.msra.mxu0 0.0
    %5626 = vmatprep.subr.mxu0 0.0
    %5627 = vmatpush1.msra.mxu0 0.0
    %5628 = vmatprep.subr.mxu0 0.0
    %5629 = vmatpush1.msra.mxu0 0.0
    %5630 = vmatprep.subr.mxu0 0.0
    %5631 = vmatpush1.msra.mxu0 0.0
    %5632 = vmatprep.subr.mxu0 0.0
    %5633 = vmatpush1.msra.mxu0 0.0
    %5634 = vmatprep.subr.mxu0 0.0
    %5635 = vmatpush1.msra.mxu0 0.0
    %5636 = vmatprep.subr.mxu0 0.0
    %5637 = vmatpush1.msra.mxu0 0.0
    %5638 = vmatprep.subr.mxu0 0.0
    %5639 = vmatpush1.msra.mxu0 0.0
    %5640 = vmatprep.subr.mxu0 0.0
    %5641 = vmatpush1.msra.mxu0 0.0
    %5642 = vmatprep.subr.mxu0 0.0
    %5643 = vmatpush1.msra.mxu0 0.0
    %5644 = vmatprep.subr.mxu0 0.0
    %5645 = vmatpush1.msra.mxu0 0.0
    %5646 = vmatprep.subr.mxu0 0.0
    %5647 = vmatpush1.msra.mxu0 0.0
    %5648 = vmatprep.subr.mxu0 0.0
    %5649 = vmatpush1.msra.mxu0 0.0
    %5650 = vmatprep.subr.mxu0 0.0
    %5651 = vmatpush1.msra.mxu0 0.0
    %5652 = vmatprep.subr.mxu0 0.0
    %5653 = vmatpush1.msra.mxu0 0.0
    %5654 = vmatprep.subr.mxu0 0.0
    %5655 = vmatpush1.msra.mxu0 0.0
    %5656 = vmatprep.subr.mxu0 0.0
    %5657 = vmatpush1.msra.mxu0 0.0
    %5658 = vmatprep.subr.mxu0 0.0
    %5659 = vmatpush1.msra.mxu0 0.0
    %5660 = vmatprep.subr.mxu0 0.0
    %5661 = vmatpush1.msra.mxu0 0.0
    %5662 = vmatprep.mubr.f32.mxu0 0.0
    %5663 = vmatmul.mubr.f32.gmra.mrb[0].mxu0 %v5593
    %v5664 = vpop.f32.mrb[0].mxu0
    %v5665 = vadd.f32 0.0, %v5664
    %v5666 = vpop.f32.mrb[0].mxu0
    %5667 = vmatprep.mubr.f32.mxu0 0.0
    %5668 = vmatmul.mubr.f32.gmra.mrb[0].mxu0 %v5596
    %v5669 = vpop.f32.mrb[0].mxu0
    %v5670 = vadd.f32 0.0, %v5669
    %v5671 = vpop.f32.mrb[0].mxu0
    %5672 = vdwg.mxu0
    %v5673 = vpack.c.bf16 %v5427, %v5422
    %v5674 = vpack.c.bf16 %v5508, %v5503
    %v5675 = vpack.c.bf16 %v5589, %v5584
    %v5676 = vpack.c.bf16 %v5670, %v5665
    %v5693 = vunpack.c.l.b16 %v3525
    %v5694 = vunpack.c.l.b16 %v3526
    %v5695 = vunpack.c.l.b16 %v3527
    %v5696 = vunpack.c.l.b16 %v3528
    %v5697 = vunpack.c.l.b16 %v3529
    %v5698 = vunpack.c.l.b16 %v3530
    %v5699 = vunpack.c.l.b16 %v3531
    %v5700 = vunpack.c.l.b16 %v3532
    %v5701 = vunpack.c.l.b16 %v3533
    %v5702 = vunpack.c.l.b16 %v3534
    %v5703 = vunpack.c.l.b16 %v3535
    %v5704 = vunpack.c.l.b16 %v3536
    %v5705 = vunpack.c.l.b16 %v3537
    %v5706 = vunpack.c.l.b16 %v3538
    %v5707 = vunpack.c.l.b16 %v3539
    %v5708 = vunpack.c.l.b16 %v3540
    %v5709 = vpack.c.b16 %v5694, %v5693
    %v5710 = vpack.c.b16 %v5696, %v5695
    %v5711 = vpack.c.b16 %v5698, %v5697
    %v5712 = vpack.c.b16 %v5700, %v5699
    %v5713 = vpack.c.b16 %v5702, %v5701
    %v5714 = vpack.c.b16 %v5704, %v5703
    %v5715 = vpack.c.b16 %v5706, %v5705
    %v5716 = vpack.c.b16 %v5708, %v5707
    %v5718 = vsel %vm1387, %v5673, 0
    %v5721 = vsel %vm1387, %v5709, 0
    %v5724 = vsel %vm1387, %v5710, 0
    %v5727 = vsel %vm1387, %v5711, 0
    %v5730 = vsel %vm1387, %v5712, 0
    %v5733 = vsel %vm1387, %v5713, 0
    %v5736 = vsel %vm1387, %v5714, 0
    %v5739 = vsel %vm1387, %v5715, 0
    %v5742 = vsel %vm1387, %v5716, 0
    %5744 = vmatprep.subr.bf16.mxu0 0
    %5745 = vmatpush1.bf16.xpose.msra.mxu0 %v5721
    %5746 = vmatprep.subr.bf16.mxu0 0
    %5747 = vmatpush1.bf16.xpose.msra.mxu0 %v5724
    %5748 = vmatprep.subr.bf16.mxu0 0
    %5749 = vmatpush1.bf16.xpose.msra.mxu0 %v5727
    %5750 = vmatprep.subr.bf16.mxu0 0
    %5751 = vmatpush1.bf16.xpose.msra.mxu0 %v5730
    %5752 = vmatprep.subr.bf16.mxu0 0
    %5753 = vmatpush1.bf16.xpose.msra.mxu0 %v5733
    %5754 = vmatprep.subr.bf16.mxu0 0
    %5755 = vmatpush1.bf16.xpose.msra.mxu0 %v5736
    %5756 = vmatprep.subr.bf16.mxu0 0
    %5757 = vmatpush1.bf16.xpose.msra.mxu0 %v5739
    %5758 = vmatprep.subr.bf16.mxu0 0
    %5759 = vmatpush1.bf16.xpose.msra.mxu0 %v5742
    %5760 = vmatprep.subr.bf16.mxu0 0
    %5761 = vmatpush1.bf16.xpose.msra.mxu0 0
    %5762 = vmatprep.subr.bf16.mxu0 0
    %5763 = vmatpush1.bf16.xpose.msra.mxu0 0
    %5764 = vmatprep.subr.bf16.mxu0 0
    %5765 = vmatpush1.bf16.xpose.msra.mxu0 0
    %5766 = vmatprep.subr.bf16.mxu0 0
    %5767 = vmatpush1.bf16.xpose.msra.mxu0 0
    %5768 = vmatprep.subr.bf16.mxu0 0
    %5769 = vmatpush1.bf16.xpose.msra.mxu0 0
    %5770 = vmatprep.subr.bf16.mxu0 0
    %5771 = vmatpush1.bf16.xpose.msra.mxu0 0
    %5772 = vmatprep.subr.bf16.mxu0 0
    %5773 = vmatpush1.bf16.xpose.msra.mxu0 0
    %5774 = vmatprep.subr.bf16.mxu0 0
    %5775 = vmatpush1.bf16.xpose.msra.mxu0 0
    %5776 = vmatprep.mubr.bf16.mxu0 0
    %5777 = vmatmul.mubr.bf16.gmra.mrb[0].mxu0 %v5718
    %v5778 = vpop.f32.mrb[0].mxu0
    %v5779 = vadd.f32 0.0, %v5778
    %v5780 = vpop.f32.mrb[0].mxu0
    %v5781 = vpop.f32.mrb[0].mxu0
    %v5782 = vadd.f32 0.0, %v5781
    %v5783 = vpop.f32.mrb[0].mxu0
    %5784 = vdwg.mxu0
    %v5801 = vunpack.c.l.b16 %v3541
    %v5802 = vunpack.c.l.b16 %v3542
    %v5803 = vunpack.c.l.b16 %v3543
    %v5804 = vunpack.c.l.b16 %v3544
    %v5805 = vunpack.c.l.b16 %v3545
    %v5806 = vunpack.c.l.b16 %v3546
    %v5807 = vunpack.c.l.b16 %v3547
    %v5808 = vunpack.c.l.b16 %v3548
    %v5809 = vunpack.c.l.b16 %v3549
    %v5810 = vunpack.c.l.b16 %v3550
    %v5811 = vunpack.c.l.b16 %v3551
    %v5812 = vunpack.c.l.b16 %v3552
    %v5813 = vunpack.c.l.b16 %v3553
    %v5814 = vunpack.c.l.b16 %v3554
    %v5815 = vunpack.c.l.b16 %v3555
    %v5816 = vunpack.c.l.b16 %v3556
    %v5817 = vpack.c.b16 %v5802, %v5801
    %v5818 = vpack.c.b16 %v5804, %v5803
    %v5819 = vpack.c.b16 %v5806, %v5805
    %v5820 = vpack.c.b16 %v5808, %v5807
    %v5821 = vpack.c.b16 %v5810, %v5809
    %v5822 = vpack.c.b16 %v5812, %v5811
    %v5823 = vpack.c.b16 %v5814, %v5813
    %v5824 = vpack.c.b16 %v5816, %v5815
    %v5826 = vsel %vm1387, %v5674, 0
    %v5829 = vsel %vm1387, %v5817, 0
    %v5832 = vsel %vm1387, %v5818, 0
    %v5835 = vsel %vm1387, %v5819, 0
    %v5838 = vsel %vm1387, %v5820, 0
    %v5841 = vsel %vm1387, %v5821, 0
    %v5844 = vsel %vm1387, %v5822, 0
    %v5847 = vsel %vm1387, %v5823, 0
    %v5850 = vsel %vm1387, %v5824, 0
    %5852 = vmatprep.subr.bf16.mxu0 0
    %5853 = vmatpush1.bf16.xpose.msra.mxu0 %v5829
    %5854 = vmatprep.subr.bf16.mxu0 0
    %5855 = vmatpush1.bf16.xpose.msra.mxu0 %v5832
    %5856 = vmatprep.subr.bf16.mxu0 0
    %5857 = vmatpush1.bf16.xpose.msra.mxu0 %v5835
    %5858 = vmatprep.subr.bf16.mxu0 0
    %5859 = vmatpush1.bf16.xpose.msra.mxu0 %v5838
    %5860 = vmatprep.subr.bf16.mxu0 0
    %5861 = vmatpush1.bf16.xpose.msra.mxu0 %v5841
    %5862 = vmatprep.subr.bf16.mxu0 0
    %5863 = vmatpush1.bf16.xpose.msra.mxu0 %v5844
    %5864 = vmatprep.subr.bf16.mxu0 0
    %5865 = vmatpush1.bf16.xpose.msra.mxu0 %v5847
    %5866 = vmatprep.subr.bf16.mxu0 0
    %5867 = vmatpush1.bf16.xpose.msra.mxu0 %v5850
    %5868 = vmatprep.subr.bf16.mxu0 0
    %5869 = vmatpush1.bf16.xpose.msra.mxu0 0
    %5870 = vmatprep.subr.bf16.mxu0 0
    %5871 = vmatpush1.bf16.xpose.msra.mxu0 0
    %5872 = vmatprep.subr.bf16.mxu0 0
    %5873 = vmatpush1.bf16.xpose.msra.mxu0 0
    %5874 = vmatprep.subr.bf16.mxu0 0
    %5875 = vmatpush1.bf16.xpose.msra.mxu0 0
    %5876 = vmatprep.subr.bf16.mxu0 0
    %5877 = vmatpush1.bf16.xpose.msra.mxu0 0
    %5878 = vmatprep.subr.bf16.mxu0 0
    %5879 = vmatpush1.bf16.xpose.msra.mxu0 0
    %5880 = vmatprep.subr.bf16.mxu0 0
    %5881 = vmatpush1.bf16.xpose.msra.mxu0 0
    %5882 = vmatprep.subr.bf16.mxu0 0
    %5883 = vmatpush1.bf16.xpose.msra.mxu0 0
    %5884 = vmatprep.mubr.bf16.mxu0 0
    %5885 = vmatmul.mubr.bf16.gmra.mrb[0].mxu0 %v5826
    %v5886 = vpop.f32.mrb[0].mxu0
    %v5887 = vadd.f32 0.0, %v5886
    %v5888 = vpop.f32.mrb[0].mxu0
    %v5889 = vpop.f32.mrb[0].mxu0
    %v5890 = vadd.f32 0.0, %v5889
    %v5891 = vpop.f32.mrb[0].mxu0
    %5892 = vdwg.mxu0
    %v5909 = vunpack.c.l.b16 %v3557
    %v5910 = vunpack.c.l.b16 %v3558
    %v5911 = vunpack.c.l.b16 %v3559
    %v5912 = vunpack.c.l.b16 %v3560
    %v5913 = vunpack.c.l.b16 %v3561
    %v5914 = vunpack.c.l.b16 %v3562
    %v5915 = vunpack.c.l.b16 %v3563
    %v5916 = vunpack.c.l.b16 %v3564
    %v5917 = vunpack.c.l.b16 %v3565
    %v5918 = vunpack.c.l.b16 %v3566
    %v5919 = vunpack.c.l.b16 %v3567
    %v5920 = vunpack.c.l.b16 %v3568
    %v5921 = vunpack.c.l.b16 %v3569
    %v5922 = vunpack.c.l.b16 %v3570
    %v5923 = vunpack.c.l.b16 %v3571
    %v5924 = vunpack.c.l.b16 %v3572
    %v5925 = vpack.c.b16 %v5910, %v5909
    %v5926 = vpack.c.b16 %v5912, %v5911
    %v5927 = vpack.c.b16 %v5914, %v5913
    %v5928 = vpack.c.b16 %v5916, %v5915
    %v5929 = vpack.c.b16 %v5918, %v5917
    %v5930 = vpack.c.b16 %v5920, %v5919
    %v5931 = vpack.c.b16 %v5922, %v5921
    %v5932 = vpack.c.b16 %v5924, %v5923
    %v5934 = vsel %vm1387, %v5675, 0
    %v5937 = vsel %vm1387, %v5925, 0
    %v5940 = vsel %vm1387, %v5926, 0
    %v5943 = vsel %vm1387, %v5927, 0
    %v5946 = vsel %vm1387, %v5928, 0
    %v5949 = vsel %vm1387, %v5929, 0
    %v5952 = vsel %vm1387, %v5930, 0
    %v5955 = vsel %vm1387, %v5931, 0
    %v5958 = vsel %vm1387, %v5932, 0
    %5960 = vmatprep.subr.bf16.mxu0 0
    %5961 = vmatpush1.bf16.xpose.msra.mxu0 %v5937
    %5962 = vmatprep.subr.bf16.mxu0 0
    %5963 = vmatpush1.bf16.xpose.msra.mxu0 %v5940
    %5964 = vmatprep.subr.bf16.mxu0 0
    %5965 = vmatpush1.bf16.xpose.msra.mxu0 %v5943
    %5966 = vmatprep.subr.bf16.mxu0 0
    %5967 = vmatpush1.bf16.xpose.msra.mxu0 %v5946
    %5968 = vmatprep.subr.bf16.mxu0 0
    %5969 = vmatpush1.bf16.xpose.msra.mxu0 %v5949
    %5970 = vmatprep.subr.bf16.mxu0 0
    %5971 = vmatpush1.bf16.xpose.msra.mxu0 %v5952
    %5972 = vmatprep.subr.bf16.mxu0 0
    %5973 = vmatpush1.bf16.xpose.msra.mxu0 %v5955
    %5974 = vmatprep.subr.bf16.mxu0 0
    %5975 = vmatpush1.bf16.xpose.msra.mxu0 %v5958
    %5976 = vmatprep.subr.bf16.mxu0 0
    %5977 = vmatpush1.bf16.xpose.msra.mxu0 0
    %5978 = vmatprep.subr.bf16.mxu0 0
    %5979 = vmatpush1.bf16.xpose.msra.mxu0 0
    %5980 = vmatprep.subr.bf16.mxu0 0
    %5981 = vmatpush1.bf16.xpose.msra.mxu0 0
    %5982 = vmatprep.subr.bf16.mxu0 0
    %5983 = vmatpush1.bf16.xpose.msra.mxu0 0
    %5984 = vmatprep.subr.bf16.mxu0 0
    %5985 = vmatpush1.bf16.xpose.msra.mxu0 0
    %5986 = vmatprep.subr.bf16.mxu0 0
    %5987 = vmatpush1.bf16.xpose.msra.mxu0 0
    %5988 = vmatprep.subr.bf16.mxu0 0
    %5989 = vmatpush1.bf16.xpose.msra.mxu0 0
    %5990 = vmatprep.subr.bf16.mxu0 0
    %5991 = vmatpush1.bf16.xpose.msra.mxu0 0
    %5992 = vmatprep.mubr.bf16.mxu0 0
    %5993 = vmatmul.mubr.bf16.gmra.mrb[0].mxu0 %v5934
    %v5994 = vpop.f32.mrb[0].mxu0
    %v5995 = vadd.f32 0.0, %v5994
    %v5996 = vpop.f32.mrb[0].mxu0
    %v5997 = vpop.f32.mrb[0].mxu0
    %v5998 = vadd.f32 0.0, %v5997
    %v5999 = vpop.f32.mrb[0].mxu0
    %6000 = vdwg.mxu0
    %v6017 = vunpack.c.l.b16 %v3573
    %v6018 = vunpack.c.l.b16 %v3574
    %v6019 = vunpack.c.l.b16 %v3575
    %v6020 = vunpack.c.l.b16 %v3576
    %v6021 = vunpack.c.l.b16 %v3577
    %v6022 = vunpack.c.l.b16 %v3578
    %v6023 = vunpack.c.l.b16 %v3579
    %v6024 = vunpack.c.l.b16 %v3580
    %v6025 = vunpack.c.l.b16 %v3581
    %v6026 = vunpack.c.l.b16 %v3582
    %v6027 = vunpack.c.l.b16 %v3583
    %v6028 = vunpack.c.l.b16 %v3584
    %v6029 = vunpack.c.l.b16 %v3585
    %v6030 = vunpack.c.l.b16 %v3586
    %v6031 = vunpack.c.l.b16 %v3587
    %v6032 = vunpack.c.l.b16 %v3588
    %v6033 = vpack.c.b16 %v6018, %v6017
    %v6034 = vpack.c.b16 %v6020, %v6019
    %v6035 = vpack.c.b16 %v6022, %v6021
    %v6036 = vpack.c.b16 %v6024, %v6023
    %v6037 = vpack.c.b16 %v6026, %v6025
    %v6038 = vpack.c.b16 %v6028, %v6027
    %v6039 = vpack.c.b16 %v6030, %v6029
    %v6040 = vpack.c.b16 %v6032, %v6031
    %v6042 = vsel %vm1387, %v5676, 0
    %v6045 = vsel %vm1387, %v6033, 0
    %v6048 = vsel %vm1387, %v6034, 0
    %v6051 = vsel %vm1387, %v6035, 0
    %v6054 = vsel %vm1387, %v6036, 0
    %v6057 = vsel %vm1387, %v6037, 0
    %v6060 = vsel %vm1387, %v6038, 0
    %v6063 = vsel %vm1387, %v6039, 0
    %v6066 = vsel %vm1387, %v6040, 0
    %6068 = vmatprep.subr.bf16.mxu0 0
    %6069 = vmatpush1.bf16.xpose.msra.mxu0 %v6045
    %6070 = vmatprep.subr.bf16.mxu0 0
    %6071 = vmatpush1.bf16.xpose.msra.mxu0 %v6048
    %6072 = vmatprep.subr.bf16.mxu0 0
    %6073 = vmatpush1.bf16.xpose.msra.mxu0 %v6051
    %6074 = vmatprep.subr.bf16.mxu0 0
    %6075 = vmatpush1.bf16.xpose.msra.mxu0 %v6054
    %6076 = vmatprep.subr.bf16.mxu0 0
    %6077 = vmatpush1.bf16.xpose.msra.mxu0 %v6057
    %6078 = vmatprep.subr.bf16.mxu0 0
    %6079 = vmatpush1.bf16.xpose.msra.mxu0 %v6060
    %6080 = vmatprep.subr.bf16.mxu0 0
    %6081 = vmatpush1.bf16.xpose.msra.mxu0 %v6063
    %6082 = vmatprep.subr.bf16.mxu0 0
    %6083 = vmatpush1.bf16.xpose.msra.mxu0 %v6066
    %6084 = vmatprep.subr.bf16.mxu0 0
    %6085 = vmatpush1.bf16.xpose.msra.mxu0 0
    %6086 = vmatprep.subr.bf16.mxu0 0
    %6087 = vmatpush1.bf16.xpose.msra.mxu0 0
    %6088 = vmatprep.subr.bf16.mxu0 0
    %6089 = vmatpush1.bf16.xpose.msra.mxu0 0
    %6090 = vmatprep.subr.bf16.mxu0 0
    %6091 = vmatpush1.bf16.xpose.msra.mxu0 0
    %6092 = vmatprep.subr.bf16.mxu0 0
    %6093 = vmatpush1.bf16.xpose.msra.mxu0 0
    %6094 = vmatprep.subr.bf16.mxu0 0
    %6095 = vmatpush1.bf16.xpose.msra.mxu0 0
    %6096 = vmatprep.subr.bf16.mxu0 0
    %6097 = vmatpush1.bf16.xpose.msra.mxu0 0
    %6098 = vmatprep.subr.bf16.mxu0 0
    %6099 = vmatpush1.bf16.xpose.msra.mxu0 0
    %6100 = vmatprep.mubr.bf16.mxu0 0
    %6101 = vmatmul.mubr.bf16.gmra.mrb[0].mxu0 %v6042
    %v6102 = vpop.f32.mrb[0].mxu0
    %v6103 = vadd.f32 0.0, %v6102
    %v6104 = vpop.f32.mrb[0].mxu0
    %v6105 = vpop.f32.mrb[0].mxu0
    %v6106 = vadd.f32 0.0, %v6105
    %v6107 = vpop.f32.mrb[0].mxu0
    %6108 = vdwg.mxu0
    %v6109 = vadd.f32 %v5779, %v5887
    %v6110 = vadd.f32 %v6109, %v5995
    %v6111 = vadd.f32 %v6110, %v6103
    %v6112 = vadd.f32 %v5782, %v5890
    %v6113 = vadd.f32 %v6112, %v5998
    %v6114 = vadd.f32 %v6113, %v6106
    %v6115 = vadd.f32 %v3330, %v6111
    %v6116 = vadd.f32 %v3331, %v6114
    %v6117 = vmul.f32 %v6115, %v6115
    %v6118 = vmul.f32 %v6116, %v6116
    %6119 = vadd.xlane.f32.xlu0 %v6117
    %v6120 = vpop.xlane.xlu0 %6119
    %6121 = vadd.xlane.f32.xlu0 %v6118
    %v6122 = vpop.xlane.xlu0 %6121
    %v6123 = vmul.f32 %v6120, %v309
    %v6124 = vmul.f32 %v6122, %v309
    %v6125 = vadd.f32 %v6123, 1e-05
    %v6126 = vadd.f32 %v6124, 1e-05
    %v6127 = vrsqrt.pop %v6125
    %v6128 = vrsqrt.pop %v6126
    %v6129 = vmul.f32 %v6115, %v6127
    %v6130 = vmul.f32 %v6116, %v6128
    %v6131 = vpack.c.bf16 %v6130, %v6129
    %s6132 = scalar_lea.vmem %s7, 256
    %v6133 = vld [vmem:[%s6132] sm:$0xff]
    %v6134 = vld [vmem:[%s6132 + $0x8] sm:$0xff]
    %v6135 = vld [vmem:[%s6132 + $0x10] sm:$0xff]
    %v6136 = vld [vmem:[%s6132 + $0x18] sm:$0xff]
    %v6137 = vld [vmem:[%s6132 + $0x20] sm:$0xff]
    %v6138 = vld [vmem:[%s6132 + $0x28] sm:$0xff]
    %v6139 = vld [vmem:[%s6132 + $0x30] sm:$0xff]
    %v6140 = vld [vmem:[%s6132 + $0x38] sm:$0xff]
    %v6141 = vld [vmem:[%s6132 + $0x40] sm:$0xff]
    %v6142 = vld [vmem:[%s6132 + $0x48] sm:$0xff]
    %v6143 = vld [vmem:[%s6132 + $0x50] sm:$0xff]
    %v6144 = vld [vmem:[%s6132 + $0x58] sm:$0xff]
    %v6145 = vld [vmem:[%s6132 + $0x60] sm:$0xff]
    %v6146 = vld [vmem:[%s6132 + $0x68] sm:$0xff]
    %v6147 = vld [vmem:[%s6132 + $0x70] sm:$0xff]
    %v6148 = vld [vmem:[%s6132 + $0x78] sm:$0xff]
    %v6149 = vld [vmem:[%s6132 + $0x80] sm:$0xff]
    %v6150 = vld [vmem:[%s6132 + $0x88] sm:$0xff]
    %v6151 = vld [vmem:[%s6132 + $0x90] sm:$0xff]
    %v6152 = vld [vmem:[%s6132 + $0x98] sm:$0xff]
    %v6153 = vld [vmem:[%s6132 + $0xa0] sm:$0xff]
    %v6154 = vld [vmem:[%s6132 + $0xa8] sm:$0xff]
    %v6155 = vld [vmem:[%s6132 + $0xb0] sm:$0xff]
    %v6156 = vld [vmem:[%s6132 + $0xb8] sm:$0xff]
    %v6157 = vld [vmem:[%s6132 + $0xc0] sm:$0xff]
    %v6158 = vld [vmem:[%s6132 + $0xc8] sm:$0xff]
    %v6159 = vld [vmem:[%s6132 + $0xd0] sm:$0xff]
    %v6160 = vld [vmem:[%s6132 + $0xd8] sm:$0xff]
    %v6161 = vld [vmem:[%s6132 + $0xe0] sm:$0xff]
    %v6162 = vld [vmem:[%s6132 + $0xe8] sm:$0xff]
    %v6163 = vld [vmem:[%s6132 + $0xf0] sm:$0xff]
    %v6164 = vld [vmem:[%s6132 + $0xf8] sm:$0xff]
    %v6197 = vunpack.c.l.b16 %v6133
    %v6198 = vunpack.c.h.b16 %v6133
    %v6199 = vunpack.c.l.b16 %v6134
    %v6200 = vunpack.c.h.b16 %v6134
    %v6201 = vunpack.c.l.b16 %v6135
    %v6202 = vunpack.c.h.b16 %v6135
    %v6203 = vunpack.c.l.b16 %v6136
    %v6204 = vunpack.c.h.b16 %v6136
    %v6205 = vunpack.c.l.b16 %v6137
    %v6206 = vunpack.c.h.b16 %v6137
    %v6207 = vunpack.c.l.b16 %v6138
    %v6208 = vunpack.c.h.b16 %v6138
    %v6209 = vunpack.c.l.b16 %v6139
    %v6210 = vunpack.c.h.b16 %v6139
    %v6211 = vunpack.c.l.b16 %v6140
    %v6212 = vunpack.c.h.b16 %v6140
    %v6213 = vunpack.c.l.b16 %v6141
    %v6214 = vunpack.c.h.b16 %v6141
    %v6215 = vunpack.c.l.b16 %v6142
    %v6216 = vunpack.c.h.b16 %v6142
    %v6217 = vunpack.c.l.b16 %v6143
    %v6218 = vunpack.c.h.b16 %v6143
    %v6219 = vunpack.c.l.b16 %v6144
    %v6220 = vunpack.c.h.b16 %v6144
    %v6221 = vunpack.c.l.b16 %v6145
    %v6222 = vunpack.c.h.b16 %v6145
    %v6223 = vunpack.c.l.b16 %v6146
    %v6224 = vunpack.c.h.b16 %v6146
    %v6225 = vunpack.c.l.b16 %v6147
    %v6226 = vunpack.c.h.b16 %v6147
    %v6227 = vunpack.c.l.b16 %v6148
    %v6228 = vunpack.c.h.b16 %v6148
    %v6229 = vunpack.c.l.b16 %v6149
    %v6230 = vunpack.c.h.b16 %v6149
    %v6231 = vunpack.c.l.b16 %v6150
    %v6232 = vunpack.c.h.b16 %v6150
    %v6233 = vunpack.c.l.b16 %v6151
    %v6234 = vunpack.c.h.b16 %v6151
    %v6235 = vunpack.c.l.b16 %v6152
    %v6236 = vunpack.c.h.b16 %v6152
    %v6237 = vunpack.c.l.b16 %v6153
    %v6238 = vunpack.c.h.b16 %v6153
    %v6239 = vunpack.c.l.b16 %v6154
    %v6240 = vunpack.c.h.b16 %v6154
    %v6241 = vunpack.c.l.b16 %v6155
    %v6242 = vunpack.c.h.b16 %v6155
    %v6243 = vunpack.c.l.b16 %v6156
    %v6244 = vunpack.c.h.b16 %v6156
    %v6245 = vunpack.c.l.b16 %v6157
    %v6246 = vunpack.c.h.b16 %v6157
    %v6247 = vunpack.c.l.b16 %v6158
    %v6248 = vunpack.c.h.b16 %v6158
    %v6249 = vunpack.c.l.b16 %v6159
    %v6250 = vunpack.c.h.b16 %v6159
    %v6251 = vunpack.c.l.b16 %v6160
    %v6252 = vunpack.c.h.b16 %v6160
    %v6253 = vunpack.c.l.b16 %v6161
    %v6254 = vunpack.c.h.b16 %v6161
    %v6255 = vunpack.c.l.b16 %v6162
    %v6256 = vunpack.c.h.b16 %v6162
    %v6257 = vunpack.c.l.b16 %v6163
    %v6258 = vunpack.c.h.b16 %v6163
    %v6259 = vunpack.c.l.b16 %v6164
    %v6260 = vunpack.c.h.b16 %v6164
    %v6261 = vpack.c.b16 %v6201, %v6197
    %v6262 = vpack.c.b16 %v6202, %v6198
    %v6263 = vpack.c.b16 %v6203, %v6199
    %v6264 = vpack.c.b16 %v6204, %v6200
    %v6265 = vpack.c.b16 %v6209, %v6205
    %v6266 = vpack.c.b16 %v6210, %v6206
    %v6267 = vpack.c.b16 %v6211, %v6207
    %v6268 = vpack.c.b16 %v6212, %v6208
    %v6269 = vpack.c.b16 %v6217, %v6213
    %v6270 = vpack.c.b16 %v6218, %v6214
    %v6271 = vpack.c.b16 %v6219, %v6215
    %v6272 = vpack.c.b16 %v6220, %v6216
    %v6273 = vpack.c.b16 %v6225, %v6221
    %v6274 = vpack.c.b16 %v6226, %v6222
    %v6275 = vpack.c.b16 %v6227, %v6223
    %v6276 = vpack.c.b16 %v6228, %v6224
    %v6277 = vpack.c.b16 %v6233, %v6229
    %v6278 = vpack.c.b16 %v6234, %v6230
    %v6279 = vpack.c.b16 %v6235, %v6231
    %v6280 = vpack.c.b16 %v6236, %v6232
    %v6281 = vpack.c.b16 %v6241, %v6237
    %v6282 = vpack.c.b16 %v6242, %v6238
    %v6283 = vpack.c.b16 %v6243, %v6239
    %v6284 = vpack.c.b16 %v6244, %v6240
    %v6285 = vpack.c.b16 %v6249, %v6245
    %v6286 = vpack.c.b16 %v6250, %v6246
    %v6287 = vpack.c.b16 %v6251, %v6247
    %v6288 = vpack.c.b16 %v6252, %v6248
    %v6289 = vpack.c.b16 %v6257, %v6253
    %v6290 = vpack.c.b16 %v6258, %v6254
    %v6291 = vpack.c.b16 %v6259, %v6255
    %v6292 = vpack.c.b16 %v6260, %v6256
    %6325 = vmatprep.subr.bf16.mxu0 %v6262
    %6326 = vmatpush1.bf16.msra.mxu0 %v6261
    %6327 = vmatprep.subr.bf16.mxu0 %v6266
    %6328 = vmatpush1.bf16.msra.mxu0 %v6265
    %6329 = vmatprep.subr.bf16.mxu0 %v6270
    %6330 = vmatpush1.bf16.msra.mxu0 %v6269
    %6331 = vmatprep.subr.bf16.mxu0 %v6274
    %6332 = vmatpush1.bf16.msra.mxu0 %v6273
    %6333 = vmatprep.subr.bf16.mxu0 %v6278
    %6334 = vmatpush1.bf16.msra.mxu0 %v6277
    %6335 = vmatprep.subr.bf16.mxu0 %v6282
    %6336 = vmatpush1.bf16.msra.mxu0 %v6281
    %6337 = vmatprep.subr.bf16.mxu0 %v6286
    %6338 = vmatpush1.bf16.msra.mxu0 %v6285
    %6339 = vmatprep.subr.bf16.mxu0 %v6290
    %6340 = vmatpush1.bf16.msra.mxu0 %v6289
    %6341 = vmatprep.subr.bf16.mxu0 0
    %6342 = vmatpush1.bf16.msra.mxu0 0
    %6343 = vmatprep.subr.bf16.mxu0 0
    %6344 = vmatpush1.bf16.msra.mxu0 0
    %6345 = vmatprep.subr.bf16.mxu0 0
    %6346 = vmatpush1.bf16.msra.mxu0 0
    %6347 = vmatprep.subr.bf16.mxu0 0
    %6348 = vmatpush1.bf16.msra.mxu0 0
    %6349 = vmatprep.subr.bf16.mxu0 0
    %6350 = vmatpush1.bf16.msra.mxu0 0
    %6351 = vmatprep.subr.bf16.mxu0 0
    %6352 = vmatpush1.bf16.msra.mxu0 0
    %6353 = vmatprep.subr.bf16.mxu0 0
    %6354 = vmatpush1.bf16.msra.mxu0 0
    %6355 = vmatprep.subr.bf16.mxu0 0
    %6356 = vmatpush1.bf16.msra.mxu0 0
    %6357 = vmatprep.mubr.bf16.mxu0 0
    %6358 = vmatmul.mubr.bf16.gmra.mrb[0].mxu0 %v6131
    %v6359 = vpop.f32.mrb[0].mxu0
    %v6360 = vadd.f32 0.0, %v6359
    %v6361 = vpop.f32.mrb[0].mxu0
    %v6362 = vadd.f32 0.0, %v6361
    %v6363 = vpop.f32.mrb[0].mxu0
    %v6364 = vadd.f32 0.0, %v6363
    %v6365 = vpop.f32.mrb[0].mxu0
    %v6366 = vadd.f32 0.0, %v6365
    %6367 = vdwg.mxu0
    %6368 = vmatprep.subr.bf16.mxu0 %v6264
    %6369 = vmatpush1.bf16.msra.mxu0 %v6263
    %6370 = vmatprep.subr.bf16.mxu0 %v6268
    %6371 = vmatpush1.bf16.msra.mxu0 %v6267
    %6372 = vmatprep.subr.bf16.mxu0 %v6272
    %6373 = vmatpush1.bf16.msra.mxu0 %v6271
    %6374 = vmatprep.subr.bf16.mxu0 %v6276
    %6375 = vmatpush1.bf16.msra.mxu0 %v6275
    %6376 = vmatprep.subr.bf16.mxu0 %v6280
    %6377 = vmatpush1.bf16.msra.mxu0 %v6279
    %6378 = vmatprep.subr.bf16.mxu0 %v6284
    %6379 = vmatpush1.bf16.msra.mxu0 %v6283
    %6380 = vmatprep.subr.bf16.mxu0 %v6288
    %6381 = vmatpush1.bf16.msra.mxu0 %v6287
    %6382 = vmatprep.subr.bf16.mxu0 %v6292
    %6383 = vmatpush1.bf16.msra.mxu0 %v6291
    %6384 = vmatprep.subr.bf16.mxu0 0
    %6385 = vmatpush1.bf16.msra.mxu0 0
    %6386 = vmatprep.subr.bf16.mxu0 0
    %6387 = vmatpush1.bf16.msra.mxu0 0
    %6388 = vmatprep.subr.bf16.mxu0 0
    %6389 = vmatpush1.bf16.msra.mxu0 0
    %6390 = vmatprep.subr.bf16.mxu0 0
    %6391 = vmatpush1.bf16.msra.mxu0 0
    %6392 = vmatprep.subr.bf16.mxu0 0
    %6393 = vmatpush1.bf16.msra.mxu0 0
    %6394 = vmatprep.subr.bf16.mxu0 0
    %6395 = vmatpush1.bf16.msra.mxu0 0
    %6396 = vmatprep.subr.bf16.mxu0 0
    %6397 = vmatpush1.bf16.msra.mxu0 0
    %6398 = vmatprep.subr.bf16.mxu0 0
    %6399 = vmatpush1.bf16.msra.mxu0 0
    %6400 = vmatprep.mubr.bf16.mxu0 0
    %6401 = vmatmul.mubr.bf16.gmra.mrb[0].mxu0 %v6131
    %v6402 = vpop.f32.mrb[0].mxu0
    %v6403 = vadd.f32 0.0, %v6402
    %v6404 = vpop.f32.mrb[0].mxu0
    %v6405 = vadd.f32 0.0, %v6404
    %v6406 = vpop.f32.mrb[0].mxu0
    %v6407 = vadd.f32 0.0, %v6406
    %v6408 = vpop.f32.mrb[0].mxu0
    %v6409 = vadd.f32 0.0, %v6408
    %6410 = vdwg.mxu0
    %v6411 = vxor.u32 %v6360, 2147483648
    %v6412 = vxor.u32 %v6362, 2147483648
    %v6413 = vxor.u32 %v6364, 2147483648
    %v6414 = vxor.u32 %v6366, 2147483648
    %v6415 = vmul.f32 %v6411, 1.442695
    %v6416 = vpow.pop %v6415
    %v6417 = vmul.f32 %v6412, 1.442695
    %v6418 = vpow.pop %v6417
    %v6419 = vmul.f32 %v6413, 1.442695
    %v6420 = vpow.pop %v6419
    %v6421 = vmul.f32 %v6414, 1.442695
    %v6422 = vpow.pop %v6421
    %v6423 = vadd.f32 %v6416, 1.0
    %v6424 = vadd.f32 %v6418, 1.0
    %v6425 = vadd.f32 %v6420, 1.0
    %v6426 = vadd.f32 %v6422, 1.0
    %v6427 = vrcp.pop %v6423
    %v6428 = vmul.f32 1.0, %v6427
    %v6429 = vrcp.pop %v6424
    %v6430 = vmul.f32 1.0, %v6429
    %v6431 = vrcp.pop %v6425
    %v6432 = vmul.f32 1.0, %v6431
    %v6433 = vrcp.pop %v6426
    %v6434 = vmul.f32 1.0, %v6433
    %v6435 = vmul.f32 %v6360, %v6428
    %v6436 = vmul.f32 %v6362, %v6430
    %v6437 = vmul.f32 %v6364, %v6432
    %v6438 = vmul.f32 %v6366, %v6434
    %v6439 = vmul.f32 %v6435, %v6403
    %v6440 = vmul.f32 %v6436, %v6405
    %v6441 = vmul.f32 %v6437, %v6407
    %v6442 = vmul.f32 %v6438, %v6409
    %v6443 = vpack.c.bf16 %v6441, %v6439
    %v6444 = vpack.c.bf16 %v6442, %v6440
    %s6445 = scalar_lea.vmem %s8, 128
    %v6446 = vld [vmem:[%s6445] sm:$0xf]
    %v6447 = vld [vmem:[%s6445 + $0x4] sm:$0xf]
    %v6448 = vld [vmem:[%s6445 + $0x8] sm:$0xf]
    %v6449 = vld [vmem:[%s6445 + $0xc] sm:$0xf]
    %v6450 = vld [vmem:[%s6445 + $0x10] sm:$0xf]
    %v6451 = vld [vmem:[%s6445 + $0x14] sm:$0xf]
    %v6452 = vld [vmem:[%s6445 + $0x18] sm:$0xf]
    %v6453 = vld [vmem:[%s6445 + $0x1c] sm:$0xf]
    %v6454 = vld [vmem:[%s6445 + $0x20] sm:$0xf]
    %v6455 = vld [vmem:[%s6445 + $0x24] sm:$0xf]
    %v6456 = vld [vmem:[%s6445 + $0x28] sm:$0xf]
    %v6457 = vld [vmem:[%s6445 + $0x2c] sm:$0xf]
    %v6458 = vld [vmem:[%s6445 + $0x30] sm:$0xf]
    %v6459 = vld [vmem:[%s6445 + $0x34] sm:$0xf]
    %v6460 = vld [vmem:[%s6445 + $0x38] sm:$0xf]
    %v6461 = vld [vmem:[%s6445 + $0x3c] sm:$0xf]
    %v6462 = vld [vmem:[%s6445 + $0x40] sm:$0xf]
    %v6463 = vld [vmem:[%s6445 + $0x44] sm:$0xf]
    %v6464 = vld [vmem:[%s6445 + $0x48] sm:$0xf]
    %v6465 = vld [vmem:[%s6445 + $0x4c] sm:$0xf]
    %v6466 = vld [vmem:[%s6445 + $0x50] sm:$0xf]
    %v6467 = vld [vmem:[%s6445 + $0x54] sm:$0xf]
    %v6468 = vld [vmem:[%s6445 + $0x58] sm:$0xf]
    %v6469 = vld [vmem:[%s6445 + $0x5c] sm:$0xf]
    %v6470 = vld [vmem:[%s6445 + $0x60] sm:$0xf]
    %v6471 = vld [vmem:[%s6445 + $0x64] sm:$0xf]
    %v6472 = vld [vmem:[%s6445 + $0x68] sm:$0xf]
    %v6473 = vld [vmem:[%s6445 + $0x6c] sm:$0xf]
    %v6474 = vld [vmem:[%s6445 + $0x70] sm:$0xf]
    %v6475 = vld [vmem:[%s6445 + $0x74] sm:$0xf]
    %v6476 = vld [vmem:[%s6445 + $0x78] sm:$0xf]
    %v6477 = vld [vmem:[%s6445 + $0x7c] sm:$0xf]
    %v6510 = vunpack.c.l.b16 %v6446
    %v6511 = vunpack.c.l.b16 %v6447
    %v6512 = vunpack.c.l.b16 %v6448
    %v6513 = vunpack.c.l.b16 %v6449
    %v6514 = vunpack.c.l.b16 %v6450
    %v6515 = vunpack.c.l.b16 %v6451
    %v6516 = vunpack.c.l.b16 %v6452
    %v6517 = vunpack.c.l.b16 %v6453
    %v6518 = vunpack.c.l.b16 %v6454
    %v6519 = vunpack.c.l.b16 %v6455
    %v6520 = vunpack.c.l.b16 %v6456
    %v6521 = vunpack.c.l.b16 %v6457
    %v6522 = vunpack.c.l.b16 %v6458
    %v6523 = vunpack.c.l.b16 %v6459
    %v6524 = vunpack.c.l.b16 %v6460
    %v6525 = vunpack.c.l.b16 %v6461
    %v6526 = vunpack.c.l.b16 %v6462
    %v6527 = vunpack.c.l.b16 %v6463
    %v6528 = vunpack.c.l.b16 %v6464
    %v6529 = vunpack.c.l.b16 %v6465
    %v6530 = vunpack.c.l.b16 %v6466
    %v6531 = vunpack.c.l.b16 %v6467
    %v6532 = vunpack.c.l.b16 %v6468
    %v6533 = vunpack.c.l.b16 %v6469
    %v6534 = vunpack.c.l.b16 %v6470
    %v6535 = vunpack.c.l.b16 %v6471
    %v6536 = vunpack.c.l.b16 %v6472
    %v6537 = vunpack.c.l.b16 %v6473
    %v6538 = vunpack.c.l.b16 %v6474
    %v6539 = vunpack.c.l.b16 %v6475
    %v6540 = vunpack.c.l.b16 %v6476
    %v6541 = vunpack.c.l.b16 %v6477
    %v6542 = vpack.c.b16 %v6511, %v6510
    %v6543 = vpack.c.b16 %v6513, %v6512
    %v6544 = vpack.c.b16 %v6515, %v6514
    %v6545 = vpack.c.b16 %v6517, %v6516
    %v6546 = vpack.c.b16 %v6519, %v6518
    %v6547 = vpack.c.b16 %v6521, %v6520
    %v6548 = vpack.c.b16 %v6523, %v6522
    %v6549 = vpack.c.b16 %v6525, %v6524
    %v6550 = vpack.c.b16 %v6527, %v6526
    %v6551 = vpack.c.b16 %v6529, %v6528
    %v6552 = vpack.c.b16 %v6531, %v6530
    %v6553 = vpack.c.b16 %v6533, %v6532
    %v6554 = vpack.c.b16 %v6535, %v6534
    %v6555 = vpack.c.b16 %v6537, %v6536
    %v6556 = vpack.c.b16 %v6539, %v6538
    %v6557 = vpack.c.b16 %v6541, %v6540
    %6574 = vmatprep.subr.bf16.mxu0 0
    %6575 = vmatpush1.bf16.msra.mxu0 %v6542
    %6576 = vmatprep.subr.bf16.mxu0 0
    %6577 = vmatpush1.bf16.msra.mxu0 %v6543
    %6578 = vmatprep.subr.bf16.mxu0 0
    %6579 = vmatpush1.bf16.msra.mxu0 %v6544
    %6580 = vmatprep.subr.bf16.mxu0 0
    %6581 = vmatpush1.bf16.msra.mxu0 %v6545
    %6582 = vmatprep.subr.bf16.mxu0 0
    %6583 = vmatpush1.bf16.msra.mxu0 %v6546
    %6584 = vmatprep.subr.bf16.mxu0 0
    %6585 = vmatpush1.bf16.msra.mxu0 %v6547
    %6586 = vmatprep.subr.bf16.mxu0 0
    %6587 = vmatpush1.bf16.msra.mxu0 %v6548
    %6588 = vmatprep.subr.bf16.mxu0 0
    %6589 = vmatpush1.bf16.msra.mxu0 %v6549
    %6590 = vmatprep.subr.bf16.mxu0 0
    %6591 = vmatpush1.bf16.msra.mxu0 %v6550
    %6592 = vmatprep.subr.bf16.mxu0 0
    %6593 = vmatpush1.bf16.msra.mxu0 %v6551
    %6594 = vmatprep.subr.bf16.mxu0 0
    %6595 = vmatpush1.bf16.msra.mxu0 %v6552
    %6596 = vmatprep.subr.bf16.mxu0 0
    %6597 = vmatpush1.bf16.msra.mxu0 %v6553
    %6598 = vmatprep.subr.bf16.mxu0 0
    %6599 = vmatpush1.bf16.msra.mxu0 %v6554
    %6600 = vmatprep.subr.bf16.mxu0 0
    %6601 = vmatpush1.bf16.msra.mxu0 %v6555
    %6602 = vmatprep.subr.bf16.mxu0 0
    %6603 = vmatpush1.bf16.msra.mxu0 %v6556
    %6604 = vmatprep.subr.bf16.mxu0 0
    %6605 = vmatpush1.bf16.msra.mxu0 %v6557
    %6606 = vmatprep.mubr.bf16.mxu0 %v6444
    %6607 = vmatmul.mubr.bf16.gmra.mrb[0].mxu0 %v6443
    %v6608 = vpop.f32.mrb[0].mxu0
    %v6609 = vadd.f32 0.0, %v6608
    %v6610 = vpop.f32.mrb[0].mxu0
    %v6611 = vpop.f32.mrb[0].mxu0
    %v6612 = vadd.f32 0.0, %v6611
    %v6613 = vpop.f32.mrb[0].mxu0
    %6614 = vdwg.mxu0
    %v6615 = vadd.f32 %v6115, %v6609
    %v6616 = vadd.f32 %v6116, %v6612
    %v6617 = vmul.f32 %v6615, %v6615
    %v6618 = vmul.f32 %v6616, %v6616
    %6619 = vadd.xlane.f32.xlu0 %v6617
    %v6620 = vpop.xlane.xlu0 %6619
    %6621 = vadd.xlane.f32.xlu0 %v6618
    %v6622 = vpop.xlane.xlu0 %6621
    %v6623 = vmul.f32 %v6620, %v309
    %v6624 = vmul.f32 %v6622, %v309
    %v6625 = vadd.f32 %v6623, 1e-05
    %v6626 = vadd.f32 %v6624, 1e-05
    %v6627 = vrsqrt.pop %v6625
    %v6628 = vrsqrt.pop %v6626
    %v6629 = vmul.f32 %v6615, %v6627
    %v6630 = vmul.f32 %v6616, %v6628
    %v6631 = vld [vmem:[%s4] sm:$0x3]
    %v6633 = vsel %vm1977, %v6631, 0
    %6635 = vmatprep.subr.mxu0 0.0
    %6636 = vmatpush1.msra.mxu0 %v6629
    %6637 = vmatprep.subr.mxu0 0.0
    %6638 = vmatpush1.msra.mxu0 %v6630
    %6639 = vmatprep.subr.mxu0 0.0
    %6640 = vmatpush1.msra.mxu0 0.0
    %6641 = vmatprep.subr.mxu0 0.0
    %6642 = vmatpush1.msra.mxu0 0.0
    %6643 = vmatprep.subr.mxu0 0.0
    %6644 = vmatpush1.msra.mxu0 0.0
    %6645 = vmatprep.subr.mxu0 0.0
    %6646 = vmatpush1.msra.mxu0 0.0
    %6647 = vmatprep.subr.mxu0 0.0
    %6648 = vmatpush1.msra.mxu0 0.0
    %6649 = vmatprep.subr.mxu0 0.0
    %6650 = vmatpush1.msra.mxu0 0.0
    %6651 = vmatprep.subr.mxu0 0.0
    %6652 = vmatpush1.msra.mxu0 0.0
    %6653 = vmatprep.subr.mxu0 0.0
    %6654 = vmatpush1.msra.mxu0 0.0
    %6655 = vmatprep.subr.mxu0 0.0
    %6656 = vmatpush1.msra.mxu0 0.0
    %6657 = vmatprep.subr.mxu0 0.0
    %6658 = vmatpush1.msra.mxu0 0.0
    %6659 = vmatprep.subr.mxu0 0.0
    %6660 = vmatpush1.msra.mxu0 0.0
    %6661 = vmatprep.subr.mxu0 0.0
    %6662 = vmatpush1.msra.mxu0 0.0
    %6663 = vmatprep.subr.mxu0 0.0
    %6664 = vmatpush1.msra.mxu0 0.0
    %6665 = vmatprep.subr.mxu0 0.0
    %6666 = vmatpush1.msra.mxu0 0.0
    %6667 = vmatprep.subr.mxu0 0.0
    %6668 = vmatpush1.msra.mxu0 0.0
    %6669 = vmatprep.subr.mxu0 0.0
    %6670 = vmatpush1.msra.mxu0 0.0
    %6671 = vmatprep.subr.mxu0 0.0
    %6672 = vmatpush1.msra.mxu0 0.0
    %6673 = vmatprep.subr.mxu0 0.0
    %6674 = vmatpush1.msra.mxu0 0.0
    %6675 = vmatprep.subr.mxu0 0.0
    %6676 = vmatpush1.msra.mxu0 0.0
    %6677 = vmatprep.subr.mxu0 0.0
    %6678 = vmatpush1.msra.mxu0 0.0
    %6679 = vmatprep.subr.mxu0 0.0
    %6680 = vmatpush1.msra.mxu0 0.0
    %6681 = vmatprep.subr.mxu0 0.0
    %6682 = vmatpush1.msra.mxu0 0.0
    %6683 = vmatprep.subr.mxu0 0.0
    %6684 = vmatpush1.msra.mxu0 0.0
    %6685 = vmatprep.subr.mxu0 0.0
    %6686 = vmatpush1.msra.mxu0 0.0
    %6687 = vmatprep.subr.mxu0 0.0
    %6688 = vmatpush1.msra.mxu0 0.0
    %6689 = vmatprep.subr.mxu0 0.0
    %6690 = vmatpush1.msra.mxu0 0.0
    %6691 = vmatprep.subr.mxu0 0.0
    %6692 = vmatpush1.msra.mxu0 0.0
    %6693 = vmatprep.subr.mxu0 0.0
    %6694 = vmatpush1.msra.mxu0 0.0
    %6695 = vmatprep.subr.mxu0 0.0
    %6696 = vmatpush1.msra.mxu0 0.0
    %6697 = vmatprep.subr.mxu0 0.0
    %6698 = vmatpush1.msra.mxu0 0.0
    %6699 = vmatprep.mubr.f32.mxu0 0.0
    %6700 = vmatmul.mubr.f32.gmra.mrb[0].mxu0 %v6633
    %v6701 = vpop.f32.mrb[0].mxu0
    %v6702 = vadd.f32 0.0, %v6701
    %v6703 = vpop.f32.mrb[0].mxu0
    %6704 = vdwg.mxu0
    %v6705 = vpack.c.bf16 %v6702, %v6702
    %v6706 = vld [vmem:[%s5] sm:$0xf]
    %v6707 = vld [vmem:[%s5 + $0x4] sm:$0xf]
    %v6708 = vld [vmem:[%s5 + $0x8] sm:$0xf]
    %v6709 = vld [vmem:[%s5 + $0xc] sm:$0xf]
    %v6710 = vld [vmem:[%s5 + $0x10] sm:$0xf]
    %v6711 = vld [vmem:[%s5 + $0x14] sm:$0xf]
    %v6712 = vld [vmem:[%s5 + $0x18] sm:$0xf]
    %v6713 = vld [vmem:[%s5 + $0x1c] sm:$0xf]
    %v6714 = vld [vmem:[%s5 + $0x20] sm:$0xf]
    %v6715 = vld [vmem:[%s5 + $0x24] sm:$0xf]
    %v6716 = vld [vmem:[%s5 + $0x28] sm:$0xf]
    %v6717 = vld [vmem:[%s5 + $0x2c] sm:$0xf]
    %v6718 = vld [vmem:[%s5 + $0x30] sm:$0xf]
    %v6719 = vld [vmem:[%s5 + $0x34] sm:$0xf]
    %v6720 = vld [vmem:[%s5 + $0x38] sm:$0xf]
    %v6721 = vld [vmem:[%s5 + $0x3c] sm:$0xf]
    %v6738 = vunpack.c.l.b16 %v6706
    %v6739 = vunpack.c.l.b16 %v6707
    %v6740 = vunpack.c.l.b16 %v6708
    %v6741 = vunpack.c.l.b16 %v6709
    %v6742 = vunpack.c.l.b16 %v6710
    %v6743 = vunpack.c.l.b16 %v6711
    %v6744 = vunpack.c.l.b16 %v6712
    %v6745 = vunpack.c.l.b16 %v6713
    %v6746 = vunpack.c.l.b16 %v6714
    %v6747 = vunpack.c.l.b16 %v6715
    %v6748 = vunpack.c.l.b16 %v6716
    %v6749 = vunpack.c.l.b16 %v6717
    %v6750 = vunpack.c.l.b16 %v6718
    %v6751 = vunpack.c.l.b16 %v6719
    %v6752 = vunpack.c.l.b16 %v6720
    %v6753 = vunpack.c.l.b16 %v6721
    %v6754 = vpack.c.b16 %v6739, %v6738
    %v6755 = vpack.c.b16 %v6741, %v6740
    %v6756 = vpack.c.b16 %v6743, %v6742
    %v6757 = vpack.c.b16 %v6745, %v6744
    %v6758 = vpack.c.b16 %v6747, %v6746
    %v6759 = vpack.c.b16 %v6749, %v6748
    %v6760 = vpack.c.b16 %v6751, %v6750
    %v6761 = vpack.c.b16 %v6753, %v6752
    %6770 = vmatprep.subr.bf16.mxu0 0
    %6771 = vmatpush1.bf16.msra.mxu0 %v6754
    %6772 = vmatprep.subr.bf16.mxu0 0
    %6773 = vmatpush1.bf16.msra.mxu0 %v6755
    %6774 = vmatprep.subr.bf16.mxu0 0
    %6775 = vmatpush1.bf16.msra.mxu0 %v6756
    %6776 = vmatprep.subr.bf16.mxu0 0
    %6777 = vmatpush1.bf16.msra.mxu0 %v6757
    %6778 = vmatprep.subr.bf16.mxu0 0
    %6779 = vmatpush1.bf16.msra.mxu0 %v6758
    %6780 = vmatprep.subr.bf16.mxu0 0
    %6781 = vmatpush1.bf16.msra.mxu0 %v6759
    %6782 = vmatprep.subr.bf16.mxu0 0
    %6783 = vmatpush1.bf16.msra.mxu0 %v6760
    %6784 = vmatprep.subr.bf16.mxu0 0
    %6785 = vmatpush1.bf16.msra.mxu0 %v6761
    %6786 = vmatprep.subr.bf16.mxu0 0
    %6787 = vmatpush1.bf16.msra.mxu0 0
    %6788 = vmatprep.subr.bf16.mxu0 0
    %6789 = vmatpush1.bf16.msra.mxu0 0
    %6790 = vmatprep.subr.bf16.mxu0 0
    %6791 = vmatpush1.bf16.msra.mxu0 0
    %6792 = vmatprep.subr.bf16.mxu0 0
    %6793 = vmatpush1.bf16.msra.mxu0 0
    %6794 = vmatprep.subr.bf16.mxu0 0
    %6795 = vmatpush1.bf16.msra.mxu0 0
    %6796 = vmatprep.subr.bf16.mxu0 0
    %6797 = vmatpush1.bf16.msra.mxu0 0
    %6798 = vmatprep.subr.bf16.mxu0 0
    %6799 = vmatpush1.bf16.msra.mxu0 0
    %6800 = vmatprep.subr.bf16.mxu0 0
    %6801 = vmatpush1.bf16.msra.mxu0 0
    %6802 = vmatprep.mubr.bf16.mxu0 0
    %6803 = vmatmul.mubr.bf16.gmra.mrb[0].mxu0 %v6705
    %v6804 = vpop.f32.mrb[0].mxu0
    %v6805 = vadd.f32 0.0, %v6804
    %v6806 = vpop.f32.mrb[0].mxu0
    %v6807 = vpop.f32.mrb[0].mxu0
    %v6808 = vpop.f32.mrb[0].mxu0
    %6809 = vdwg.mxu0
    %vm6810 = vcmask 123904
    %v6811 = vsel %vm6810, %v6805, -inf
    %6812 = vmax.xlane.f32.xlu0 %v6811
    %v6813 = vpop.xlane.xlu0 %6812
    %v6814 = vsub.f32 %v6805, %v6813
    %v6815 = vmul.f32 %v6814, 1.442695
    %v6816 = vpow.pop %v6815
    %v6817 = vsel %vm6810, %v6816, 0.0
    %6818 = vadd.xlane.f32.xlu0 %v6817
    %v6819 = vpop.xlane.xlu0 %6818
    %v6820 = vrcp.pop %v6819
    %v6821 = vmul.f32 %v6816, %v6820
    %6822 = vst.msk [vmem:[#allocation2] sm:$0x3] %vm6810, %v6821
    // Predicated region
    $region38: #{llama2_classifier_forward.1} parent=1 // pred_check
      _
    $region39: #{llama2_classifier_forward.1} parent=1 // pred_check_branch
      %6824 = sbr.rel (0) target = $region41
    $region40: #{llama2_classifier_forward.1} parent=1 // pred_region
      %s6826 = ssub.s32 32, 32
      %6827 = vsyncadd [#allocation3], %s6826
      %s6829 = sshll.u32 [#allocation2], 4
      %s6830 = int_to_ptr.vmem [resolvable:$true] %s6829
      %6832 = dma.vmem_to_hbm [thread:$0]  %s6830, 32, %s9, [#allocation3]
    $region41: #{llama2_classifier_forward.1} parent=1 // pred_fallthru
      _
    // Predicated region
    $region42: #{llama2_classifier_forward.1} parent=1 // pred_check
      _
    $region43: #{llama2_classifier_forward.1} parent=1 // pred_check_branch
      %6834 = sbr.rel (0) target = $region45
    $region44: #{llama2_classifier_forward.1} parent=1 // pred_region
      %6835 = dma.done [#allocation3], 32
    $region45: #{llama2_classifier_forward.1} parent=1 // pred_fallthru
      _
    %6836 = vsyncpa [#allocation3], 1

</llo_original>
